<compile_context>
chip_gen: v7x
topology: tpu7x:2x2x1
jax: 0.10.0
libtpu: 0.0.40
codegen_flags: <defaults>
</compile_context>

<pallas_src>
import jax
import jax.numpy as jnp
from jax.experimental import pallas as pl
from jax.experimental.pallas import tpu as pltpu

N = 16       # example batch size
BLOCK_B = 8  # images per grid step (2 grid steps for the example run)


def cnn_kernel(x_ref, a1_ref, b1_ref, a2_ref, b2_ref,
               wd1_ref, bd1_ref, sel_ref, wd2_ref, bd2_ref, out_ref):
    f32 = jnp.float32

    def roll_up(v, k):
        # rolled[r] = v[(r + k) % rows]  (jnp.roll with shift=-k, passed as a
        # non-negative amount). Replaces unaligned sublane slices; XLU slot.
        if k == 0:
            return v
        return pltpu.roll(v, (-k) % v.shape[0], axis=0)

    x = x_ref[...]                                          # (B*28, 28)

    # ---- conv1 (1->10, k5): 5 Toeplitz-over-W taps, roll-accumulated ----
    # valid output rows: b*28 + ho, ho in [0,24); lanes: parity(xo)*128 + q*10+c
    h1 = jnp.dot(x, a1_ref[0], preferred_element_type=f32)
    for ky in range(1, 5):
        tap = jnp.dot(x, a1_ref[ky], preferred_element_type=f32)
        h1 = h1 + roll_up(tap, ky)
    h1 = h1 + b1_ref[...]                                   # (B*28, 256)

    # ---- max_pool2d(2) + relu ----
    # W-pool: tile-aligned lane max of the two parity groups; H-pool: roll+max.
    h1w = jnp.maximum(h1[:, :128], h1[:, 128:])             # (B*28, 128)
    p1 = jnp.maximum(jnp.maximum(h1w, roll_up(h1w, 1)), 0.0)
    # valid rows: b*28 + 2p, p in [0,12); lanes [0,120) = q*10 + c

    # ---- conv2 (10->20, k5): 5 taps, roll-accumulated with stride-2 rows ----
    # TODO(synk): F.dropout2d / F.dropout are identities here (eval-mode
    # semantics); training-mode RNG masking is not implemented.
    h2 = jnp.dot(p1, a2_ref[0], preferred_element_type=f32)
    for ky in range(1, 5):
        tap = jnp.dot(p1, a2_ref[ky], preferred_element_type=f32)
        h2 = h2 + roll_up(tap, 2 * ky)
    h2 = h2 + b2_ref[...]                                   # (B*28, 256)
    # valid rows: b*28 + 2*ho2, ho2 in [0,8); lanes parity(xo2)*128 + r*20+o

    # ---- max_pool2d(2) + relu ----
    h2w = jnp.maximum(h2[:, :128], h2[:, 128:])             # (B*28, 128)
    p2 = jnp.maximum(jnp.maximum(h2w, roll_up(h2w, 2)), 0.0)
    # valid rows: b*28 + 4u, u in [0,4); lanes [0,80) = v*20 + o

    # ---- dense1 (320 -> 50): 4 taps over pool2 H positions (stride-4 rows) ----
    z = jnp.dot(p2, wd1_ref[0], preferred_element_type=f32)
    for u in range(1, 4):
        tap = jnp.dot(p2, wd1_ref[u], preferred_element_type=f32)
        z = z + roll_up(tap, 4 * u)
    # valid rows: b*28 (one per image), 50 lanes

    # ---- compact to one row per image, dense1 bias/relu, dense2, softmax ----
    z1 = jnp.dot(sel_ref[...], z, preferred_element_type=f32)      # (B, 50)
    z1 = jnp.maximum(z1 + bd1_ref[...], 0.0)
    z2 = jnp.dot(z1, wd2_ref[...], preferred_element_type=f32) + bd2_ref[...]
    z2 = z2 - jnp.max(z2, axis=-1, keepdims=True)
    e = jnp.exp(z2)
    inv = pl.reciprocal(jnp.sum(e, axis=-1, keepdims=True), approx=True)
    out_ref[...] = e * inv                                   # (B, 10)


def _conv1_toeplitz(w1):
    """w1: (10,1,5,5) OIHW -> A1 (5, 28, 256) Toeplitz-over-W tap matrices.

    Column layout: parity(xo)*128 + (xo//2)*10 + c (each 120-wide parity group
    zero-padded to a full 128-lane tile so the W-pool slices are tile-aligned).
    """
    w1_t = jnp.transpose(w1[:, 0], (1, 2, 0))               # (ky, kx, c)
    xo = jnp.arange(24)
    w = jnp.arange(28)
    kx = w[:, None] - xo[None, :]                            # (28, 24)
    valid = (kx >= 0) & (kx <= 4)
    kxc = jnp.clip(kx, 0, 4)
    a = w1_t[:, kxc, :]                                      # (5, 28, 24, 10)
    a = jnp.where(valid[None, :, :, None], a, 0.0)
    xo_order = jnp.concatenate([jnp.arange(0, 24, 2), jnp.arange(1, 24, 2)])
    a = a[:, :, xo_order, :]                                 # parity-major xo
    a = a.reshape(5, 28, 2, 120)                             # (ky, w, par, q*10+c)
    a = jnp.pad(a, ((0, 0), (0, 0), (0, 0), (0, 8)))         # pad group -> 128
    return a.reshape(5, 28, 256)


def _conv2_toeplitz(w2):
    """w2: (20,10,5,5) OIHW -> A2 (5, 128, 256) Toeplitz-over-W tap matrices.

    Rows: q*10 + c (pool1 lane order), zero-padded 120 -> 128.
    Columns: parity(xo2)*128 + (xo2//2)*20 + o (80-wide groups padded to 128).
    """
    w2_t = jnp.transpose(w2, (2, 3, 1, 0))                   # (ky, kx, c, o)
    q = jnp.arange(12)
    xo = jnp.arange(8)
    kx = q[:, None] - xo[None, :]                             # (12, 8)
    valid = (kx >= 0) & (kx <= 4)
    kxc = jnp.clip(kx, 0, 4)
    a = w2_t[:, kxc, :, :]                                    # (5, 12, 8, 10, 20)
    a = jnp.where(valid[None, :, :, None, None], a, 0.0)
    xo_order = jnp.concatenate([jnp.arange(0, 8, 2), jnp.arange(1, 8, 2)])
    a = a[:, :, xo_order, :, :]                               # parity-major xo2
    a = jnp.transpose(a, (0, 1, 3, 2, 4))                     # (ky, q, c, xo, o)
    a = a.reshape(5, 120, 2, 80)                              # (ky, q*10+c, par, r*20+o)
    a = jnp.pad(a, ((0, 0), (0, 0), (0, 0), (0, 48)))         # pad col group -> 128
    a = a.reshape(5, 120, 256)
    return jnp.pad(a, ((0, 0), (0, 8), (0, 0)))               # pad rows -> 128


def cnn_forward(x_nchw, params, *, block_b=BLOCK_B):
    """x_nchw: (n, 1, 28, 28) f32 (PyTorch layout). Returns (n, 10) softmax."""
    (w1, b1, w2, b2, wd1, bd1, wd2, bd2) = params
    n = x_nchw.shape[0]
    n_steps = -(-n // block_b)
    n_pad = n_steps * block_b
    rows = block_b * 28

    # --- wrapper-side layout plumbing (PyTorch layouts -> kernel layouts) ---
    x_k = x_nchw[:, 0, :, :].astype(jnp.float32)             # (n, 28, 28)
    if n_pad != n:
        x_k = jnp.pad(x_k, ((0, n_pad - n), (0, 0), (0, 0)))
    x_slab = x_k.reshape(n_pad * 28, 28)                      # image b = rows [28b, 28b+28)

    a1 = _conv1_toeplitz(w1.astype(jnp.float32))              # (5, 28, 256)
    a2 = _conv2_toeplitz(w2.astype(jnp.float32))              # (5, 128, 256)
    b1g = jnp.pad(jnp.tile(b1.astype(jnp.float32), 12), (0, 8))
    b1r = jnp.concatenate([b1g, b1g])[None, :]                # (1, 256)
    b2g = jnp.pad(jnp.tile(b2.astype(jnp.float32), 4), (0, 48))
    b2r = jnp.concatenate([b2g, b2g])[None, :]                # (1, 256)
    # dense1: PyTorch (50, 320) with flat index o*16 + u*4 + v  ->  per-u
    # (lane v*20 + o, out) blocks, rows padded 80 -> 128.
    wd1k = jnp.transpose(wd1.astype(jnp.float32).reshape(50, 20, 4, 4),
                         (2, 3, 1, 0)).reshape(4, 80, 50)
    wd1k = jnp.pad(wd1k, ((0, 0), (0, 48), (0, 0)))           # (4, 128, 50)
    bd1r = bd1.astype(jnp.float32)[None, :]                   # (1, 50)
    wd2k = jnp.transpose(wd2.astype(jnp.float32), (1, 0))     # (50, 10)
    bd2r = bd2.astype(jnp.float32)[None, :]                   # (1, 10)
    # selection matrix picking row b*28 (the per-image dense1 result row)
    sel = (jnp.arange(rows)[None, :] ==
           (jnp.arange(block_b) * 28)[:, None]).astype(jnp.float32)  # (B, B*28)

    out = pl.pallas_call(
        cnn_kernel,
        out_shape=jax.ShapeDtypeStruct((n_pad, 10), jnp.float32),
        grid=(n_steps,),
        in_specs=[
            pl.BlockSpec((rows, 28), lambda g: (g, 0)),             # x slab (B images/step)
            pl.BlockSpec((5, 28, 256), lambda g: (0, 0, 0)),        # A1
            pl.BlockSpec((1, 256), lambda g: (0, 0)),               # conv1 bias row
            pl.BlockSpec((5, 128, 256), lambda g: (0, 0, 0)),       # A2
            pl.BlockSpec((1, 256), lambda g: (0, 0)),               # conv2 bias row
            pl.BlockSpec((4, 128, 50), lambda g: (0, 0, 0)),        # dense1 weight taps
            pl.BlockSpec((1, 50), lambda g: (0, 0)),                # dense1 bias
            pl.BlockSpec((block_b, rows), lambda g: (0, 0)),        # selection matrix
            pl.BlockSpec((50, 10), lambda g: (0, 0)),               # dense2 weight
            pl.BlockSpec((1, 10), lambda g: (0, 0)),                # dense2 bias
        ],
        out_specs=pl.BlockSpec((block_b, 10), lambda g: (g, 0)),
        compiler_params=pltpu.CompilerParams(
            dimension_semantics=("parallel",)),
    )(x_slab, a1, b1r, a2, b2r, wd1k, bd1r, sel, wd2k, bd2r)
    return out[:n]


if __name__ == "__main__":
    key = jax.random.PRNGKey(0)
    ks = jax.random.split(key, 9)
    # Input + deterministic synthetic parameters (shapes from CNN.__init__)
    x = jax.random.normal(ks[0], (N, 1, 28, 28), jnp.float32)          # NCHW
    w1 = jax.random.normal(ks[1], (10, 1, 5, 5), jnp.float32) * 0.2    # conv1.weight
    b1 = jax.random.normal(ks[2], (10,), jnp.float32) * 0.1            # conv1.bias
    w2 = jax.random.normal(ks[3], (20, 10, 5, 5), jnp.float32) * 0.1   # conv2.weight
    b2 = jax.random.normal(ks[4], (20,), jnp.float32) * 0.1            # conv2.bias
    wd1 = jax.random.normal(ks[5], (50, 320), jnp.float32) * 0.05      # dense1.weight
    bd1 = jax.random.normal(ks[6], (50,), jnp.float32) * 0.1           # dense1.bias
    wd2 = jax.random.normal(ks[7], (10, 50), jnp.float32) * 0.1        # dense2.weight
    bd2 = jax.random.normal(ks[8], (10,), jnp.float32) * 0.1           # dense2.bias

    out = cnn_forward(x, (w1, b1, w2, b2, wd1, bd1, wd2, bd2), block_b=BLOCK_B)
    out = jax.block_until_ready(out)
    assert out.shape == (N, 10)
    assert bool(jnp.all(jnp.isfinite(out)))
    # softmax rows should sum to ~1 (approx-reciprocal tolerance)
    assert bool(jnp.allclose(jnp.sum(out, axis=-1), 1.0, atol=2e-2))
    print("KERNEL_OK")
</pallas_src>

<mosaic_0001>
module attributes {stable_mosaic.version = 11 : i64} {
  func.func @cnn_kernel(%arg0: i32, %arg1: memref<224x28xf32, #tpu.memory_space<vmem>>, %arg2: memref<5x28x256xf32, #tpu.memory_space<vmem>>, %arg3: memref<1x256xf32, #tpu.memory_space<vmem>>, %arg4: memref<5x128x256xf32, #tpu.memory_space<vmem>>, %arg5: memref<1x256xf32, #tpu.memory_space<vmem>>, %arg6: memref<4x128x50xf32, #tpu.memory_space<vmem>>, %arg7: memref<1x50xf32, #tpu.memory_space<vmem>>, %arg8: memref<8x224xf32, #tpu.memory_space<vmem>>, %arg9: memref<50x10xf32, #tpu.memory_space<vmem>>, %arg10: memref<1x10xf32, #tpu.memory_space<vmem>>, %arg11: memref<8x10xf32, #tpu.memory_space<vmem>>) attributes {dimension_semantics = [#tpu.dimension_semantics<parallel>], iteration_bounds = array<i64: 2>, scalar_prefetch = 0 : i64, scratch_operands = 0 : i64, tpu.core_type = #tpu.core_type<tc>, window_params = [{transform_indices = @transform_0, window_bounds = array<i64: 224, 28>}, {pipeline_mode = #tpu.pipeline_mode<synchronous>, transform_indices = @transform_1, window_bounds = array<i64: 5, 28, 256>}, {pipeline_mode = #tpu.pipeline_mode<synchronous>, transform_indices = @transform_2, window_bounds = array<i64: 1, 256>}, {pipeline_mode = #tpu.pipeline_mode<synchronous>, transform_indices = @transform_3, window_bounds = array<i64: 5, 128, 256>}, {pipeline_mode = #tpu.pipeline_mode<synchronous>, transform_indices = @transform_4, window_bounds = array<i64: 1, 256>}, {pipeline_mode = #tpu.pipeline_mode<synchronous>, transform_indices = @transform_5, window_bounds = array<i64: 4, 128, 50>}, {pipeline_mode = #tpu.pipeline_mode<synchronous>, transform_indices = @transform_6, window_bounds = array<i64: 1, 50>}, {pipeline_mode = #tpu.pipeline_mode<synchronous>, transform_indices = @transform_7, window_bounds = array<i64: 8, 224>}, {pipeline_mode = #tpu.pipeline_mode<synchronous>, transform_indices = @transform_8, window_bounds = array<i64: 50, 10>}, {pipeline_mode = #tpu.pipeline_mode<synchronous>, transform_indices = @transform_9, window_bounds = array<i64: 1, 10>}, {transform_indices = @transform_10, window_bounds = array<i64: 8, 10>}]} {
    %c0 = arith.constant 0 : index
    %c0_0 = arith.constant 0 : index
    %0 = vector.load %arg1[%c0, %c0_0] : memref<224x28xf32, #tpu.memory_space<vmem>>, vector<224x28xf32>
    %c0_1 = arith.constant 0 : index
    %c0_2 = arith.constant 0 : index
    %c0_3 = arith.constant 0 : index
    %1 = vector.load %arg2[%c0_1, %c0_2, %c0_3] : memref<5x28x256xf32, #tpu.memory_space<vmem>>, vector<1x28x256xf32>
    %2 = vector.shape_cast %1 : vector<1x28x256xf32> to vector<28x256xf32>
    %cst = arith.constant dense<0.000000e+00> : vector<224x256xf32>
    %3 = tpu.matmul %0, %2, %cst {dimension_numbers = #tpu.dot_dimension_numbers<[1], [0], [0], [1], [0, 0, 1, 1], [], []>} : vector<224x28xf32>, vector<28x256xf32>, vector<224x256xf32> -> vector<224x256xf32>
    %c1 = arith.constant 1 : index
    %c0_4 = arith.constant 0 : index
    %c0_5 = arith.constant 0 : index
    %4 = vector.load %arg2[%c1, %c0_4, %c0_5] : memref<5x28x256xf32, #tpu.memory_space<vmem>>, vector<1x28x256xf32>
    %5 = vector.shape_cast %4 : vector<1x28x256xf32> to vector<28x256xf32>
    %cst_6 = arith.constant dense<0.000000e+00> : vector<224x256xf32>
    %6 = tpu.matmul %0, %5, %cst_6 {dimension_numbers = #tpu.dot_dimension_numbers<[1], [0], [0], [1], [0, 0, 1, 1], [], []>} : vector<224x28xf32>, vector<28x256xf32>, vector<224x256xf32> -> vector<224x256xf32>
    %c223_i32 = arith.constant 223 : i32
    %7 = tpu.dynamic_rotate %6 by %c223_i32 dim 0 : vector<224x256xf32>, i32 -> vector<224x256xf32>
    %8 = arith.addf %3, %7 : vector<224x256xf32>
    %c2 = arith.constant 2 : index
    %c0_7 = arith.constant 0 : index
    %c0_8 = arith.constant 0 : index
    %9 = vector.load %arg2[%c2, %c0_7, %c0_8] : memref<5x28x256xf32, #tpu.memory_space<vmem>>, vector<1x28x256xf32>
    %10 = vector.shape_cast %9 : vector<1x28x256xf32> to vector<28x256xf32>
    %cst_9 = arith.constant dense<0.000000e+00> : vector<224x256xf32>
    %11 = tpu.matmul %0, %10, %cst_9 {dimension_numbers = #tpu.dot_dimension_numbers<[1], [0], [0], [1], [0, 0, 1, 1], [], []>} : vector<224x28xf32>, vector<28x256xf32>, vector<224x256xf32> -> vector<224x256xf32>
    %c222_i32 = arith.constant 222 : i32
    %12 = tpu.dynamic_rotate %11 by %c222_i32 dim 0 : vector<224x256xf32>, i32 -> vector<224x256xf32>
    %13 = arith.addf %8, %12 : vector<224x256xf32>
    %c3 = arith.constant 3 : index
    %c0_10 = arith.constant 0 : index
    %c0_11 = arith.constant 0 : index
    %14 = vector.load %arg2[%c3, %c0_10, %c0_11] : memref<5x28x256xf32, #tpu.memory_space<vmem>>, vector<1x28x256xf32>
    %15 = vector.shape_cast %14 : vector<1x28x256xf32> to vector<28x256xf32>
    %cst_12 = arith.constant dense<0.000000e+00> : vector<224x256xf32>
    %16 = tpu.matmul %0, %15, %cst_12 {dimension_numbers = #tpu.dot_dimension_numbers<[1], [0], [0], [1], [0, 0, 1, 1], [], []>} : vector<224x28xf32>, vector<28x256xf32>, vector<224x256xf32> -> vector<224x256xf32>
    %c221_i32 = arith.constant 221 : i32
    %17 = tpu.dynamic_rotate %16 by %c221_i32 dim 0 : vector<224x256xf32>, i32 -> vector<224x256xf32>
    %18 = arith.addf %13, %17 : vector<224x256xf32>
    %c4 = arith.constant 4 : index
    %c0_13 = arith.constant 0 : index
    %c0_14 = arith.constant 0 : index
    %19 = vector.load %arg2[%c4, %c0_13, %c0_14] : memref<5x28x256xf32, #tpu.memory_space<vmem>>, vector<1x28x256xf32>
    %20 = vector.shape_cast %19 : vector<1x28x256xf32> to vector<28x256xf32>
    %cst_15 = arith.constant dense<0.000000e+00> : vector<224x256xf32>
    %21 = tpu.matmul %0, %20, %cst_15 {dimension_numbers = #tpu.dot_dimension_numbers<[1], [0], [0], [1], [0, 0, 1, 1], [], []>} : vector<224x28xf32>, vector<28x256xf32>, vector<224x256xf32> -> vector<224x256xf32>
    %c220_i32 = arith.constant 220 : i32
    %22 = tpu.dynamic_rotate %21 by %c220_i32 dim 0 : vector<224x256xf32>, i32 -> vector<224x256xf32>
    %23 = arith.addf %18, %22 : vector<224x256xf32>
    %c0_16 = arith.constant 0 : index
    %c0_17 = arith.constant 0 : index
    %24 = vector.load %arg3[%c0_16, %c0_17] : memref<1x256xf32, #tpu.memory_space<vmem>>, vector<1x256xf32>
    %25 = vector.broadcast %24 : vector<1x256xf32> to vector<224x256xf32>
    %26 = arith.addf %23, %25 : vector<224x256xf32>
    %27 = vector.extract_strided_slice %26 {offsets = [0, 0], sizes = [224, 128], strides = [1, 1]} : vector<224x256xf32> to vector<224x128xf32>
    %28 = vector.extract_strided_slice %26 {offsets = [0, 128], sizes = [224, 128], strides = [1, 1]} : vector<224x256xf32> to vector<224x128xf32>
    %29 = arith.maximumf %27, %28 : vector<224x128xf32>
    %c223_i32_18 = arith.constant 223 : i32
    %30 = tpu.dynamic_rotate %29 by %c223_i32_18 dim 0 : vector<224x128xf32>, i32 -> vector<224x128xf32>
    %31 = arith.maximumf %29, %30 : vector<224x128xf32>
    %cst_19 = arith.constant 0.000000e+00 : f32
    %32 = vector.broadcast %cst_19 : f32 to vector<224x128xf32>
    %33 = arith.maximumf %31, %32 : vector<224x128xf32>
    %c0_20 = arith.constant 0 : index
    %c0_21 = arith.constant 0 : index
    %c0_22 = arith.constant 0 : index
    %34 = vector.load %arg4[%c0_20, %c0_21, %c0_22] : memref<5x128x256xf32, #tpu.memory_space<vmem>>, vector<1x128x256xf32>
    %35 = vector.shape_cast %34 : vector<1x128x256xf32> to vector<128x256xf32>
    %cst_23 = arith.constant dense<0.000000e+00> : vector<224x256xf32>
    %36 = tpu.matmul %33, %35, %cst_23 {dimension_numbers = #tpu.dot_dimension_numbers<[1], [0], [0], [1], [0, 0, 1, 1], [], []>} : vector<224x128xf32>, vector<128x256xf32>, vector<224x256xf32> -> vector<224x256xf32>
    %c1_24 = arith.constant 1 : index
    %c0_25 = arith.constant 0 : index
    %c0_26 = arith.constant 0 : index
    %37 = vector.load %arg4[%c1_24, %c0_25, %c0_26] : memref<5x128x256xf32, #tpu.memory_space<vmem>>, vector<1x128x256xf32>
    %38 = vector.shape_cast %37 : vector<1x128x256xf32> to vector<128x256xf32>
    %cst_27 = arith.constant dense<0.000000e+00> : vector<224x256xf32>
    %39 = tpu.matmul %33, %38, %cst_27 {dimension_numbers = #tpu.dot_dimension_numbers<[1], [0], [0], [1], [0, 0, 1, 1], [], []>} : vector<224x128xf32>, vector<128x256xf32>, vector<224x256xf32> -> vector<224x256xf32>
    %c222_i32_28 = arith.constant 222 : i32
    %40 = tpu.dynamic_rotate %39 by %c222_i32_28 dim 0 : vector<224x256xf32>, i32 -> vector<224x256xf32>
    %41 = arith.addf %36, %40 : vector<224x256xf32>
    %c2_29 = arith.constant 2 : index
    %c0_30 = arith.constant 0 : index
    %c0_31 = arith.constant 0 : index
    %42 = vector.load %arg4[%c2_29, %c0_30, %c0_31] : memref<5x128x256xf32, #tpu.memory_space<vmem>>, vector<1x128x256xf32>
    %43 = vector.shape_cast %42 : vector<1x128x256xf32> to vector<128x256xf32>
    %cst_32 = arith.constant dense<0.000000e+00> : vector<224x256xf32>
    %44 = tpu.matmul %33, %43, %cst_32 {dimension_numbers = #tpu.dot_dimension_numbers<[1], [0], [0], [1], [0, 0, 1, 1], [], []>} : vector<224x128xf32>, vector<128x256xf32>, vector<224x256xf32> -> vector<224x256xf32>
    %c220_i32_33 = arith.constant 220 : i32
    %45 = tpu.dynamic_rotate %44 by %c220_i32_33 dim 0 : vector<224x256xf32>, i32 -> vector<224x256xf32>
    %46 = arith.addf %41, %45 : vector<224x256xf32>
    %c3_34 = arith.constant 3 : index
    %c0_35 = arith.constant 0 : index
    %c0_36 = arith.constant 0 : index
    %47 = vector.load %arg4[%c3_34, %c0_35, %c0_36] : memref<5x128x256xf32, #tpu.memory_space<vmem>>, vector<1x128x256xf32>
    %48 = vector.shape_cast %47 : vector<1x128x256xf32> to vector<128x256xf32>
    %cst_37 = arith.constant dense<0.000000e+00> : vector<224x256xf32>
    %49 = tpu.matmul %33, %48, %cst_37 {dimension_numbers = #tpu.dot_dimension_numbers<[1], [0], [0], [1], [0, 0, 1, 1], [], []>} : vector<224x128xf32>, vector<128x256xf32>, vector<224x256xf32> -> vector<224x256xf32>
    %c218_i32 = arith.constant 218 : i32
    %50 = tpu.dynamic_rotate %49 by %c218_i32 dim 0 : vector<224x256xf32>, i32 -> vector<224x256xf32>
    %51 = arith.addf %46, %50 : vector<224x256xf32>
    %c4_38 = arith.constant 4 : index
    %c0_39 = arith.constant 0 : index
    %c0_40 = arith.constant 0 : index
    %52 = vector.load %arg4[%c4_38, %c0_39, %c0_40] : memref<5x128x256xf32, #tpu.memory_space<vmem>>, vector<1x128x256xf32>
    %53 = vector.shape_cast %52 : vector<1x128x256xf32> to vector<128x256xf32>
    %cst_41 = arith.constant dense<0.000000e+00> : vector<224x256xf32>
    %54 = tpu.matmul %33, %53, %cst_41 {dimension_numbers = #tpu.dot_dimension_numbers<[1], [0], [0], [1], [0, 0, 1, 1], [], []>} : vector<224x128xf32>, vector<128x256xf32>, vector<224x256xf32> -> vector<224x256xf32>
    %c216_i32 = arith.constant 216 : i32
    %55 = tpu.dynamic_rotate %54 by %c216_i32 dim 0 : vector<224x256xf32>, i32 -> vector<224x256xf32>
    %56 = arith.addf %51, %55 : vector<224x256xf32>
    %c0_42 = arith.constant 0 : index
    %c0_43 = arith.constant 0 : index
    %57 = vector.load %arg5[%c0_42, %c0_43] : memref<1x256xf32, #tpu.memory_space<vmem>>, vector<1x256xf32>
    %58 = vector.broadcast %57 : vector<1x256xf32> to vector<224x256xf32>
    %59 = arith.addf %56, %58 : vector<224x256xf32>
    %60 = vector.extract_strided_slice %59 {offsets = [0, 0], sizes = [224, 128], strides = [1, 1]} : vector<224x256xf32> to vector<224x128xf32>
    %61 = vector.extract_strided_slice %59 {offsets = [0, 128], sizes = [224, 128], strides = [1, 1]} : vector<224x256xf32> to vector<224x128xf32>
    %62 = arith.maximumf %60, %61 : vector<224x128xf32>
    %c222_i32_44 = arith.constant 222 : i32
    %63 = tpu.dynamic_rotate %62 by %c222_i32_44 dim 0 : vector<224x128xf32>, i32 -> vector<224x128xf32>
    %64 = arith.maximumf %62, %63 : vector<224x128xf32>
    %cst_45 = arith.constant 0.000000e+00 : f32
    %65 = vector.broadcast %cst_45 : f32 to vector<224x128xf32>
    %66 = arith.maximumf %64, %65 : vector<224x128xf32>
    %c0_46 = arith.constant 0 : index
    %c0_47 = arith.constant 0 : index
    %c0_48 = arith.constant 0 : index
    %67 = vector.load %arg6[%c0_46, %c0_47, %c0_48] : memref<4x128x50xf32, #tpu.memory_space<vmem>>, vector<1x128x50xf32>
    %68 = vector.shape_cast %67 : vector<1x128x50xf32> to vector<128x50xf32>
    %cst_49 = arith.constant dense<0.000000e+00> : vector<224x50xf32>
    %69 = tpu.matmul %66, %68, %cst_49 {dimension_numbers = #tpu.dot_dimension_numbers<[1], [0], [0], [1], [0, 0, 1, 1], [], []>} : vector<224x128xf32>, vector<128x50xf32>, vector<224x50xf32> -> vector<224x50xf32>
    %c1_50 = arith.constant 1 : index
    %c0_51 = arith.constant 0 : index
    %c0_52 = arith.constant 0 : index
    %70 = vector.load %arg6[%c1_50, %c0_51, %c0_52] : memref<4x128x50xf32, #tpu.memory_space<vmem>>, vector<1x128x50xf32>
    %71 = vector.shape_cast %70 : vector<1x128x50xf32> to vector<128x50xf32>
    %cst_53 = arith.constant dense<0.000000e+00> : vector<224x50xf32>
    %72 = tpu.matmul %66, %71, %cst_53 {dimension_numbers = #tpu.dot_dimension_numbers<[1], [0], [0], [1], [0, 0, 1, 1], [], []>} : vector<224x128xf32>, vector<128x50xf32>, vector<224x50xf32> -> vector<224x50xf32>
    %c220_i32_54 = arith.constant 220 : i32
    %73 = tpu.dynamic_rotate %72 by %c220_i32_54 dim 0 : vector<224x50xf32>, i32 -> vector<224x50xf32>
    %74 = arith.addf %69, %73 : vector<224x50xf32>
    %c2_55 = arith.constant 2 : index
    %c0_56 = arith.constant 0 : index
    %c0_57 = arith.constant 0 : index
    %75 = vector.load %arg6[%c2_55, %c0_56, %c0_57] : memref<4x128x50xf32, #tpu.memory_space<vmem>>, vector<1x128x50xf32>
    %76 = vector.shape_cast %75 : vector<1x128x50xf32> to vector<128x50xf32>
    %cst_58 = arith.constant dense<0.000000e+00> : vector<224x50xf32>
    %77 = tpu.matmul %66, %76, %cst_58 {dimension_numbers = #tpu.dot_dimension_numbers<[1], [0], [0], [1], [0, 0, 1, 1], [], []>} : vector<224x128xf32>, vector<128x50xf32>, vector<224x50xf32> -> vector<224x50xf32>
    %c216_i32_59 = arith.constant 216 : i32
    %78 = tpu.dynamic_rotate %77 by %c216_i32_59 dim 0 : vector<224x50xf32>, i32 -> vector<224x50xf32>
    %79 = arith.addf %74, %78 : vector<224x50xf32>
    %c3_60 = arith.constant 3 : index
    %c0_61 = arith.constant 0 : index
    %c0_62 = arith.constant 0 : index
    %80 = vector.load %arg6[%c3_60, %c0_61, %c0_62] : memref<4x128x50xf32, #tpu.memory_space<vmem>>, vector<1x128x50xf32>
    %81 = vector.shape_cast %80 : vector<1x128x50xf32> to vector<128x50xf32>
    %cst_63 = arith.constant dense<0.000000e+00> : vector<224x50xf32>
    %82 = tpu.matmul %66, %81, %cst_63 {dimension_numbers = #tpu.dot_dimension_numbers<[1], [0], [0], [1], [0, 0, 1, 1], [], []>} : vector<224x128xf32>, vector<128x50xf32>, vector<224x50xf32> -> vector<224x50xf32>
    %c212_i32 = arith.constant 212 : i32
    %83 = tpu.dynamic_rotate %82 by %c212_i32 dim 0 : vector<224x50xf32>, i32 -> vector<224x50xf32>
    %84 = arith.addf %79, %83 : vector<224x50xf32>
    %c0_64 = arith.constant 0 : index
    %c0_65 = arith.constant 0 : index
    %85 = vector.load %arg8[%c0_64, %c0_65] : memref<8x224xf32, #tpu.memory_space<vmem>>, vector<8x224xf32>
    %cst_66 = arith.constant dense<0.000000e+00> : vector<8x50xf32>
    %86 = tpu.matmul %85, %84, %cst_66 {dimension_numbers = #tpu.dot_dimension_numbers<[1], [0], [0], [1], [0, 0, 1, 1], [], []>} : vector<8x224xf32>, vector<224x50xf32>, vector<8x50xf32> -> vector<8x50xf32>
    %c0_67 = arith.constant 0 : index
    %c0_68 = arith.constant 0 : index
    %87 = vector.load %arg7[%c0_67, %c0_68] : memref<1x50xf32, #tpu.memory_space<vmem>>, vector<1x50xf32>
    %88 = vector.broadcast %87 : vector<1x50xf32> to vector<8x50xf32>
    %89 = arith.addf %86, %88 : vector<8x50xf32>
    %cst_69 = arith.constant 0.000000e+00 : f32
    %90 = vector.broadcast %cst_69 : f32 to vector<8x50xf32>
    %91 = arith.maximumf %89, %90 : vector<8x50xf32>
    %c0_70 = arith.constant 0 : index
    %c0_71 = arith.constant 0 : index
    %92 = vector.load %arg9[%c0_70, %c0_71] : memref<50x10xf32, #tpu.memory_space<vmem>>, vector<50x10xf32>
    %cst_72 = arith.constant dense<0.000000e+00> : vector<8x10xf32>
    %93 = tpu.matmul %91, %92, %cst_72 {dimension_numbers = #tpu.dot_dimension_numbers<[1], [0], [0], [1], [0, 0, 1, 1], [], []>} : vector<8x50xf32>, vector<50x10xf32>, vector<8x10xf32> -> vector<8x10xf32>
    %c0_73 = arith.constant 0 : index
    %c0_74 = arith.constant 0 : index
    %94 = vector.load %arg10[%c0_73, %c0_74] : memref<1x10xf32, #tpu.memory_space<vmem>>, vector<1x10xf32>
    %95 = vector.broadcast %94 : vector<1x10xf32> to vector<8x10xf32>
    %96 = arith.addf %93, %95 : vector<8x10xf32>
    %cst_75 = arith.constant dense<0xFF800000> : vector<8xf32>
    %97 = vector.multi_reduction <maximumf>, %96, %cst_75 [1] : vector<8x10xf32> to vector<8xf32>
    %98 = vector.shape_cast %97 : vector<8xf32> to vector<8x1xf32>
    %99 = vector.broadcast %98 : vector<8x1xf32> to vector<8x10xf32>
    %100 = arith.subf %96, %99 : vector<8x10xf32>
    %101 = math.exp %100 : vector<8x10xf32>
    %cst_76 = arith.constant dense<0.000000e+00> : vector<8xf32>
    %102 = vector.multi_reduction <add>, %101, %cst_76 [1] : vector<8x10xf32> to vector<8xf32>
    %103 = vector.shape_cast %102 : vector<8xf32> to vector<8x1xf32>
    %104 = tpu.reciprocal %103 {approx = true} : vector<8x1xf32> -> vector<8x1xf32>
    %105 = vector.broadcast %104 : vector<8x1xf32> to vector<8x10xf32>
    %106 = arith.mulf %101, %105 : vector<8x10xf32>
    %c0_77 = arith.constant 0 : index
    %c0_78 = arith.constant 0 : index
    %107 = vector.load %arg11[%c0_77, %c0_78] : memref<8x10xf32, #tpu.memory_space<vmem>>, vector<8x10xf32>
    tpu.vector_store %arg11[%c0_77, %c0_78], %106 {strides = array<i32>} : memref<8x10xf32, #tpu.memory_space<vmem>>, vector<8x10xf32>,
    return
  }
  func.func @transform_0(%arg0: i32) -> (i32, i32) {
    %c0_i32 = arith.constant 0 : i32
    %c0_i32_0 = arith.constant 0 : i32
    return %arg0, %c0_i32 : i32, i32
  }
  func.func @transform_1(%arg0: i32) -> (i32, i32, i32) {
    %c0_i32 = arith.constant 0 : i32
    %c0_i32_0 = arith.constant 0 : i32
    %c0_i32_1 = arith.constant 0 : i32
    %c0_i32_2 = arith.constant 0 : i32
    return %c0_i32, %c0_i32_0, %c0_i32_1 : i32, i32, i32
  }
  func.func @transform_2(%arg0: i32) -> (i32, i32) {
    %c0_i32 = arith.constant 0 : i32
    %c0_i32_0 = arith.constant 0 : i32
    %c0_i32_1 = arith.constant 0 : i32
    return %c0_i32, %c0_i32_0 : i32, i32
  }
  func.func @transform_3(%arg0: i32) -> (i32, i32, i32) {
    %c0_i32 = arith.constant 0 : i32
    %c0_i32_0 = arith.constant 0 : i32
    %c0_i32_1 = arith.constant 0 : i32
    %c0_i32_2 = arith.constant 0 : i32
    return %c0_i32, %c0_i32_0, %c0_i32_1 : i32, i32, i32
  }
  func.func @transform_4(%arg0: i32) -> (i32, i32) {
    %c0_i32 = arith.constant 0 : i32
    %c0_i32_0 = arith.constant 0 : i32
    %c0_i32_1 = arith.constant 0 : i32
    return %c0_i32, %c0_i32_0 : i32, i32
  }
  func.func @transform_5(%arg0: i32) -> (i32, i32, i32) {
    %c0_i32 = arith.constant 0 : i32
    %c0_i32_0 = arith.constant 0 : i32
    %c0_i32_1 = arith.constant 0 : i32
    %c0_i32_2 = arith.constant 0 : i32
    return %c0_i32, %c0_i32_0, %c0_i32_1 : i32, i32, i32
  }
  func.func @transform_6(%arg0: i32) -> (i32, i32) {
    %c0_i32 = arith.constant 0 : i32
    %c0_i32_0 = arith.constant 0 : i32
    %c0_i32_1 = arith.constant 0 : i32
    return %c0_i32, %c0_i32_0 : i32, i32
  }
  func.func @transform_7(%arg0: i32) -> (i32, i32) {
    %c0_i32 = arith.constant 0 : i32
    %c0_i32_0 = arith.constant 0 : i32
    %c0_i32_1 = arith.constant 0 : i32
    return %c0_i32, %c0_i32_0 : i32, i32
  }
  func.func @transform_8(%arg0: i32) -> (i32, i32) {
    %c0_i32 = arith.constant 0 : i32
    %c0_i32_0 = arith.constant 0 : i32
    %c0_i32_1 = arith.constant 0 : i32
    return %c0_i32, %c0_i32_0 : i32, i32
  }
  func.func @transform_9(%arg0: i32) -> (i32, i32) {
    %c0_i32 = arith.constant 0 : i32
    %c0_i32_0 = arith.constant 0 : i32
    %c0_i32_1 = arith.constant 0 : i32
    return %c0_i32, %c0_i32_0 : i32, i32
  }
  func.func @transform_10(%arg0: i32) -> (i32, i32) {
    %c0_i32 = arith.constant 0 : i32
    %c0_i32_0 = arith.constant 0 : i32
    return %arg0, %c0_i32 : i32, i32
  }
}

</mosaic_0001>

<llo_original>
// kernel: tpu_custom_call.1
$region0: #{tpu_custom_call.1}
  #allocation0 [shape = 'u32[]', space=smem, size = 0x4, offset = 0x4, fixed_abs, tag = 'smem constant byte address 0x4 - core index']
  #allocation1 [shape = 'u32[144,128]{1,0:T(1,128)}', space=vmem, size = 0x12000, scoped, tag = 'internal scratch']
  %s0 = inlined_call_operand.vmem [shape: f32[448,28], index: 0, kind: input, shape index: {}]
  %s1 = inlined_call_operand.hbm [shape: f32[5,28,256], index: 1, kind: input, shape index: {}]
  %s2 = inlined_call_operand.vmem [shape: f32[1,256], index: 2, kind: input, shape index: {}]
  %s3 = inlined_call_operand.vmem [shape: f32[5,128,256], index: 3, kind: input, shape index: {}]
  %s4 = inlined_call_operand.vmem [shape: f32[1,256], index: 4, kind: input, shape index: {}]
  %s5 = inlined_call_operand.vmem [shape: f32[4,128,50], index: 5, kind: input, shape index: {}]
  %s6 = inlined_call_operand.vmem [shape: f32[1,50], index: 6, kind: input, shape index: {}]
  %s7 = inlined_call_operand.vmem [shape: f32[8,224], index: 7, kind: input, shape index: {}]
  %s8 = inlined_call_operand.vmem [shape: f32[50,10], index: 8, kind: input, shape index: {}]
  %s9 = inlined_call_operand.vmem [shape: f32[1,10], index: 9, kind: input, shape index: {}]
  %s10 = inlined_call_operand.hbm [shape: f32[16,10], index: 10, kind: output, shape index: {}]
  %s11 = sld [smem:[#allocation0]]
  $region77: #{tpu_custom_call.1} parent=0
    _
  %s13 = ssub.s32 1, %s11
  %s14 = scalar_select 0, %s13, %s11
  $region1: #{tpu_custom_call.1} parent=0
    #allocation2 [shape = 'u8[163840]{0}', space=vmem, size = 0x28000, scoped, tag = 'input window, operand 1, single buffered']
    #allocation3 [shape = 's32[2]{0}', space=sflag, size = 0x8, scoped, tag = 'scoped memory for tpu_custom_call.1']
    #allocation4 [shape = 's32[2]{0}', space=sflag, size = 0x8, scoped, tag = 'scoped memory for tpu_custom_call.1']
    #allocation5 [shape = 'u8[8192]{0}', space=vmem, size = 0x2000, scoped, tag = 'output window, operand 0']
    %15 = vsyncpa [#allocation3], 0
    %16 = vsyncpa [#allocation4], 0
    %s17 = scalar_lea.sflag [#allocation4], 1
    %18 = vsyncpa %s17, 0
    loop: start=0, step=1, limit=4
    $region2: #{tpu_custom_call.1} parent=1 // loop_pre_header
      _
    $region3: #{tpu_custom_call.1} parent=1 // loop_header
      %s20 = sphi 0, %s24
      %p21 = scmp.ge.s32.totalorder %s20, 4
      %s30 = sphi 0, %s32
      %s33 = sphi 0, %s30
      %s34 = sphi 0, %s33
      %s50 = sphi 0, %s34
      %s54 = sphi 0, %s54
      %s56 = sphi 0, %s54
      %s57 = sphi 0, %s56
      %s71 = sphi 0, %s57
      %s75 = sphi 0, %s75
      %s77 = sphi 0, %s75
      %s78 = sphi 0, %s77
      %s92 = sphi 0, %s78
      %s96 = sphi 0, %s96
      %s98 = sphi 0, %s96
      %s99 = sphi 0, %s98
      %s113 = sphi 0, %s99
      %s117 = sphi 0, %s117
      %s119 = sphi 0, %s117
      %s120 = sphi 0, %s119
      %s134 = sphi 0, %s120
      %s138 = sphi 0, %s138
      %s140 = sphi 0, %s138
      %s141 = sphi 0, %s140
      %s155 = sphi 0, %s141
      %s159 = sphi 0, %s159
      %s161 = sphi 0, %s159
      %s162 = sphi 0, %s161
      %s176 = sphi 0, %s162
      %s180 = sphi 0, %s180
      %s182 = sphi 0, %s180
      %s183 = sphi 0, %s182
      %s197 = sphi 0, %s183
      %s201 = sphi 0, %s201
      %s203 = sphi 0, %s201
      %s204 = sphi 0, %s203
      %s218 = sphi 0, %s204
      %s222 = sphi 0, %s222
      %s224 = sphi 0, %s222
      %s225 = sphi 0, %s224
      %s239 = sphi 0, %s225
      %s245 = sphi 0, %s247
      %s248 = sphi 0, %s245
      %s249 = sphi 0, %s248
      %s265 = sphi 0, %s249
    $region4: #{tpu_custom_call.1} parent=1 // loop_header_branch
      %23 = sbr.rel (%p21) target = $region8
    $region5: #{tpu_custom_call.1} parent=1 // loop_body
      %s25 = ssub.s32 %s20, 1
      %s26 = ssub.s32 %s20, 2
      %s27 = sadd.s32 %s20, 1
      %s28 = ssub.s32 %s20, %s27
      %p29 = scmp.eq.s32.totalorder %s28, 0
      %s31 = sadd.s32 %s30, 1
      %s32 = scalar_select %p29, %s30, %s31
      %p35 = pneg %p29
      %p36 = scmp.eq.s32.totalorder %s20, 1
      %p37 = por %p35, %p36
      %p38 = scmp.ne.s32.totalorder %s30, %s33
      %p39 = scmp.eq.s32.totalorder %s20, 0
      %p40 = por %p38, %p39
      %p41 = scmp.ne.s32.totalorder %s30, %s33
      %p42 = scmp.eq.s32.totalorder %s25, 1
      %p43 = por %p41, %p42
      %p44 = scmp.ne.s32.totalorder %s33, %s34
      %p45 = scmp.eq.s32.totalorder %s25, 0
      %p46 = por %p44, %p45
      %p47 = scmp.ne.s32.totalorder %s33, %s34
      %p48 = scmp.eq.s32.totalorder %s26, 1
      %p49 = por %p47, %p48
      %p51 = scmp.ne.s32.totalorder %s34, %s50
      %p52 = scmp.eq.s32.totalorder %s26, 0
      %p53 = por %p51, %p52
      %s55 = sadd.s32 %s54, 1
      %p58 = scmp.eq.s32.totalorder %s20, 1
      %p59 = scmp.ne.s32.totalorder %s54, %s56
      %p60 = scmp.eq.s32.totalorder %s20, 0
      %p61 = por %p59, %p60
      %p62 = scmp.ne.s32.totalorder %s54, %s56
      %p63 = scmp.eq.s32.totalorder %s25, 1
      %p64 = por %p62, %p63
      %p65 = scmp.ne.s32.totalorder %s56, %s57
      %p66 = scmp.eq.s32.totalorder %s25, 0
      %p67 = por %p65, %p66
      %p68 = scmp.ne.s32.totalorder %s56, %s57
      %p69 = scmp.eq.s32.totalorder %s26, 1
      %p70 = por %p68, %p69
      %p72 = scmp.ne.s32.totalorder %s57, %s71
      %p73 = scmp.eq.s32.totalorder %s26, 0
      %p74 = por %p72, %p73
      %s76 = sadd.s32 %s75, 1
      %p79 = scmp.eq.s32.totalorder %s20, 1
      %p80 = scmp.ne.s32.totalorder %s75, %s77
      %p81 = scmp.eq.s32.totalorder %s20, 0
      %p82 = por %p80, %p81
      %p83 = scmp.ne.s32.totalorder %s75, %s77
      %p84 = scmp.eq.s32.totalorder %s25, 1
      %p85 = por %p83, %p84
      %p86 = scmp.ne.s32.totalorder %s77, %s78
      %p87 = scmp.eq.s32.totalorder %s25, 0
      %p88 = por %p86, %p87
      %p89 = scmp.ne.s32.totalorder %s77, %s78
      %p90 = scmp.eq.s32.totalorder %s26, 1
      %p91 = por %p89, %p90
      %p93 = scmp.ne.s32.totalorder %s78, %s92
      %p94 = scmp.eq.s32.totalorder %s26, 0
      %p95 = por %p93, %p94
      %s97 = sadd.s32 %s96, 1
      %p100 = scmp.eq.s32.totalorder %s20, 1
      %p101 = scmp.ne.s32.totalorder %s96, %s98
      %p102 = scmp.eq.s32.totalorder %s20, 0
      %p103 = por %p101, %p102
      %p104 = scmp.ne.s32.totalorder %s96, %s98
      %p105 = scmp.eq.s32.totalorder %s25, 1
      %p106 = por %p104, %p105
      %p107 = scmp.ne.s32.totalorder %s98, %s99
      %p108 = scmp.eq.s32.totalorder %s25, 0
      %p109 = por %p107, %p108
      %p110 = scmp.ne.s32.totalorder %s98, %s99
      %p111 = scmp.eq.s32.totalorder %s26, 1
      %p112 = por %p110, %p111
      %p114 = scmp.ne.s32.totalorder %s99, %s113
      %p115 = scmp.eq.s32.totalorder %s26, 0
      %p116 = por %p114, %p115
      %s118 = sadd.s32 %s117, 1
      %p121 = scmp.eq.s32.totalorder %s20, 1
      %p122 = scmp.ne.s32.totalorder %s117, %s119
      %p123 = scmp.eq.s32.totalorder %s20, 0
      %p124 = por %p122, %p123
      %p125 = scmp.ne.s32.totalorder %s117, %s119
      %p126 = scmp.eq.s32.totalorder %s25, 1
      %p127 = por %p125, %p126
      %p128 = scmp.ne.s32.totalorder %s119, %s120
      %p129 = scmp.eq.s32.totalorder %s25, 0
      %p130 = por %p128, %p129
      %p131 = scmp.ne.s32.totalorder %s119, %s120
      %p132 = scmp.eq.s32.totalorder %s26, 1
      %p133 = por %p131, %p132
      %p135 = scmp.ne.s32.totalorder %s120, %s134
      %p136 = scmp.eq.s32.totalorder %s26, 0
      %p137 = por %p135, %p136
      %s139 = sadd.s32 %s138, 1
      %p142 = scmp.eq.s32.totalorder %s20, 1
      %p143 = scmp.ne.s32.totalorder %s138, %s140
      %p144 = scmp.eq.s32.totalorder %s20, 0
      %p145 = por %p143, %p144
      %p146 = scmp.ne.s32.totalorder %s138, %s140
      %p147 = scmp.eq.s32.totalorder %s25, 1
      %p148 = por %p146, %p147
      %p149 = scmp.ne.s32.totalorder %s140, %s141
      %p150 = scmp.eq.s32.totalorder %s25, 0
      %p151 = por %p149, %p150
      %p152 = scmp.ne.s32.totalorder %s140, %s141
      %p153 = scmp.eq.s32.totalorder %s26, 1
      %p154 = por %p152, %p153
      %p156 = scmp.ne.s32.totalorder %s141, %s155
      %p157 = scmp.eq.s32.totalorder %s26, 0
      %p158 = por %p156, %p157
      %s160 = sadd.s32 %s159, 1
      %p163 = scmp.eq.s32.totalorder %s20, 1
      %p164 = scmp.ne.s32.totalorder %s159, %s161
      %p165 = scmp.eq.s32.totalorder %s20, 0
      %p166 = por %p164, %p165
      %p167 = scmp.ne.s32.totalorder %s159, %s161
      %p168 = scmp.eq.s32.totalorder %s25, 1
      %p169 = por %p167, %p168
      %p170 = scmp.ne.s32.totalorder %s161, %s162
      %p171 = scmp.eq.s32.totalorder %s25, 0
      %p172 = por %p170, %p171
      %p173 = scmp.ne.s32.totalorder %s161, %s162
      %p174 = scmp.eq.s32.totalorder %s26, 1
      %p175 = por %p173, %p174
      %p177 = scmp.ne.s32.totalorder %s162, %s176
      %p178 = scmp.eq.s32.totalorder %s26, 0
      %p179 = por %p177, %p178
      %s181 = sadd.s32 %s180, 1
      %p184 = scmp.eq.s32.totalorder %s20, 1
      %p185 = scmp.ne.s32.totalorder %s180, %s182
      %p186 = scmp.eq.s32.totalorder %s20, 0
      %p187 = por %p185, %p186
      %p188 = scmp.ne.s32.totalorder %s180, %s182
      %p189 = scmp.eq.s32.totalorder %s25, 1
      %p190 = por %p188, %p189
      %p191 = scmp.ne.s32.totalorder %s182, %s183
      %p192 = scmp.eq.s32.totalorder %s25, 0
      %p193 = por %p191, %p192
      %p194 = scmp.ne.s32.totalorder %s182, %s183
      %p195 = scmp.eq.s32.totalorder %s26, 1
      %p196 = por %p194, %p195
      %p198 = scmp.ne.s32.totalorder %s183, %s197
      %p199 = scmp.eq.s32.totalorder %s26, 0
      %p200 = por %p198, %p199
      %s202 = sadd.s32 %s201, 1
      %p205 = scmp.eq.s32.totalorder %s20, 1
      %p206 = scmp.ne.s32.totalorder %s201, %s203
      %p207 = scmp.eq.s32.totalorder %s20, 0
      %p208 = por %p206, %p207
      %p209 = scmp.ne.s32.totalorder %s201, %s203
      %p210 = scmp.eq.s32.totalorder %s25, 1
      %p211 = por %p209, %p210
      %p212 = scmp.ne.s32.totalorder %s203, %s204
      %p213 = scmp.eq.s32.totalorder %s25, 0
      %p214 = por %p212, %p213
      %p215 = scmp.ne.s32.totalorder %s203, %s204
      %p216 = scmp.eq.s32.totalorder %s26, 1
      %p217 = por %p215, %p216
      %p219 = scmp.ne.s32.totalorder %s204, %s218
      %p220 = scmp.eq.s32.totalorder %s26, 0
      %p221 = por %p219, %p220
      %s223 = sadd.s32 %s222, 1
      %p226 = scmp.eq.s32.totalorder %s20, 1
      %p227 = scmp.ne.s32.totalorder %s222, %s224
      %p228 = scmp.eq.s32.totalorder %s20, 0
      %p229 = por %p227, %p228
      %p230 = scmp.ne.s32.totalorder %s222, %s224
      %p231 = scmp.eq.s32.totalorder %s25, 1
      %p232 = por %p230, %p231
      %p233 = scmp.ne.s32.totalorder %s224, %s225
      %p234 = scmp.eq.s32.totalorder %s25, 0
      %p235 = por %p233, %p234
      %p236 = scmp.ne.s32.totalorder %s224, %s225
      %p237 = scmp.eq.s32.totalorder %s26, 1
      %p238 = por %p236, %p237
      %p240 = scmp.ne.s32.totalorder %s225, %s239
      %p241 = scmp.eq.s32.totalorder %s26, 0
      %p242 = por %p240, %p241
      %s243 = ssub.s32 %s20, %s27
      %p244 = scmp.eq.s32.totalorder %s243, 0
      %s246 = sadd.s32 %s245, 1
      %s247 = scalar_select %p244, %s245, %s246
      %p250 = pneg %p244
      %p251 = scmp.eq.s32.totalorder %s20, 1
      %p252 = por %p250, %p251
      %p253 = scmp.ne.s32.totalorder %s245, %s248
      %p254 = scmp.eq.s32.totalorder %s20, 0
      %p255 = por %p253, %p254
      %p256 = scmp.ne.s32.totalorder %s245, %s248
      %p257 = scmp.eq.s32.totalorder %s25, 1
      %p258 = por %p256, %p257
      %p259 = scmp.ne.s32.totalorder %s248, %s249
      %p260 = scmp.eq.s32.totalorder %s25, 0
      %p261 = por %p259, %p260
      %p262 = scmp.ne.s32.totalorder %s248, %s249
      %p263 = scmp.eq.s32.totalorder %s26, 1
      %p264 = por %p262, %p263
      %p266 = scmp.ne.s32.totalorder %s249, %s265
      %p267 = scmp.eq.s32.totalorder %s26, 0
      %p268 = por %p266, %p267
      %p269 = scmp.le.s32.totalorder 1, %s20
      %p270 = scmp.lt.s32.totalorder %s20, 3
      %p271 = pnand %p269, %p270
      %p272 = pneg %p271
      // Predicated region
      $region9: #{tpu_custom_call.1} parent=5 // pred_check
        _
      $region10: #{tpu_custom_call.1} parent=5 // pred_check_branch
        %274 = sbr.rel (%p271) target = $region12
      $region11: #{tpu_custom_call.1} parent=5 // pred_region
        %s275 = ssub.s32 %s20, 1
        // Predicated region
        $region13: #{tpu_custom_call.1} parent=11 // pred_check
          %p276 = pneg %p67
        $region14: #{tpu_custom_call.1} parent=11 // pred_check_branch
          %278 = sbr.rel (%p276) target = $region16
        $region15: #{tpu_custom_call.1} parent=11 // pred_region
          %s280 = ssub.s32 5120, 5120
          %281 = vsyncadd [#allocation3], %s280
          %s282 = sshll.u32 [#allocation2], 4
          %s283 = int_to_ptr.vmem [resolvable:$true] %s282
          %288 = dma.hbm_to_vmem [thread:$0]  %s1, 5120, %s283, [#allocation3], 256, 256, 16
        $region16: #{tpu_custom_call.1} parent=11 // pred_fallthru
          _
        // Predicated region
        $region17: #{tpu_custom_call.1} parent=11 // pred_check
          %p289 = pneg %p88
        $region18: #{tpu_custom_call.1} parent=11 // pred_check_branch
          %291 = sbr.rel (%p289) target = $region20
        $region19: #{tpu_custom_call.1} parent=11 // pred_region
          _
        $region20: #{tpu_custom_call.1} parent=11 // pred_fallthru
          _
        // Predicated region
        $region21: #{tpu_custom_call.1} parent=11 // pred_check
          %p292 = pneg %p109
        $region22: #{tpu_custom_call.1} parent=11 // pred_check_branch
          %294 = sbr.rel (%p292) target = $region24
        $region23: #{tpu_custom_call.1} parent=11 // pred_region
          _
        $region24: #{tpu_custom_call.1} parent=11 // pred_fallthru
          _
        // Predicated region
        $region25: #{tpu_custom_call.1} parent=11 // pred_check
          %p295 = pneg %p130
        $region26: #{tpu_custom_call.1} parent=11 // pred_check_branch
          %297 = sbr.rel (%p295) target = $region28
        $region27: #{tpu_custom_call.1} parent=11 // pred_region
          _
        $region28: #{tpu_custom_call.1} parent=11 // pred_fallthru
          _
        // Predicated region
        $region29: #{tpu_custom_call.1} parent=11 // pred_check
          %p298 = pneg %p151
        $region30: #{tpu_custom_call.1} parent=11 // pred_check_branch
          %300 = sbr.rel (%p298) target = $region32
        $region31: #{tpu_custom_call.1} parent=11 // pred_region
          _
        $region32: #{tpu_custom_call.1} parent=11 // pred_fallthru
          _
        // Predicated region
        $region33: #{tpu_custom_call.1} parent=11 // pred_check
          %p301 = pneg %p172
        $region34: #{tpu_custom_call.1} parent=11 // pred_check_branch
          %303 = sbr.rel (%p301) target = $region36
        $region35: #{tpu_custom_call.1} parent=11 // pred_region
          _
        $region36: #{tpu_custom_call.1} parent=11 // pred_fallthru
          _
        // Predicated region
        $region37: #{tpu_custom_call.1} parent=11 // pred_check
          %p304 = pneg %p193
        $region38: #{tpu_custom_call.1} parent=11 // pred_check_branch
          %306 = sbr.rel (%p304) target = $region40
        $region39: #{tpu_custom_call.1} parent=11 // pred_region
          _
        $region40: #{tpu_custom_call.1} parent=11 // pred_fallthru
          _
        // Predicated region
        $region41: #{tpu_custom_call.1} parent=11 // pred_check
          %p307 = pneg %p214
        $region42: #{tpu_custom_call.1} parent=11 // pred_check_branch
          %309 = sbr.rel (%p307) target = $region44
        $region43: #{tpu_custom_call.1} parent=11 // pred_region
          _
        $region44: #{tpu_custom_call.1} parent=11 // pred_fallthru
          _
        // Predicated region
        $region45: #{tpu_custom_call.1} parent=11 // pred_check
          %p310 = pneg %p235
        $region46: #{tpu_custom_call.1} parent=11 // pred_check_branch
          %312 = sbr.rel (%p310) target = $region48
        $region47: #{tpu_custom_call.1} parent=11 // pred_region
          _
        $region48: #{tpu_custom_call.1} parent=11 // pred_fallthru
          _
      $region12: #{tpu_custom_call.1} parent=5 // pred_fallthru
        _
      %p313 = scmp.lt.s32.totalorder %s20, 2
      // Predicated region
      $region49: #{tpu_custom_call.1} parent=5 // pred_check
        %p314 = pneg %p313
      $region50: #{tpu_custom_call.1} parent=5 // pred_check_branch
        %316 = sbr.rel (%p314) target = $region52
      $region51: #{tpu_custom_call.1} parent=5 // pred_region
        // Predicated region
        $region53: #{tpu_custom_call.1} parent=51 // pred_check
          %p317 = pneg %p40
        $region54: #{tpu_custom_call.1} parent=51 // pred_check_branch
          %319 = sbr.rel (%p317) target = $region56
        $region55: #{tpu_custom_call.1} parent=51 // pred_region
          %s320 = smul.u32 28, %s20
          %p321 = scmp.lt.s32.totalorder %s320, 55
          %s322 = scalar_select %p321, %s320, 55
          %s323 = smul.addr %s322, 8
          %s324 = scalar_lea.vmem %s0, %s323
          %s325 = smul.u32 28, %s20
        $region56: #{tpu_custom_call.1} parent=51 // pred_fallthru
          _
      $region52: #{tpu_custom_call.1} parent=5 // pred_fallthru
        _
      %p326 = scmp.le.s32.totalorder 1, %s20
      %p327 = scmp.lt.s32.totalorder %s20, 3
      %p328 = pnand %p326, %p327
      %p329 = pneg %p328
      // Predicated region
      $region57: #{tpu_custom_call.1} parent=5 // pred_check
        _
      $region58: #{tpu_custom_call.1} parent=5 // pred_check_branch
        %331 = sbr.rel (%p328) target = $region60
      $region59: #{tpu_custom_call.1} parent=5 // pred_region
        %s332 = ssub.s32 %s20, 1
        // Predicated region
        $region61: #{tpu_custom_call.1} parent=59 // pred_check
          %p333 = pneg %p67
        $region62: #{tpu_custom_call.1} parent=59 // pred_check_branch
          %335 = sbr.rel (%p333) target = $region64
        $region63: #{tpu_custom_call.1} parent=59 // pred_region
          %336 = dma.done [#allocation3], 5120
        $region64: #{tpu_custom_call.1} parent=59 // pred_fallthru
          _
        %s337 = smul.u32 28, %s25
        %p338 = scmp.lt.s32.totalorder %s337, 55
        %s339 = scalar_select %p338, %s337, 55
        %s340 = smul.addr %s339, 8
        %s341 = scalar_lea.vmem %s0, %s340
        %p342 = pneg %p46
        %p343 = pneg %p43
        %p344 = pneg %p67
        %p345 = pneg %p64
        %p346 = pneg %p88
        %p347 = pneg %p85
        %p348 = pneg %p109
        %p349 = pneg %p106
        %p350 = pneg %p130
        %p351 = pneg %p127
        %p352 = pneg %p151
        %p353 = pneg %p148
        %p354 = pneg %p172
        %p355 = pneg %p169
        %p356 = pneg %p193
        %p357 = pneg %p190
        %p358 = pneg %p214
        %p359 = pneg %p211
        %p360 = pneg %p235
        %p361 = pneg %p232
        %p362 = pneg %p261
        %p363 = pneg %p258
        %s364 = sand.u32 %s248, 1
        %s365 = scalar_lea.sflag [#allocation4], %s364
        %s366 = sand.u32 %s248, 1
        %s367 = smul.addr %s366, 8
        %s368 = scalar_lea.vmem [#allocation5], %s367
        %s369 = smul.u32 28, %s25
        %p370 = scmp.lt.s32.totalorder %s369, 55
        %s371 = scalar_select %p370, %s369, 55
        %s372 = smul.addr %s371, 8
        %s373 = scalar_lea.vmem %s0, %s372
        %s374 = smul.u32 28, %s25
        %v375 = vld [vmem:[%s373] sm:$0xff]
        %v376 = vld [vmem:[%s373 + $0x8] sm:$0xff]
        %v377 = vld [vmem:[%s373 + $0x10] sm:$0xff]
        %v378 = vld [vmem:[%s373 + $0x18] sm:$0xff]
        %v379 = vld [vmem:[%s373 + $0x20] sm:$0xff]
        %v380 = vld [vmem:[%s373 + $0x28] sm:$0xff]
        %v381 = vld [vmem:[%s373 + $0x30] sm:$0xff]
        %v382 = vld [vmem:[%s373 + $0x38] sm:$0xff]
        %v383 = vld [vmem:[%s373 + $0x40] sm:$0xff]
        %v384 = vld [vmem:[%s373 + $0x48] sm:$0xff]
        %v385 = vld [vmem:[%s373 + $0x50] sm:$0xff]
        %v386 = vld [vmem:[%s373 + $0x58] sm:$0xff]
        %v387 = vld [vmem:[%s373 + $0x60] sm:$0xff]
        %v388 = vld [vmem:[%s373 + $0x68] sm:$0xff]
        %v389 = vld [vmem:[%s373 + $0x70] sm:$0xff]
        %v390 = vld [vmem:[%s373 + $0x78] sm:$0xff]
        %v391 = vld [vmem:[%s373 + $0x80] sm:$0xff]
        %v392 = vld [vmem:[%s373 + $0x88] sm:$0xff]
        %v393 = vld [vmem:[%s373 + $0x90] sm:$0xff]
        %v394 = vld [vmem:[%s373 + $0x98] sm:$0xff]
        %v395 = vld [vmem:[%s373 + $0xa0] sm:$0xff]
        %v396 = vld [vmem:[%s373 + $0xa8] sm:$0xff]
        %v397 = vld [vmem:[%s373 + $0xb0] sm:$0xff]
        %v398 = vld [vmem:[%s373 + $0xb8] sm:$0xff]
        %v399 = vld [vmem:[%s373 + $0xc0] sm:$0xff]
        %v400 = vld [vmem:[%s373 + $0xc8] sm:$0xff]
        %v401 = vld [vmem:[%s373 + $0xd0] sm:$0xff]
        %v402 = vld [vmem:[%s373 + $0xd8] sm:$0xff]
        %v403 = vld [vmem:[#allocation2] sm:$0xff]
        %v404 = vld [vmem:[#allocation2 + $0x8] sm:$0xff]
        %v405 = vld [vmem:[#allocation2 + $0x10] sm:$0xff]
        %v406 = vld [vmem:[#allocation2 + $0x18] sm:$0xff]
        %v407 = vld [vmem:[#allocation2 + $0x20] sm:$0xff]
        %v408 = vld [vmem:[#allocation2 + $0x28] sm:$0xff]
        %v409 = vld [vmem:[#allocation2 + $0x30] sm:$0xf]
        %v410 = vld [vmem:[#allocation2 + $0x38] sm:$0xf]
        %s411 = scalar_lea.vmem [#allocation2], 64
        %v412 = vld [vmem:[%s411] sm:$0xff]
        %v413 = vld [vmem:[%s411 + $0x8] sm:$0xff]
        %v414 = vld [vmem:[%s411 + $0x10] sm:$0xff]
        %v415 = vld [vmem:[%s411 + $0x18] sm:$0xff]
        %v416 = vld [vmem:[%s411 + $0x20] sm:$0xff]
        %v417 = vld [vmem:[%s411 + $0x28] sm:$0xff]
        %v418 = vld [vmem:[%s411 + $0x30] sm:$0xf]
        %v419 = vld [vmem:[%s411 + $0x38] sm:$0xf]
        %vm420 = vcmask 228352
        %v422 = vsel %vm420, %v375, 0
        %v425 = vsel %vm420, %v376, 0
        %v428 = vsel %vm420, %v377, 0
        %v431 = vsel %vm420, %v378, 0
        %v434 = vsel %vm420, %v379, 0
        %v437 = vsel %vm420, %v380, 0
        %v440 = vsel %vm420, %v381, 0
        %v443 = vsel %vm420, %v382, 0
        %v446 = vsel %vm420, %v383, 0
        %v449 = vsel %vm420, %v384, 0
        %v452 = vsel %vm420, %v385, 0
        %v455 = vsel %vm420, %v386, 0
        %v458 = vsel %vm420, %v387, 0
        %v461 = vsel %vm420, %v388, 0
        %v464 = vsel %vm420, %v389, 0
        %v467 = vsel %vm420, %v390, 0
        %v470 = vsel %vm420, %v391, 0
        %v473 = vsel %vm420, %v392, 0
        %v476 = vsel %vm420, %v393, 0
        %v479 = vsel %vm420, %v394, 0
        %v482 = vsel %vm420, %v395, 0
        %v485 = vsel %vm420, %v396, 0
        %v488 = vsel %vm420, %v397, 0
        %v491 = vsel %vm420, %v398, 0
        %v494 = vsel %vm420, %v399, 0
        %v497 = vsel %vm420, %v400, 0
        %v500 = vsel %vm420, %v401, 0
        %v503 = vsel %vm420, %v402, 0
        %vm505 = vcmask 1043456
        %v507 = vsel %vm505, %v418, 0
        %v510 = vsel %vm505, %v419, 0
        %512 = vmatprep.subr.mxu0 %v413
        %513 = vmatpush1.msra.mxu0 %v412
        %514 = vmatprep.subr.mxu0 %v415
        %515 = vmatpush1.msra.mxu0 %v414
        %516 = vmatprep.subr.mxu0 %v417
        %517 = vmatpush1.msra.mxu0 %v416
        %518 = vmatprep.subr.mxu0 %v510
        %519 = vmatpush1.msra.mxu0 %v507
        %520 = vmatprep.subr.mxu0 0.0
        %521 = vmatpush1.msra.mxu0 0.0
        %522 = vmatprep.subr.mxu0 0.0
        %523 = vmatpush1.msra.mxu0 0.0
        %524 = vmatprep.subr.mxu0 0.0
        %525 = vmatpush1.msra.mxu0 0.0
        %526 = vmatprep.subr.mxu0 0.0
        %527 = vmatpush1.msra.mxu0 0.0
        %528 = vmatprep.subr.mxu0 0.0
        %529 = vmatpush1.msra.mxu0 0.0
        %530 = vmatprep.subr.mxu0 0.0
        %531 = vmatpush1.msra.mxu0 0.0
        %532 = vmatprep.subr.mxu0 0.0
        %533 = vmatpush1.msra.mxu0 0.0
        %534 = vmatprep.subr.mxu0 0.0
        %535 = vmatpush1.msra.mxu0 0.0
        %536 = vmatprep.subr.mxu0 0.0
        %537 = vmatpush1.msra.mxu0 0.0
        %538 = vmatprep.subr.mxu0 0.0
        %539 = vmatpush1.msra.mxu0 0.0
        %540 = vmatprep.subr.mxu0 0.0
        %541 = vmatpush1.msra.mxu0 0.0
        %542 = vmatprep.subr.mxu0 0.0
        %543 = vmatpush1.msra.mxu0 0.0
        %544 = vmatprep.subr.mxu0 0.0
        %545 = vmatpush1.msra.mxu0 0.0
        %546 = vmatprep.subr.mxu0 0.0
        %547 = vmatpush1.msra.mxu0 0.0
        %548 = vmatprep.subr.mxu0 0.0
        %549 = vmatpush1.msra.mxu0 0.0
        %550 = vmatprep.subr.mxu0 0.0
        %551 = vmatpush1.msra.mxu0 0.0
        %552 = vmatprep.subr.mxu0 0.0
        %553 = vmatpush1.msra.mxu0 0.0
        %554 = vmatprep.subr.mxu0 0.0
        %555 = vmatpush1.msra.mxu0 0.0
        %556 = vmatprep.subr.mxu0 0.0
        %557 = vmatpush1.msra.mxu0 0.0
        %558 = vmatprep.subr.mxu0 0.0
        %559 = vmatpush1.msra.mxu0 0.0
        %560 = vmatprep.subr.mxu0 0.0
        %561 = vmatpush1.msra.mxu0 0.0
        %562 = vmatprep.subr.mxu0 0.0
        %563 = vmatpush1.msra.mxu0 0.0
        %564 = vmatprep.subr.mxu0 0.0
        %565 = vmatpush1.msra.mxu0 0.0
        %566 = vmatprep.subr.mxu0 0.0
        %567 = vmatpush1.msra.mxu0 0.0
        %568 = vmatprep.subr.mxu0 0.0
        %569 = vmatpush1.msra.mxu0 0.0
        %570 = vmatprep.subr.mxu0 0.0
        %571 = vmatpush1.msra.mxu0 0.0
        %572 = vmatprep.subr.mxu0 0.0
        %573 = vmatpush1.msra.mxu0 0.0
        %574 = vmatprep.subr.mxu0 0.0
        %575 = vmatpush1.msra.mxu0 0.0
        %576 = vmatprep.mubr.f32.mxu0 0.0
        %577 = vmatmul.mubr.f32.gmra.mrb[0].mxu0 %v422
        %v578 = vpop.f32.mrb[0].mxu0
        %v579 = vadd.f32 0.0, %v578
        %v580 = vpop.f32.mrb[0].mxu0
        %v581 = vadd.f32 0.0, %v580
        %582 = vmatprep.mubr.f32.mxu0 0.0
        %583 = vmatmul.mubr.f32.gmra.mrb[0].mxu0 %v425
        %v584 = vpop.f32.mrb[0].mxu0
        %v585 = vadd.f32 0.0, %v584
        %v586 = vpop.f32.mrb[0].mxu0
        %v587 = vadd.f32 0.0, %v586
        %588 = vmatprep.mubr.f32.mxu0 0.0
        %589 = vmatmul.mubr.f32.gmra.mrb[0].mxu0 %v428
        %v590 = vpop.f32.mrb[0].mxu0
        %v591 = vadd.f32 0.0, %v590
        %v592 = vpop.f32.mrb[0].mxu0
        %v593 = vadd.f32 0.0, %v592
        %594 = vmatprep.mubr.f32.mxu0 0.0
        %595 = vmatmul.mubr.f32.gmra.mrb[0].mxu0 %v431
        %v596 = vpop.f32.mrb[0].mxu0
        %v597 = vadd.f32 0.0, %v596
        %v598 = vpop.f32.mrb[0].mxu0
        %v599 = vadd.f32 0.0, %v598
        %600 = vmatprep.mubr.f32.mxu0 0.0
        %601 = vmatmul.mubr.f32.gmra.mrb[0].mxu0 %v434
        %v602 = vpop.f32.mrb[0].mxu0
        %v603 = vadd.f32 0.0, %v602
        %v604 = vpop.f32.mrb[0].mxu0
        %v605 = vadd.f32 0.0, %v604
        %606 = vmatprep.mubr.f32.mxu0 0.0
        %607 = vmatmul.mubr.f32.gmra.mrb[0].mxu0 %v437
        %v608 = vpop.f32.mrb[0].mxu0
        %v609 = vadd.f32 0.0, %v608
        %v610 = vpop.f32.mrb[0].mxu0
        %v611 = vadd.f32 0.0, %v610
        %612 = vmatprep.mubr.f32.mxu0 0.0
        %613 = vmatmul.mubr.f32.gmra.mrb[0].mxu0 %v440
        %v614 = vpop.f32.mrb[0].mxu0
        %v615 = vadd.f32 0.0, %v614
        %v616 = vpop.f32.mrb[0].mxu0
        %v617 = vadd.f32 0.0, %v616
        %618 = vmatprep.mubr.f32.mxu0 0.0
        %619 = vmatmul.mubr.f32.gmra.mrb[0].mxu0 %v443
        %v620 = vpop.f32.mrb[0].mxu0
        %v621 = vadd.f32 0.0, %v620
        %v622 = vpop.f32.mrb[0].mxu0
        %v623 = vadd.f32 0.0, %v622
        %624 = vmatprep.mubr.f32.mxu0 0.0
        %625 = vmatmul.mubr.f32.gmra.mrb[0].mxu0 %v446
        %v626 = vpop.f32.mrb[0].mxu0
        %v627 = vadd.f32 0.0, %v626
        %v628 = vpop.f32.mrb[0].mxu0
        %v629 = vadd.f32 0.0, %v628
        %630 = vmatprep.mubr.f32.mxu0 0.0
        %631 = vmatmul.mubr.f32.gmra.mrb[0].mxu0 %v449
        %v632 = vpop.f32.mrb[0].mxu0
        %v633 = vadd.f32 0.0, %v632
        %v634 = vpop.f32.mrb[0].mxu0
        %v635 = vadd.f32 0.0, %v634
        %636 = vmatprep.mubr.f32.mxu0 0.0
        %637 = vmatmul.mubr.f32.gmra.mrb[0].mxu0 %v452
        %v638 = vpop.f32.mrb[0].mxu0
        %v639 = vadd.f32 0.0, %v638
        %v640 = vpop.f32.mrb[0].mxu0
        %v641 = vadd.f32 0.0, %v640
        %642 = vmatprep.mubr.f32.mxu0 0.0
        %643 = vmatmul.mubr.f32.gmra.mrb[0].mxu0 %v455
        %v644 = vpop.f32.mrb[0].mxu0
        %v645 = vadd.f32 0.0, %v644
        %v646 = vpop.f32.mrb[0].mxu0
        %v647 = vadd.f32 0.0, %v646
        %648 = vmatprep.mubr.f32.mxu0 0.0
        %649 = vmatmul.mubr.f32.gmra.mrb[0].mxu0 %v458
        %v650 = vpop.f32.mrb[0].mxu0
        %v651 = vadd.f32 0.0, %v650
        %v652 = vpop.f32.mrb[0].mxu0
        %v653 = vadd.f32 0.0, %v652
        %654 = vmatprep.mubr.f32.mxu0 0.0
        %655 = vmatmul.mubr.f32.gmra.mrb[0].mxu0 %v461
        %v656 = vpop.f32.mrb[0].mxu0
        %v657 = vadd.f32 0.0, %v656
        %v658 = vpop.f32.mrb[0].mxu0
        %v659 = vadd.f32 0.0, %v658
        %660 = vmatprep.mubr.f32.mxu0 0.0
        %661 = vmatmul.mubr.f32.gmra.mrb[0].mxu0 %v464
        %v662 = vpop.f32.mrb[0].mxu0
        %v663 = vadd.f32 0.0, %v662
        %v664 = vpop.f32.mrb[0].mxu0
        %v665 = vadd.f32 0.0, %v664
        %666 = vmatprep.mubr.f32.mxu0 0.0
        %667 = vmatmul.mubr.f32.gmra.mrb[0].mxu0 %v467
        %v668 = vpop.f32.mrb[0].mxu0
        %v669 = vadd.f32 0.0, %v668
        %v670 = vpop.f32.mrb[0].mxu0
        %v671 = vadd.f32 0.0, %v670
        %672 = vmatprep.mubr.f32.mxu0 0.0
        %673 = vmatmul.mubr.f32.gmra.mrb[0].mxu0 %v470
        %v674 = vpop.f32.mrb[0].mxu0
        %v675 = vadd.f32 0.0, %v674
        %v676 = vpop.f32.mrb[0].mxu0
        %v677 = vadd.f32 0.0, %v676
        %678 = vmatprep.mubr.f32.mxu0 0.0
        %679 = vmatmul.mubr.f32.gmra.mrb[0].mxu0 %v473
        %v680 = vpop.f32.mrb[0].mxu0
        %v681 = vadd.f32 0.0, %v680
        %v682 = vpop.f32.mrb[0].mxu0
        %v683 = vadd.f32 0.0, %v682
        %684 = vmatprep.mubr.f32.mxu0 0.0
        %685 = vmatmul.mubr.f32.gmra.mrb[0].mxu0 %v476
        %v686 = vpop.f32.mrb[0].mxu0
        %v687 = vadd.f32 0.0, %v686
        %v688 = vpop.f32.mrb[0].mxu0
        %v689 = vadd.f32 0.0, %v688
        %690 = vmatprep.mubr.f32.mxu0 0.0
        %691 = vmatmul.mubr.f32.gmra.mrb[0].mxu0 %v479
        %v692 = vpop.f32.mrb[0].mxu0
        %v693 = vadd.f32 0.0, %v692
        %v694 = vpop.f32.mrb[0].mxu0
        %v695 = vadd.f32 0.0, %v694
        %696 = vmatprep.mubr.f32.mxu0 0.0
        %697 = vmatmul.mubr.f32.gmra.mrb[0].mxu0 %v482
        %v698 = vpop.f32.mrb[0].mxu0
        %v699 = vadd.f32 0.0, %v698
        %v700 = vpop.f32.mrb[0].mxu0
        %v701 = vadd.f32 0.0, %v700
        %702 = vmatprep.mubr.f32.mxu0 0.0
        %703 = vmatmul.mubr.f32.gmra.mrb[0].mxu0 %v485
        %v704 = vpop.f32.mrb[0].mxu0
        %v705 = vadd.f32 0.0, %v704
        %v706 = vpop.f32.mrb[0].mxu0
        %v707 = vadd.f32 0.0, %v706
        %708 = vmatprep.mubr.f32.mxu0 0.0
        %709 = vmatmul.mubr.f32.gmra.mrb[0].mxu0 %v488
        %v710 = vpop.f32.mrb[0].mxu0
        %v711 = vadd.f32 0.0, %v710
        %v712 = vpop.f32.mrb[0].mxu0
        %v713 = vadd.f32 0.0, %v712
        %714 = vmatprep.mubr.f32.mxu0 0.0
        %715 = vmatmul.mubr.f32.gmra.mrb[0].mxu0 %v491
        %v716 = vpop.f32.mrb[0].mxu0
        %v717 = vadd.f32 0.0, %v716
        %v718 = vpop.f32.mrb[0].mxu0
        %v719 = vadd.f32 0.0, %v718
        %720 = vmatprep.mubr.f32.mxu0 0.0
        %721 = vmatmul.mubr.f32.gmra.mrb[0].mxu0 %v494
        %v722 = vpop.f32.mrb[0].mxu0
        %v723 = vadd.f32 0.0, %v722
        %v724 = vpop.f32.mrb[0].mxu0
        %v725 = vadd.f32 0.0, %v724
        %726 = vmatprep.mubr.f32.mxu0 0.0
        %727 = vmatmul.mubr.f32.gmra.mrb[0].mxu0 %v497
        %v728 = vpop.f32.mrb[0].mxu0
        %v729 = vadd.f32 0.0, %v728
        %v730 = vpop.f32.mrb[0].mxu0
        %v731 = vadd.f32 0.0, %v730
        %732 = vmatprep.mubr.f32.mxu0 0.0
        %733 = vmatmul.mubr.f32.gmra.mrb[0].mxu0 %v500
        %v734 = vpop.f32.mrb[0].mxu0
        %v735 = vadd.f32 0.0, %v734
        %v736 = vpop.f32.mrb[0].mxu0
        %v737 = vadd.f32 0.0, %v736
        %738 = vmatprep.mubr.f32.mxu0 0.0
        %739 = vmatmul.mubr.f32.gmra.mrb[0].mxu0 %v503
        %v740 = vpop.f32.mrb[0].mxu0
        %v741 = vadd.f32 0.0, %v740
        %v742 = vpop.f32.mrb[0].mxu0
        %v743 = vadd.f32 0.0, %v742
        %744 = vdwg.mxu0
        %v745 = vrot.slane %v579, 1
        %v746 = vrot.slane %v581, 1
        %v747 = vrot.slane %v585, 1
        %v748 = vrot.slane %v587, 1
        %v749 = vrot.slane %v591, 1
        %v750 = vrot.slane %v593, 1
        %v751 = vrot.slane %v597, 1
        %v752 = vrot.slane %v599, 1
        %v753 = vrot.slane %v603, 1
        %v754 = vrot.slane %v605, 1
        %v755 = vrot.slane %v609, 1
        %v756 = vrot.slane %v611, 1
        %v757 = vrot.slane %v615, 1
        %v758 = vrot.slane %v617, 1
        %v759 = vrot.slane %v621, 1
        %v760 = vrot.slane %v623, 1
        %v761 = vrot.slane %v627, 1
        %v762 = vrot.slane %v629, 1
        %v763 = vrot.slane %v633, 1
        %v764 = vrot.slane %v635, 1
        %v765 = vrot.slane %v639, 1
        %v766 = vrot.slane %v641, 1
        %v767 = vrot.slane %v645, 1
        %v768 = vrot.slane %v647, 1
        %v769 = vrot.slane %v651, 1
        %v770 = vrot.slane %v653, 1
        %v771 = vrot.slane %v657, 1
        %v772 = vrot.slane %v659, 1
        %v773 = vrot.slane %v663, 1
        %v774 = vrot.slane %v665, 1
        %v775 = vrot.slane %v669, 1
        %v776 = vrot.slane %v671, 1
        %v777 = vrot.slane %v675, 1
        %v778 = vrot.slane %v677, 1
        %v779 = vrot.slane %v681, 1
        %v780 = vrot.slane %v683, 1
        %v781 = vrot.slane %v687, 1
        %v782 = vrot.slane %v689, 1
        %v783 = vrot.slane %v693, 1
        %v784 = vrot.slane %v695, 1
        %v785 = vrot.slane %v699, 1
        %v786 = vrot.slane %v701, 1
        %v787 = vrot.slane %v705, 1
        %v788 = vrot.slane %v707, 1
        %v789 = vrot.slane %v711, 1
        %v790 = vrot.slane %v713, 1
        %v791 = vrot.slane %v717, 1
        %v792 = vrot.slane %v719, 1
        %v793 = vrot.slane %v723, 1
        %v794 = vrot.slane %v725, 1
        %v795 = vrot.slane %v729, 1
        %v796 = vrot.slane %v731, 1
        %v797 = vrot.slane %v735, 1
        %v798 = vrot.slane %v737, 1
        %v799 = vrot.slane %v741, 1
        %v800 = vrot.slane %v743, 1
        %v801 = vlaneseq
        %v802 = vshrl.u32 %v801, 7
        %vm803 = vcmp.lt.s32.totalorder %v802, 7
        %v804 = vsel %vm803, %v797, %v799
        %v805 = vsel %vm803, %v798, %v800
        %v806 = vsel %vm803, %v795, %v797
        %v807 = vsel %vm803, %v796, %v798
        %v808 = vsel %vm803, %v793, %v795
        %v809 = vsel %vm803, %v794, %v796
        %v810 = vsel %vm803, %v791, %v793
        %v811 = vsel %vm803, %v792, %v794
        %v812 = vsel %vm803, %v789, %v791
        %v813 = vsel %vm803, %v790, %v792
        %v814 = vsel %vm803, %v787, %v789
        %v815 = vsel %vm803, %v788, %v790
        %v816 = vsel %vm803, %v785, %v787
        %v817 = vsel %vm803, %v786, %v788
        %v818 = vsel %vm803, %v783, %v785
        %v819 = vsel %vm803, %v784, %v786
        %v820 = vsel %vm803, %v781, %v783
        %v821 = vsel %vm803, %v782, %v784
        %v822 = vsel %vm803, %v779, %v781
        %v823 = vsel %vm803, %v780, %v782
        %v824 = vsel %vm803, %v777, %v779
        %v825 = vsel %vm803, %v778, %v780
        %v826 = vsel %vm803, %v775, %v777
        %v827 = vsel %vm803, %v776, %v778
        %v828 = vsel %vm803, %v773, %v775
        %v829 = vsel %vm803, %v774, %v776
        %v830 = vsel %vm803, %v771, %v773
        %v831 = vsel %vm803, %v772, %v774
        %v832 = vsel %vm803, %v769, %v771
        %v833 = vsel %vm803, %v770, %v772
        %v834 = vsel %vm803, %v767, %v769
        %v835 = vsel %vm803, %v768, %v770
        %v836 = vsel %vm803, %v765, %v767
        %v837 = vsel %vm803, %v766, %v768
        %v838 = vsel %vm803, %v763, %v765
        %v839 = vsel %vm803, %v764, %v766
        %v840 = vsel %vm803, %v761, %v763
        %v841 = vsel %vm803, %v762, %v764
        %v842 = vsel %vm803, %v759, %v761
        %v843 = vsel %vm803, %v760, %v762
        %v844 = vsel %vm803, %v757, %v759
        %v845 = vsel %vm803, %v758, %v760
        %v846 = vsel %vm803, %v755, %v757
        %v847 = vsel %vm803, %v756, %v758
        %v848 = vsel %vm803, %v753, %v755
        %v849 = vsel %vm803, %v754, %v756
        %v850 = vsel %vm803, %v751, %v753
        %v851 = vsel %vm803, %v752, %v754
        %v852 = vsel %vm803, %v749, %v751
        %v853 = vsel %vm803, %v750, %v752
        %v854 = vsel %vm803, %v747, %v749
        %v855 = vsel %vm803, %v748, %v750
        %v856 = vsel %vm803, %v745, %v747
        %v857 = vsel %vm803, %v746, %v748
        %v858 = vsel %vm803, %v799, %v745
        %v859 = vsel %vm803, %v800, %v746
        %v861 = vsel %vm505, %v409, 0
        %v864 = vsel %vm505, %v410, 0
        %866 = vmatprep.subr.mxu0 %v404
        %867 = vmatpush1.msra.mxu0 %v403
        %868 = vmatprep.subr.mxu0 %v406
        %869 = vmatpush1.msra.mxu0 %v405
        %870 = vmatprep.subr.mxu0 %v408
        %871 = vmatpush1.msra.mxu0 %v407
        %872 = vmatprep.subr.mxu0 %v864
        %873 = vmatpush1.msra.mxu0 %v861
        %874 = vmatprep.subr.mxu0 0.0
        %875 = vmatpush1.msra.mxu0 0.0
        %876 = vmatprep.subr.mxu0 0.0
        %877 = vmatpush1.msra.mxu0 0.0
        %878 = vmatprep.subr.mxu0 0.0
        %879 = vmatpush1.msra.mxu0 0.0
        %880 = vmatprep.subr.mxu0 0.0
        %881 = vmatpush1.msra.mxu0 0.0
        %882 = vmatprep.subr.mxu0 0.0
        %883 = vmatpush1.msra.mxu0 0.0
        %884 = vmatprep.subr.mxu0 0.0
        %885 = vmatpush1.msra.mxu0 0.0
        %886 = vmatprep.subr.mxu0 0.0
        %887 = vmatpush1.msra.mxu0 0.0
        %888 = vmatprep.subr.mxu0 0.0
        %889 = vmatpush1.msra.mxu0 0.0
        %890 = vmatprep.subr.mxu0 0.0
        %891 = vmatpush1.msra.mxu0 0.0
        %892 = vmatprep.subr.mxu0 0.0
        %893 = vmatpush1.msra.mxu0 0.0
        %894 = vmatprep.subr.mxu0 0.0
        %895 = vmatpush1.msra.mxu0 0.0
        %896 = vmatprep.subr.mxu0 0.0
        %897 = vmatpush1.msra.mxu0 0.0
        %898 = vmatprep.subr.mxu0 0.0
        %899 = vmatpush1.msra.mxu0 0.0
        %900 = vmatprep.subr.mxu0 0.0
        %901 = vmatpush1.msra.mxu0 0.0
        %902 = vmatprep.subr.mxu0 0.0
        %903 = vmatpush1.msra.mxu0 0.0
        %904 = vmatprep.subr.mxu0 0.0
        %905 = vmatpush1.msra.mxu0 0.0
        %906 = vmatprep.subr.mxu0 0.0
        %907 = vmatpush1.msra.mxu0 0.0
        %908 = vmatprep.subr.mxu0 0.0
        %909 = vmatpush1.msra.mxu0 0.0
        %910 = vmatprep.subr.mxu0 0.0
        %911 = vmatpush1.msra.mxu0 0.0
        %912 = vmatprep.subr.mxu0 0.0
        %913 = vmatpush1.msra.mxu0 0.0
        %914 = vmatprep.subr.mxu0 0.0
        %915 = vmatpush1.msra.mxu0 0.0
        %916 = vmatprep.subr.mxu0 0.0
        %917 = vmatpush1.msra.mxu0 0.0
        %918 = vmatprep.subr.mxu0 0.0
        %919 = vmatpush1.msra.mxu0 0.0
        %920 = vmatprep.subr.mxu0 0.0
        %921 = vmatpush1.msra.mxu0 0.0
        %922 = vmatprep.subr.mxu0 0.0
        %923 = vmatpush1.msra.mxu0 0.0
        %924 = vmatprep.subr.mxu0 0.0
        %925 = vmatpush1.msra.mxu0 0.0
        %926 = vmatprep.subr.mxu0 0.0
        %927 = vmatpush1.msra.mxu0 0.0
        %928 = vmatprep.subr.mxu0 0.0
        %929 = vmatpush1.msra.mxu0 0.0
        %930 = vmatprep.mubr.f32.mxu0 0.0
        %931 = vmatmul.mubr.f32.gmra.mrb[0].mxu0 %v422
        %v932 = vpop.f32.mrb[0].mxu0
        %v933 = vadd.f32 %v856, %v932
        %v934 = vpop.f32.mrb[0].mxu0
        %v935 = vadd.f32 %v857, %v934
        %936 = vmatprep.mubr.f32.mxu0 0.0
        %937 = vmatmul.mubr.f32.gmra.mrb[0].mxu0 %v425
        %v938 = vpop.f32.mrb[0].mxu0
        %v939 = vadd.f32 %v854, %v938
        %v940 = vpop.f32.mrb[0].mxu0
        %v941 = vadd.f32 %v855, %v940
        %942 = vmatprep.mubr.f32.mxu0 0.0
        %943 = vmatmul.mubr.f32.gmra.mrb[0].mxu0 %v428
        %v944 = vpop.f32.mrb[0].mxu0
        %v945 = vadd.f32 %v852, %v944
        %v946 = vpop.f32.mrb[0].mxu0
        %v947 = vadd.f32 %v853, %v946
        %948 = vmatprep.mubr.f32.mxu0 0.0
        %949 = vmatmul.mubr.f32.gmra.mrb[0].mxu0 %v431
        %v950 = vpop.f32.mrb[0].mxu0
        %v951 = vadd.f32 %v850, %v950
        %v952 = vpop.f32.mrb[0].mxu0
        %v953 = vadd.f32 %v851, %v952
        %954 = vmatprep.mubr.f32.mxu0 0.0
        %955 = vmatmul.mubr.f32.gmra.mrb[0].mxu0 %v434
        %v956 = vpop.f32.mrb[0].mxu0
        %v957 = vadd.f32 %v848, %v956
        %v958 = vpop.f32.mrb[0].mxu0
        %v959 = vadd.f32 %v849, %v958
        %960 = vmatprep.mubr.f32.mxu0 0.0
        %961 = vmatmul.mubr.f32.gmra.mrb[0].mxu0 %v437
        %v962 = vpop.f32.mrb[0].mxu0
        %v963 = vadd.f32 %v846, %v962
        %v964 = vpop.f32.mrb[0].mxu0
        %v965 = vadd.f32 %v847, %v964
        %966 = vmatprep.mubr.f32.mxu0 0.0
        %967 = vmatmul.mubr.f32.gmra.mrb[0].mxu0 %v440
        %v968 = vpop.f32.mrb[0].mxu0
        %v969 = vadd.f32 %v844, %v968
        %v970 = vpop.f32.mrb[0].mxu0
        %v971 = vadd.f32 %v845, %v970
        %972 = vmatprep.mubr.f32.mxu0 0.0
        %973 = vmatmul.mubr.f32.gmra.mrb[0].mxu0 %v443
        %v974 = vpop.f32.mrb[0].mxu0
        %v975 = vadd.f32 %v842, %v974
        %v976 = vpop.f32.mrb[0].mxu0
        %v977 = vadd.f32 %v843, %v976
        %978 = vmatprep.mubr.f32.mxu0 0.0
        %979 = vmatmul.mubr.f32.gmra.mrb[0].mxu0 %v446
        %v980 = vpop.f32.mrb[0].mxu0
        %v981 = vadd.f32 %v840, %v980
        %v982 = vpop.f32.mrb[0].mxu0
        %v983 = vadd.f32 %v841, %v982
        %984 = vmatprep.mubr.f32.mxu0 0.0
        %985 = vmatmul.mubr.f32.gmra.mrb[0].mxu0 %v449
        %v986 = vpop.f32.mrb[0].mxu0
        %v987 = vadd.f32 %v838, %v986
        %v988 = vpop.f32.mrb[0].mxu0
        %v989 = vadd.f32 %v839, %v988
        %990 = vmatprep.mubr.f32.mxu0 0.0
        %991 = vmatmul.mubr.f32.gmra.mrb[0].mxu0 %v452
        %v992 = vpop.f32.mrb[0].mxu0
        %v993 = vadd.f32 %v836, %v992
        %v994 = vpop.f32.mrb[0].mxu0
        %v995 = vadd.f32 %v837, %v994
        %996 = vmatprep.mubr.f32.mxu0 0.0
        %997 = vmatmul.mubr.f32.gmra.mrb[0].mxu0 %v455
        %v998 = vpop.f32.mrb[0].mxu0
        %v999 = vadd.f32 %v834, %v998
        %v1000 = vpop.f32.mrb[0].mxu0
        %v1001 = vadd.f32 %v835, %v1000
        %1002 = vmatprep.mubr.f32.mxu0 0.0
        %1003 = vmatmul.mubr.f32.gmra.mrb[0].mxu0 %v458
        %v1004 = vpop.f32.mrb[0].mxu0
        %v1005 = vadd.f32 %v832, %v1004
        %v1006 = vpop.f32.mrb[0].mxu0
        %v1007 = vadd.f32 %v833, %v1006
        %1008 = vmatprep.mubr.f32.mxu0 0.0
        %1009 = vmatmul.mubr.f32.gmra.mrb[0].mxu0 %v461
        %v1010 = vpop.f32.mrb[0].mxu0
        %v1011 = vadd.f32 %v830, %v1010
        %v1012 = vpop.f32.mrb[0].mxu0
        %v1013 = vadd.f32 %v831, %v1012
        %1014 = vmatprep.mubr.f32.mxu0 0.0
        %1015 = vmatmul.mubr.f32.gmra.mrb[0].mxu0 %v464
        %v1016 = vpop.f32.mrb[0].mxu0
        %v1017 = vadd.f32 %v828, %v1016
        %v1018 = vpop.f32.mrb[0].mxu0
        %v1019 = vadd.f32 %v829, %v1018
        %1020 = vmatprep.mubr.f32.mxu0 0.0
        %1021 = vmatmul.mubr.f32.gmra.mrb[0].mxu0 %v467
        %v1022 = vpop.f32.mrb[0].mxu0
        %v1023 = vadd.f32 %v826, %v1022
        %v1024 = vpop.f32.mrb[0].mxu0
        %v1025 = vadd.f32 %v827, %v1024
        %1026 = vmatprep.mubr.f32.mxu0 0.0
        %1027 = vmatmul.mubr.f32.gmra.mrb[0].mxu0 %v470
        %v1028 = vpop.f32.mrb[0].mxu0
        %v1029 = vadd.f32 %v824, %v1028
        %v1030 = vpop.f32.mrb[0].mxu0
        %v1031 = vadd.f32 %v825, %v1030
        %1032 = vmatprep.mubr.f32.mxu0 0.0
        %1033 = vmatmul.mubr.f32.gmra.mrb[0].mxu0 %v473
        %v1034 = vpop.f32.mrb[0].mxu0
        %v1035 = vadd.f32 %v822, %v1034
        %v1036 = vpop.f32.mrb[0].mxu0
        %v1037 = vadd.f32 %v823, %v1036
        %1038 = vmatprep.mubr.f32.mxu0 0.0
        %1039 = vmatmul.mubr.f32.gmra.mrb[0].mxu0 %v476
        %v1040 = vpop.f32.mrb[0].mxu0
        %v1041 = vadd.f32 %v820, %v1040
        %v1042 = vpop.f32.mrb[0].mxu0
        %v1043 = vadd.f32 %v821, %v1042
        %1044 = vmatprep.mubr.f32.mxu0 0.0
        %1045 = vmatmul.mubr.f32.gmra.mrb[0].mxu0 %v479
        %v1046 = vpop.f32.mrb[0].mxu0
        %v1047 = vadd.f32 %v818, %v1046
        %v1048 = vpop.f32.mrb[0].mxu0
        %v1049 = vadd.f32 %v819, %v1048
        %1050 = vmatprep.mubr.f32.mxu0 0.0
        %1051 = vmatmul.mubr.f32.gmra.mrb[0].mxu0 %v482
        %v1052 = vpop.f32.mrb[0].mxu0
        %v1053 = vadd.f32 %v816, %v1052
        %v1054 = vpop.f32.mrb[0].mxu0
        %v1055 = vadd.f32 %v817, %v1054
        %1056 = vmatprep.mubr.f32.mxu0 0.0
        %1057 = vmatmul.mubr.f32.gmra.mrb[0].mxu0 %v485
        %v1058 = vpop.f32.mrb[0].mxu0
        %v1059 = vadd.f32 %v814, %v1058
        %v1060 = vpop.f32.mrb[0].mxu0
        %v1061 = vadd.f32 %v815, %v1060
        %1062 = vmatprep.mubr.f32.mxu0 0.0
        %1063 = vmatmul.mubr.f32.gmra.mrb[0].mxu0 %v488
        %v1064 = vpop.f32.mrb[0].mxu0
        %v1065 = vadd.f32 %v812, %v1064
        %v1066 = vpop.f32.mrb[0].mxu0
        %v1067 = vadd.f32 %v813, %v1066
        %1068 = vmatprep.mubr.f32.mxu0 0.0
        %1069 = vmatmul.mubr.f32.gmra.mrb[0].mxu0 %v491
        %v1070 = vpop.f32.mrb[0].mxu0
        %v1071 = vadd.f32 %v810, %v1070
        %v1072 = vpop.f32.mrb[0].mxu0
        %v1073 = vadd.f32 %v811, %v1072
        %1074 = vmatprep.mubr.f32.mxu0 0.0
        %1075 = vmatmul.mubr.f32.gmra.mrb[0].mxu0 %v494
        %v1076 = vpop.f32.mrb[0].mxu0
        %v1077 = vadd.f32 %v808, %v1076
        %v1078 = vpop.f32.mrb[0].mxu0
        %v1079 = vadd.f32 %v809, %v1078
        %1080 = vmatprep.mubr.f32.mxu0 0.0
        %1081 = vmatmul.mubr.f32.gmra.mrb[0].mxu0 %v497
        %v1082 = vpop.f32.mrb[0].mxu0
        %v1083 = vadd.f32 %v806, %v1082
        %v1084 = vpop.f32.mrb[0].mxu0
        %v1085 = vadd.f32 %v807, %v1084
        %1086 = vmatprep.mubr.f32.mxu0 0.0
        %1087 = vmatmul.mubr.f32.gmra.mrb[0].mxu0 %v500
        %v1088 = vpop.f32.mrb[0].mxu0
        %v1089 = vadd.f32 %v804, %v1088
        %v1090 = vpop.f32.mrb[0].mxu0
        %v1091 = vadd.f32 %v805, %v1090
        %1092 = vmatprep.mubr.f32.mxu0 0.0
        %1093 = vmatmul.mubr.f32.gmra.mrb[0].mxu0 %v503
        %v1094 = vpop.f32.mrb[0].mxu0
        %v1095 = vadd.f32 %v858, %v1094
        %v1096 = vpop.f32.mrb[0].mxu0
        %v1097 = vadd.f32 %v859, %v1096
        %1098 = vdwg.mxu0
        %s1099 = scalar_lea.vmem [#allocation2], 128
        %v1100 = vld [vmem:[%s1099] sm:$0xff]
        %v1101 = vld [vmem:[%s1099 + $0x8] sm:$0xff]
        %v1102 = vld [vmem:[%s1099 + $0x10] sm:$0xff]
        %v1103 = vld [vmem:[%s1099 + $0x18] sm:$0xff]
        %v1104 = vld [vmem:[%s1099 + $0x20] sm:$0xff]
        %v1105 = vld [vmem:[%s1099 + $0x28] sm:$0xff]
        %v1106 = vld [vmem:[%s1099 + $0x30] sm:$0xf]
        %v1107 = vld [vmem:[%s1099 + $0x38] sm:$0xf]
        %v1109 = vsel %vm505, %v1106, 0
        %v1112 = vsel %vm505, %v1107, 0
        %1114 = vmatprep.subr.mxu0 %v1101
        %1115 = vmatpush1.msra.mxu0 %v1100
        %1116 = vmatprep.subr.mxu0 %v1103
        %1117 = vmatpush1.msra.mxu0 %v1102
        %1118 = vmatprep.subr.mxu0 %v1105
        %1119 = vmatpush1.msra.mxu0 %v1104
        %1120 = vmatprep.subr.mxu0 %v1112
        %1121 = vmatpush1.msra.mxu0 %v1109
        %1122 = vmatprep.subr.mxu0 0.0
        %1123 = vmatpush1.msra.mxu0 0.0
        %1124 = vmatprep.subr.mxu0 0.0
        %1125 = vmatpush1.msra.mxu0 0.0
        %1126 = vmatprep.subr.mxu0 0.0
        %1127 = vmatpush1.msra.mxu0 0.0
        %1128 = vmatprep.subr.mxu0 0.0
        %1129 = vmatpush1.msra.mxu0 0.0
        %1130 = vmatprep.subr.mxu0 0.0
        %1131 = vmatpush1.msra.mxu0 0.0
        %1132 = vmatprep.subr.mxu0 0.0
        %1133 = vmatpush1.msra.mxu0 0.0
        %1134 = vmatprep.subr.mxu0 0.0
        %1135 = vmatpush1.msra.mxu0 0.0
        %1136 = vmatprep.subr.mxu0 0.0
        %1137 = vmatpush1.msra.mxu0 0.0
        %1138 = vmatprep.subr.mxu0 0.0
        %1139 = vmatpush1.msra.mxu0 0.0
        %1140 = vmatprep.subr.mxu0 0.0
        %1141 = vmatpush1.msra.mxu0 0.0
        %1142 = vmatprep.subr.mxu0 0.0
        %1143 = vmatpush1.msra.mxu0 0.0
        %1144 = vmatprep.subr.mxu0 0.0
        %1145 = vmatpush1.msra.mxu0 0.0
        %1146 = vmatprep.subr.mxu0 0.0
        %1147 = vmatpush1.msra.mxu0 0.0
        %1148 = vmatprep.subr.mxu0 0.0
        %1149 = vmatpush1.msra.mxu0 0.0
        %1150 = vmatprep.subr.mxu0 0.0
        %1151 = vmatpush1.msra.mxu0 0.0
        %1152 = vmatprep.subr.mxu0 0.0
        %1153 = vmatpush1.msra.mxu0 0.0
        %1154 = vmatprep.subr.mxu0 0.0
        %1155 = vmatpush1.msra.mxu0 0.0
        %1156 = vmatprep.subr.mxu0 0.0
        %1157 = vmatpush1.msra.mxu0 0.0
        %1158 = vmatprep.subr.mxu0 0.0
        %1159 = vmatpush1.msra.mxu0 0.0
        %1160 = vmatprep.subr.mxu0 0.0
        %1161 = vmatpush1.msra.mxu0 0.0
        %1162 = vmatprep.subr.mxu0 0.0
        %1163 = vmatpush1.msra.mxu0 0.0
        %1164 = vmatprep.subr.mxu0 0.0
        %1165 = vmatpush1.msra.mxu0 0.0
        %1166 = vmatprep.subr.mxu0 0.0
        %1167 = vmatpush1.msra.mxu0 0.0
        %1168 = vmatprep.subr.mxu0 0.0
        %1169 = vmatpush1.msra.mxu0 0.0
        %1170 = vmatprep.subr.mxu0 0.0
        %1171 = vmatpush1.msra.mxu0 0.0
        %1172 = vmatprep.subr.mxu0 0.0
        %1173 = vmatpush1.msra.mxu0 0.0
        %1174 = vmatprep.subr.mxu0 0.0
        %1175 = vmatpush1.msra.mxu0 0.0
        %1176 = vmatprep.subr.mxu0 0.0
        %1177 = vmatpush1.msra.mxu0 0.0
        %1178 = vmatprep.mubr.f32.mxu0 0.0
        %1179 = vmatmul.mubr.f32.gmra.mrb[0].mxu0 %v422
        %v1180 = vpop.f32.mrb[0].mxu0
        %v1181 = vadd.f32 0.0, %v1180
        %v1182 = vpop.f32.mrb[0].mxu0
        %v1183 = vadd.f32 0.0, %v1182
        %1184 = vmatprep.mubr.f32.mxu0 0.0
        %1185 = vmatmul.mubr.f32.gmra.mrb[0].mxu0 %v425
        %v1186 = vpop.f32.mrb[0].mxu0
        %v1187 = vadd.f32 0.0, %v1186
        %v1188 = vpop.f32.mrb[0].mxu0
        %v1189 = vadd.f32 0.0, %v1188
        %1190 = vmatprep.mubr.f32.mxu0 0.0
        %1191 = vmatmul.mubr.f32.gmra.mrb[0].mxu0 %v428
        %v1192 = vpop.f32.mrb[0].mxu0
        %v1193 = vadd.f32 0.0, %v1192
        %v1194 = vpop.f32.mrb[0].mxu0
        %v1195 = vadd.f32 0.0, %v1194
        %1196 = vmatprep.mubr.f32.mxu0 0.0
        %1197 = vmatmul.mubr.f32.gmra.mrb[0].mxu0 %v431
        %v1198 = vpop.f32.mrb[0].mxu0
        %v1199 = vadd.f32 0.0, %v1198
        %v1200 = vpop.f32.mrb[0].mxu0
        %v1201 = vadd.f32 0.0, %v1200
        %1202 = vmatprep.mubr.f32.mxu0 0.0
        %1203 = vmatmul.mubr.f32.gmra.mrb[0].mxu0 %v434
        %v1204 = vpop.f32.mrb[0].mxu0
        %v1205 = vadd.f32 0.0, %v1204
        %v1206 = vpop.f32.mrb[0].mxu0
        %v1207 = vadd.f32 0.0, %v1206
        %1208 = vmatprep.mubr.f32.mxu0 0.0
        %1209 = vmatmul.mubr.f32.gmra.mrb[0].mxu0 %v437
        %v1210 = vpop.f32.mrb[0].mxu0
        %v1211 = vadd.f32 0.0, %v1210
        %v1212 = vpop.f32.mrb[0].mxu0
        %v1213 = vadd.f32 0.0, %v1212
        %1214 = vmatprep.mubr.f32.mxu0 0.0
        %1215 = vmatmul.mubr.f32.gmra.mrb[0].mxu0 %v440
        %v1216 = vpop.f32.mrb[0].mxu0
        %v1217 = vadd.f32 0.0, %v1216
        %v1218 = vpop.f32.mrb[0].mxu0
        %v1219 = vadd.f32 0.0, %v1218
        %1220 = vmatprep.mubr.f32.mxu0 0.0
        %1221 = vmatmul.mubr.f32.gmra.mrb[0].mxu0 %v443
        %v1222 = vpop.f32.mrb[0].mxu0
        %v1223 = vadd.f32 0.0, %v1222
        %v1224 = vpop.f32.mrb[0].mxu0
        %v1225 = vadd.f32 0.0, %v1224
        %1226 = vmatprep.mubr.f32.mxu0 0.0
        %1227 = vmatmul.mubr.f32.gmra.mrb[0].mxu0 %v446
        %v1228 = vpop.f32.mrb[0].mxu0
        %v1229 = vadd.f32 0.0, %v1228
        %v1230 = vpop.f32.mrb[0].mxu0
        %v1231 = vadd.f32 0.0, %v1230
        %1232 = vmatprep.mubr.f32.mxu0 0.0
        %1233 = vmatmul.mubr.f32.gmra.mrb[0].mxu0 %v449
        %v1234 = vpop.f32.mrb[0].mxu0
        %v1235 = vadd.f32 0.0, %v1234
        %v1236 = vpop.f32.mrb[0].mxu0
        %v1237 = vadd.f32 0.0, %v1236
        %1238 = vmatprep.mubr.f32.mxu0 0.0
        %1239 = vmatmul.mubr.f32.gmra.mrb[0].mxu0 %v452
        %v1240 = vpop.f32.mrb[0].mxu0
        %v1241 = vadd.f32 0.0, %v1240
        %v1242 = vpop.f32.mrb[0].mxu0
        %v1243 = vadd.f32 0.0, %v1242
        %1244 = vmatprep.mubr.f32.mxu0 0.0
        %1245 = vmatmul.mubr.f32.gmra.mrb[0].mxu0 %v455
        %v1246 = vpop.f32.mrb[0].mxu0
        %v1247 = vadd.f32 0.0, %v1246
        %v1248 = vpop.f32.mrb[0].mxu0
        %v1249 = vadd.f32 0.0, %v1248
        %1250 = vmatprep.mubr.f32.mxu0 0.0
        %1251 = vmatmul.mubr.f32.gmra.mrb[0].mxu0 %v458
        %v1252 = vpop.f32.mrb[0].mxu0
        %v1253 = vadd.f32 0.0, %v1252
        %v1254 = vpop.f32.mrb[0].mxu0
        %v1255 = vadd.f32 0.0, %v1254
        %1256 = vmatprep.mubr.f32.mxu0 0.0
        %1257 = vmatmul.mubr.f32.gmra.mrb[0].mxu0 %v461
        %v1258 = vpop.f32.mrb[0].mxu0
        %v1259 = vadd.f32 0.0, %v1258
        %v1260 = vpop.f32.mrb[0].mxu0
        %v1261 = vadd.f32 0.0, %v1260
        %1262 = vmatprep.mubr.f32.mxu0 0.0
        %1263 = vmatmul.mubr.f32.gmra.mrb[0].mxu0 %v464
        %v1264 = vpop.f32.mrb[0].mxu0
        %v1265 = vadd.f32 0.0, %v1264
        %v1266 = vpop.f32.mrb[0].mxu0
        %v1267 = vadd.f32 0.0, %v1266
        %1268 = vmatprep.mubr.f32.mxu0 0.0
        %1269 = vmatmul.mubr.f32.gmra.mrb[0].mxu0 %v467
        %v1270 = vpop.f32.mrb[0].mxu0
        %v1271 = vadd.f32 0.0, %v1270
        %v1272 = vpop.f32.mrb[0].mxu0
        %v1273 = vadd.f32 0.0, %v1272
        %1274 = vmatprep.mubr.f32.mxu0 0.0
        %1275 = vmatmul.mubr.f32.gmra.mrb[0].mxu0 %v470
        %v1276 = vpop.f32.mrb[0].mxu0
        %v1277 = vadd.f32 0.0, %v1276
        %v1278 = vpop.f32.mrb[0].mxu0
        %v1279 = vadd.f32 0.0, %v1278
        %1280 = vmatprep.mubr.f32.mxu0 0.0
        %1281 = vmatmul.mubr.f32.gmra.mrb[0].mxu0 %v473
        %v1282 = vpop.f32.mrb[0].mxu0
        %v1283 = vadd.f32 0.0, %v1282
        %v1284 = vpop.f32.mrb[0].mxu0
        %v1285 = vadd.f32 0.0, %v1284
        %1286 = vmatprep.mubr.f32.mxu0 0.0
        %1287 = vmatmul.mubr.f32.gmra.mrb[0].mxu0 %v476
        %v1288 = vpop.f32.mrb[0].mxu0
        %v1289 = vadd.f32 0.0, %v1288
        %v1290 = vpop.f32.mrb[0].mxu0
        %v1291 = vadd.f32 0.0, %v1290
        %1292 = vmatprep.mubr.f32.mxu0 0.0
        %1293 = vmatmul.mubr.f32.gmra.mrb[0].mxu0 %v479
        %v1294 = vpop.f32.mrb[0].mxu0
        %v1295 = vadd.f32 0.0, %v1294
        %v1296 = vpop.f32.mrb[0].mxu0
        %v1297 = vadd.f32 0.0, %v1296
        %1298 = vmatprep.mubr.f32.mxu0 0.0
        %1299 = vmatmul.mubr.f32.gmra.mrb[0].mxu0 %v482
        %v1300 = vpop.f32.mrb[0].mxu0
        %v1301 = vadd.f32 0.0, %v1300
        %v1302 = vpop.f32.mrb[0].mxu0
        %v1303 = vadd.f32 0.0, %v1302
        %1304 = vmatprep.mubr.f32.mxu0 0.0
        %1305 = vmatmul.mubr.f32.gmra.mrb[0].mxu0 %v485
        %v1306 = vpop.f32.mrb[0].mxu0
        %v1307 = vadd.f32 0.0, %v1306
        %v1308 = vpop.f32.mrb[0].mxu0
        %v1309 = vadd.f32 0.0, %v1308
        %1310 = vmatprep.mubr.f32.mxu0 0.0
        %1311 = vmatmul.mubr.f32.gmra.mrb[0].mxu0 %v488
        %v1312 = vpop.f32.mrb[0].mxu0
        %v1313 = vadd.f32 0.0, %v1312
        %v1314 = vpop.f32.mrb[0].mxu0
        %v1315 = vadd.f32 0.0, %v1314
        %1316 = vmatprep.mubr.f32.mxu0 0.0
        %1317 = vmatmul.mubr.f32.gmra.mrb[0].mxu0 %v491
        %v1318 = vpop.f32.mrb[0].mxu0
        %v1319 = vadd.f32 0.0, %v1318
        %v1320 = vpop.f32.mrb[0].mxu0
        %v1321 = vadd.f32 0.0, %v1320
        %1322 = vmatprep.mubr.f32.mxu0 0.0
        %1323 = vmatmul.mubr.f32.gmra.mrb[0].mxu0 %v494
        %v1324 = vpop.f32.mrb[0].mxu0
        %v1325 = vadd.f32 0.0, %v1324
        %v1326 = vpop.f32.mrb[0].mxu0
        %v1327 = vadd.f32 0.0, %v1326
        %1328 = vmatprep.mubr.f32.mxu0 0.0
        %1329 = vmatmul.mubr.f32.gmra.mrb[0].mxu0 %v497
        %v1330 = vpop.f32.mrb[0].mxu0
        %v1331 = vadd.f32 0.0, %v1330
        %v1332 = vpop.f32.mrb[0].mxu0
        %v1333 = vadd.f32 0.0, %v1332
        %1334 = vmatprep.mubr.f32.mxu0 0.0
        %1335 = vmatmul.mubr.f32.gmra.mrb[0].mxu0 %v500
        %v1336 = vpop.f32.mrb[0].mxu0
        %v1337 = vadd.f32 0.0, %v1336
        %v1338 = vpop.f32.mrb[0].mxu0
        %v1339 = vadd.f32 0.0, %v1338
        %1340 = vmatprep.mubr.f32.mxu0 0.0
        %1341 = vmatmul.mubr.f32.gmra.mrb[0].mxu0 %v503
        %v1342 = vpop.f32.mrb[0].mxu0
        %v1343 = vadd.f32 0.0, %v1342
        %v1344 = vpop.f32.mrb[0].mxu0
        %v1345 = vadd.f32 0.0, %v1344
        %1346 = vdwg.mxu0
        %v1347 = vrot.slane %v1181, 2
        %v1348 = vrot.slane %v1183, 2
        %v1349 = vrot.slane %v1187, 2
        %v1350 = vrot.slane %v1189, 2
        %v1351 = vrot.slane %v1193, 2
        %v1352 = vrot.slane %v1195, 2
        %v1353 = vrot.slane %v1199, 2
        %v1354 = vrot.slane %v1201, 2
        %v1355 = vrot.slane %v1205, 2
        %v1356 = vrot.slane %v1207, 2
        %v1357 = vrot.slane %v1211, 2
        %v1358 = vrot.slane %v1213, 2
        %v1359 = vrot.slane %v1217, 2
        %v1360 = vrot.slane %v1219, 2
        %v1361 = vrot.slane %v1223, 2
        %v1362 = vrot.slane %v1225, 2
        %v1363 = vrot.slane %v1229, 2
        %v1364 = vrot.slane %v1231, 2
        %v1365 = vrot.slane %v1235, 2
        %v1366 = vrot.slane %v1237, 2
        %v1367 = vrot.slane %v1241, 2
        %v1368 = vrot.slane %v1243, 2
        %v1369 = vrot.slane %v1247, 2
        %v1370 = vrot.slane %v1249, 2
        %v1371 = vrot.slane %v1253, 2
        %v1372 = vrot.slane %v1255, 2
        %v1373 = vrot.slane %v1259, 2
        %v1374 = vrot.slane %v1261, 2
        %v1375 = vrot.slane %v1265, 2
        %v1376 = vrot.slane %v1267, 2
        %v1377 = vrot.slane %v1271, 2
        %v1378 = vrot.slane %v1273, 2
        %v1379 = vrot.slane %v1277, 2
        %v1380 = vrot.slane %v1279, 2
        %v1381 = vrot.slane %v1283, 2
        %v1382 = vrot.slane %v1285, 2
        %v1383 = vrot.slane %v1289, 2
        %v1384 = vrot.slane %v1291, 2
        %v1385 = vrot.slane %v1295, 2
        %v1386 = vrot.slane %v1297, 2
        %v1387 = vrot.slane %v1301, 2
        %v1388 = vrot.slane %v1303, 2
        %v1389 = vrot.slane %v1307, 2
        %v1390 = vrot.slane %v1309, 2
        %v1391 = vrot.slane %v1313, 2
        %v1392 = vrot.slane %v1315, 2
        %v1393 = vrot.slane %v1319, 2
        %v1394 = vrot.slane %v1321, 2
        %v1395 = vrot.slane %v1325, 2
        %v1396 = vrot.slane %v1327, 2
        %v1397 = vrot.slane %v1331, 2
        %v1398 = vrot.slane %v1333, 2
        %v1399 = vrot.slane %v1337, 2
        %v1400 = vrot.slane %v1339, 2
        %v1401 = vrot.slane %v1343, 2
        %v1402 = vrot.slane %v1345, 2
        %vm1403 = vcmp.lt.s32.totalorder %v802, 6
        %v1404 = vsel %vm1403, %v1399, %v1401
        %v1405 = vsel %vm1403, %v1400, %v1402
        %v1406 = vsel %vm1403, %v1397, %v1399
        %v1407 = vsel %vm1403, %v1398, %v1400
        %v1408 = vsel %vm1403, %v1395, %v1397
        %v1409 = vsel %vm1403, %v1396, %v1398
        %v1410 = vsel %vm1403, %v1393, %v1395
        %v1411 = vsel %vm1403, %v1394, %v1396
        %v1412 = vsel %vm1403, %v1391, %v1393
        %v1413 = vsel %vm1403, %v1392, %v1394
        %v1414 = vsel %vm1403, %v1389, %v1391
        %v1415 = vsel %vm1403, %v1390, %v1392
        %v1416 = vsel %vm1403, %v1387, %v1389
        %v1417 = vsel %vm1403, %v1388, %v1390
        %v1418 = vsel %vm1403, %v1385, %v1387
        %v1419 = vsel %vm1403, %v1386, %v1388
        %v1420 = vsel %vm1403, %v1383, %v1385
        %v1421 = vsel %vm1403, %v1384, %v1386
        %v1422 = vsel %vm1403, %v1381, %v1383
        %v1423 = vsel %vm1403, %v1382, %v1384
        %v1424 = vsel %vm1403, %v1379, %v1381
        %v1425 = vsel %vm1403, %v1380, %v1382
        %v1426 = vsel %vm1403, %v1377, %v1379
        %v1427 = vsel %vm1403, %v1378, %v1380
        %v1428 = vsel %vm1403, %v1375, %v1377
        %v1429 = vsel %vm1403, %v1376, %v1378
        %v1430 = vsel %vm1403, %v1373, %v1375
        %v1431 = vsel %vm1403, %v1374, %v1376
        %v1432 = vsel %vm1403, %v1371, %v1373
        %v1433 = vsel %vm1403, %v1372, %v1374
        %v1434 = vsel %vm1403, %v1369, %v1371
        %v1435 = vsel %vm1403, %v1370, %v1372
        %v1436 = vsel %vm1403, %v1367, %v1369
        %v1437 = vsel %vm1403, %v1368, %v1370
        %v1438 = vsel %vm1403, %v1365, %v1367
        %v1439 = vsel %vm1403, %v1366, %v1368
        %v1440 = vsel %vm1403, %v1363, %v1365
        %v1441 = vsel %vm1403, %v1364, %v1366
        %v1442 = vsel %vm1403, %v1361, %v1363
        %v1443 = vsel %vm1403, %v1362, %v1364
        %v1444 = vsel %vm1403, %v1359, %v1361
        %v1445 = vsel %vm1403, %v1360, %v1362
        %v1446 = vsel %vm1403, %v1357, %v1359
        %v1447 = vsel %vm1403, %v1358, %v1360
        %v1448 = vsel %vm1403, %v1355, %v1357
        %v1449 = vsel %vm1403, %v1356, %v1358
        %v1450 = vsel %vm1403, %v1353, %v1355
        %v1451 = vsel %vm1403, %v1354, %v1356
        %v1452 = vsel %vm1403, %v1351, %v1353
        %v1453 = vsel %vm1403, %v1352, %v1354
        %v1454 = vsel %vm1403, %v1349, %v1351
        %v1455 = vsel %vm1403, %v1350, %v1352
        %v1456 = vsel %vm1403, %v1347, %v1349
        %v1457 = vsel %vm1403, %v1348, %v1350
        %v1458 = vsel %vm1403, %v1401, %v1347
        %v1459 = vsel %vm1403, %v1402, %v1348
        %v1460 = vadd.f32 %v933, %v1456
        %v1461 = vadd.f32 %v935, %v1457
        %v1462 = vadd.f32 %v939, %v1454
        %v1463 = vadd.f32 %v941, %v1455
        %v1464 = vadd.f32 %v945, %v1452
        %v1465 = vadd.f32 %v947, %v1453
        %v1466 = vadd.f32 %v951, %v1450
        %v1467 = vadd.f32 %v953, %v1451
        %v1468 = vadd.f32 %v957, %v1448
        %v1469 = vadd.f32 %v959, %v1449
        %v1470 = vadd.f32 %v963, %v1446
        %v1471 = vadd.f32 %v965, %v1447
        %v1472 = vadd.f32 %v969, %v1444
        %v1473 = vadd.f32 %v971, %v1445
        %v1474 = vadd.f32 %v975, %v1442
        %v1475 = vadd.f32 %v977, %v1443
        %v1476 = vadd.f32 %v981, %v1440
        %v1477 = vadd.f32 %v983, %v1441
        %v1478 = vadd.f32 %v987, %v1438
        %v1479 = vadd.f32 %v989, %v1439
        %v1480 = vadd.f32 %v993, %v1436
        %v1481 = vadd.f32 %v995, %v1437
        %v1482 = vadd.f32 %v999, %v1434
        %v1483 = vadd.f32 %v1001, %v1435
        %v1484 = vadd.f32 %v1005, %v1432
        %v1485 = vadd.f32 %v1007, %v1433
        %v1486 = vadd.f32 %v1011, %v1430
        %v1487 = vadd.f32 %v1013, %v1431
        %v1488 = vadd.f32 %v1017, %v1428
        %v1489 = vadd.f32 %v1019, %v1429
        %v1490 = vadd.f32 %v1023, %v1426
        %v1491 = vadd.f32 %v1025, %v1427
        %v1492 = vadd.f32 %v1029, %v1424
        %v1493 = vadd.f32 %v1031, %v1425
        %v1494 = vadd.f32 %v1035, %v1422
        %v1495 = vadd.f32 %v1037, %v1423
        %v1496 = vadd.f32 %v1041, %v1420
        %v1497 = vadd.f32 %v1043, %v1421
        %v1498 = vadd.f32 %v1047, %v1418
        %v1499 = vadd.f32 %v1049, %v1419
        %v1500 = vadd.f32 %v1053, %v1416
        %v1501 = vadd.f32 %v1055, %v1417
        %v1502 = vadd.f32 %v1059, %v1414
        %v1503 = vadd.f32 %v1061, %v1415
        %v1504 = vadd.f32 %v1065, %v1412
        %v1505 = vadd.f32 %v1067, %v1413
        %v1506 = vadd.f32 %v1071, %v1410
        %v1507 = vadd.f32 %v1073, %v1411
        %v1508 = vadd.f32 %v1077, %v1408
        %v1509 = vadd.f32 %v1079, %v1409
        %v1510 = vadd.f32 %v1083, %v1406
        %v1511 = vadd.f32 %v1085, %v1407
        %v1512 = vadd.f32 %v1089, %v1404
        %v1513 = vadd.f32 %v1091, %v1405
        %v1514 = vadd.f32 %v1095, %v1458
        %v1515 = vadd.f32 %v1097, %v1459
        %s1516 = scalar_lea.vmem [#allocation2], 192
        %v1517 = vld [vmem:[%s1516] sm:$0xff]
        %v1518 = vld [vmem:[%s1516 + $0x8] sm:$0xff]
        %v1519 = vld [vmem:[%s1516 + $0x10] sm:$0xff]
        %v1520 = vld [vmem:[%s1516 + $0x18] sm:$0xff]
        %v1521 = vld [vmem:[%s1516 + $0x20] sm:$0xff]
        %v1522 = vld [vmem:[%s1516 + $0x28] sm:$0xff]
        %v1523 = vld [vmem:[%s1516 + $0x30] sm:$0xf]
        %v1524 = vld [vmem:[%s1516 + $0x38] sm:$0xf]
        %v1526 = vsel %vm505, %v1523, 0
        %v1529 = vsel %vm505, %v1524, 0
        %1531 = vmatprep.subr.mxu0 %v1518
        %1532 = vmatpush1.msra.mxu0 %v1517
        %1533 = vmatprep.subr.mxu0 %v1520
        %1534 = vmatpush1.msra.mxu0 %v1519
        %1535 = vmatprep.subr.mxu0 %v1522
        %1536 = vmatpush1.msra.mxu0 %v1521
        %1537 = vmatprep.subr.mxu0 %v1529
        %1538 = vmatpush1.msra.mxu0 %v1526
        %1539 = vmatprep.subr.mxu0 0.0
        %1540 = vmatpush1.msra.mxu0 0.0
        %1541 = vmatprep.subr.mxu0 0.0
        %1542 = vmatpush1.msra.mxu0 0.0
        %1543 = vmatprep.subr.mxu0 0.0
        %1544 = vmatpush1.msra.mxu0 0.0
        %1545 = vmatprep.subr.mxu0 0.0
        %1546 = vmatpush1.msra.mxu0 0.0
        %1547 = vmatprep.subr.mxu0 0.0
        %1548 = vmatpush1.msra.mxu0 0.0
        %1549 = vmatprep.subr.mxu0 0.0
        %1550 = vmatpush1.msra.mxu0 0.0
        %1551 = vmatprep.subr.mxu0 0.0
        %1552 = vmatpush1.msra.mxu0 0.0
        %1553 = vmatprep.subr.mxu0 0.0
        %1554 = vmatpush1.msra.mxu0 0.0
        %1555 = vmatprep.subr.mxu0 0.0
        %1556 = vmatpush1.msra.mxu0 0.0
        %1557 = vmatprep.subr.mxu0 0.0
        %1558 = vmatpush1.msra.mxu0 0.0
        %1559 = vmatprep.subr.mxu0 0.0
        %1560 = vmatpush1.msra.mxu0 0.0
        %1561 = vmatprep.subr.mxu0 0.0
        %1562 = vmatpush1.msra.mxu0 0.0
        %1563 = vmatprep.subr.mxu0 0.0
        %1564 = vmatpush1.msra.mxu0 0.0
        %1565 = vmatprep.subr.mxu0 0.0
        %1566 = vmatpush1.msra.mxu0 0.0
        %1567 = vmatprep.subr.mxu0 0.0
        %1568 = vmatpush1.msra.mxu0 0.0
        %1569 = vmatprep.subr.mxu0 0.0
        %1570 = vmatpush1.msra.mxu0 0.0
        %1571 = vmatprep.subr.mxu0 0.0
        %1572 = vmatpush1.msra.mxu0 0.0
        %1573 = vmatprep.subr.mxu0 0.0
        %1574 = vmatpush1.msra.mxu0 0.0
        %1575 = vmatprep.subr.mxu0 0.0
        %1576 = vmatpush1.msra.mxu0 0.0
        %1577 = vmatprep.subr.mxu0 0.0
        %1578 = vmatpush1.msra.mxu0 0.0
        %1579 = vmatprep.subr.mxu0 0.0
        %1580 = vmatpush1.msra.mxu0 0.0
        %1581 = vmatprep.subr.mxu0 0.0
        %1582 = vmatpush1.msra.mxu0 0.0
        %1583 = vmatprep.subr.mxu0 0.0
        %1584 = vmatpush1.msra.mxu0 0.0
        %1585 = vmatprep.subr.mxu0 0.0
        %1586 = vmatpush1.msra.mxu0 0.0
        %1587 = vmatprep.subr.mxu0 0.0
        %1588 = vmatpush1.msra.mxu0 0.0
        %1589 = vmatprep.subr.mxu0 0.0
        %1590 = vmatpush1.msra.mxu0 0.0
        %1591 = vmatprep.subr.mxu0 0.0
        %1592 = vmatpush1.msra.mxu0 0.0
        %1593 = vmatprep.subr.mxu0 0.0
        %1594 = vmatpush1.msra.mxu0 0.0
        %1595 = vmatprep.mubr.f32.mxu0 0.0
        %1596 = vmatmul.mubr.f32.gmra.mrb[0].mxu0 %v422
        %v1597 = vpop.f32.mrb[0].mxu0
        %v1598 = vadd.f32 0.0, %v1597
        %v1599 = vpop.f32.mrb[0].mxu0
        %v1600 = vadd.f32 0.0, %v1599
        %1601 = vmatprep.mubr.f32.mxu0 0.0
        %1602 = vmatmul.mubr.f32.gmra.mrb[0].mxu0 %v425
        %v1603 = vpop.f32.mrb[0].mxu0
        %v1604 = vadd.f32 0.0, %v1603
        %v1605 = vpop.f32.mrb[0].mxu0
        %v1606 = vadd.f32 0.0, %v1605
        %1607 = vmatprep.mubr.f32.mxu0 0.0
        %1608 = vmatmul.mubr.f32.gmra.mrb[0].mxu0 %v428
        %v1609 = vpop.f32.mrb[0].mxu0
        %v1610 = vadd.f32 0.0, %v1609
        %v1611 = vpop.f32.mrb[0].mxu0
        %v1612 = vadd.f32 0.0, %v1611
        %1613 = vmatprep.mubr.f32.mxu0 0.0
        %1614 = vmatmul.mubr.f32.gmra.mrb[0].mxu0 %v431
        %v1615 = vpop.f32.mrb[0].mxu0
        %v1616 = vadd.f32 0.0, %v1615
        %v1617 = vpop.f32.mrb[0].mxu0
        %v1618 = vadd.f32 0.0, %v1617
        %1619 = vmatprep.mubr.f32.mxu0 0.0
        %1620 = vmatmul.mubr.f32.gmra.mrb[0].mxu0 %v434
        %v1621 = vpop.f32.mrb[0].mxu0
        %v1622 = vadd.f32 0.0, %v1621
        %v1623 = vpop.f32.mrb[0].mxu0
        %v1624 = vadd.f32 0.0, %v1623
        %1625 = vmatprep.mubr.f32.mxu0 0.0
        %1626 = vmatmul.mubr.f32.gmra.mrb[0].mxu0 %v437
        %v1627 = vpop.f32.mrb[0].mxu0
        %v1628 = vadd.f32 0.0, %v1627
        %v1629 = vpop.f32.mrb[0].mxu0
        %v1630 = vadd.f32 0.0, %v1629
        %1631 = vmatprep.mubr.f32.mxu0 0.0
        %1632 = vmatmul.mubr.f32.gmra.mrb[0].mxu0 %v440
        %v1633 = vpop.f32.mrb[0].mxu0
        %v1634 = vadd.f32 0.0, %v1633
        %v1635 = vpop.f32.mrb[0].mxu0
        %v1636 = vadd.f32 0.0, %v1635
        %1637 = vmatprep.mubr.f32.mxu0 0.0
        %1638 = vmatmul.mubr.f32.gmra.mrb[0].mxu0 %v443
        %v1639 = vpop.f32.mrb[0].mxu0
        %v1640 = vadd.f32 0.0, %v1639
        %v1641 = vpop.f32.mrb[0].mxu0
        %v1642 = vadd.f32 0.0, %v1641
        %1643 = vmatprep.mubr.f32.mxu0 0.0
        %1644 = vmatmul.mubr.f32.gmra.mrb[0].mxu0 %v446
        %v1645 = vpop.f32.mrb[0].mxu0
        %v1646 = vadd.f32 0.0, %v1645
        %v1647 = vpop.f32.mrb[0].mxu0
        %v1648 = vadd.f32 0.0, %v1647
        %1649 = vmatprep.mubr.f32.mxu0 0.0
        %1650 = vmatmul.mubr.f32.gmra.mrb[0].mxu0 %v449
        %v1651 = vpop.f32.mrb[0].mxu0
        %v1652 = vadd.f32 0.0, %v1651
        %v1653 = vpop.f32.mrb[0].mxu0
        %v1654 = vadd.f32 0.0, %v1653
        %1655 = vmatprep.mubr.f32.mxu0 0.0
        %1656 = vmatmul.mubr.f32.gmra.mrb[0].mxu0 %v452
        %v1657 = vpop.f32.mrb[0].mxu0
        %v1658 = vadd.f32 0.0, %v1657
        %v1659 = vpop.f32.mrb[0].mxu0
        %v1660 = vadd.f32 0.0, %v1659
        %1661 = vmatprep.mubr.f32.mxu0 0.0
        %1662 = vmatmul.mubr.f32.gmra.mrb[0].mxu0 %v455
        %v1663 = vpop.f32.mrb[0].mxu0
        %v1664 = vadd.f32 0.0, %v1663
        %v1665 = vpop.f32.mrb[0].mxu0
        %v1666 = vadd.f32 0.0, %v1665
        %1667 = vmatprep.mubr.f32.mxu0 0.0
        %1668 = vmatmul.mubr.f32.gmra.mrb[0].mxu0 %v458
        %v1669 = vpop.f32.mrb[0].mxu0
        %v1670 = vadd.f32 0.0, %v1669
        %v1671 = vpop.f32.mrb[0].mxu0
        %v1672 = vadd.f32 0.0, %v1671
        %1673 = vmatprep.mubr.f32.mxu0 0.0
        %1674 = vmatmul.mubr.f32.gmra.mrb[0].mxu0 %v461
        %v1675 = vpop.f32.mrb[0].mxu0
        %v1676 = vadd.f32 0.0, %v1675
        %v1677 = vpop.f32.mrb[0].mxu0
        %v1678 = vadd.f32 0.0, %v1677
        %1679 = vmatprep.mubr.f32.mxu0 0.0
        %1680 = vmatmul.mubr.f32.gmra.mrb[0].mxu0 %v464
        %v1681 = vpop.f32.mrb[0].mxu0
        %v1682 = vadd.f32 0.0, %v1681
        %v1683 = vpop.f32.mrb[0].mxu0
        %v1684 = vadd.f32 0.0, %v1683
        %1685 = vmatprep.mubr.f32.mxu0 0.0
        %1686 = vmatmul.mubr.f32.gmra.mrb[0].mxu0 %v467
        %v1687 = vpop.f32.mrb[0].mxu0
        %v1688 = vadd.f32 0.0, %v1687
        %v1689 = vpop.f32.mrb[0].mxu0
        %v1690 = vadd.f32 0.0, %v1689
        %1691 = vmatprep.mubr.f32.mxu0 0.0
        %1692 = vmatmul.mubr.f32.gmra.mrb[0].mxu0 %v470
        %v1693 = vpop.f32.mrb[0].mxu0
        %v1694 = vadd.f32 0.0, %v1693
        %v1695 = vpop.f32.mrb[0].mxu0
        %v1696 = vadd.f32 0.0, %v1695
        %1697 = vmatprep.mubr.f32.mxu0 0.0
        %1698 = vmatmul.mubr.f32.gmra.mrb[0].mxu0 %v473
        %v1699 = vpop.f32.mrb[0].mxu0
        %v1700 = vadd.f32 0.0, %v1699
        %v1701 = vpop.f32.mrb[0].mxu0
        %v1702 = vadd.f32 0.0, %v1701
        %1703 = vmatprep.mubr.f32.mxu0 0.0
        %1704 = vmatmul.mubr.f32.gmra.mrb[0].mxu0 %v476
        %v1705 = vpop.f32.mrb[0].mxu0
        %v1706 = vadd.f32 0.0, %v1705
        %v1707 = vpop.f32.mrb[0].mxu0
        %v1708 = vadd.f32 0.0, %v1707
        %1709 = vmatprep.mubr.f32.mxu0 0.0
        %1710 = vmatmul.mubr.f32.gmra.mrb[0].mxu0 %v479
        %v1711 = vpop.f32.mrb[0].mxu0
        %v1712 = vadd.f32 0.0, %v1711
        %v1713 = vpop.f32.mrb[0].mxu0
        %v1714 = vadd.f32 0.0, %v1713
        %1715 = vmatprep.mubr.f32.mxu0 0.0
        %1716 = vmatmul.mubr.f32.gmra.mrb[0].mxu0 %v482
        %v1717 = vpop.f32.mrb[0].mxu0
        %v1718 = vadd.f32 0.0, %v1717
        %v1719 = vpop.f32.mrb[0].mxu0
        %v1720 = vadd.f32 0.0, %v1719
        %1721 = vmatprep.mubr.f32.mxu0 0.0
        %1722 = vmatmul.mubr.f32.gmra.mrb[0].mxu0 %v485
        %v1723 = vpop.f32.mrb[0].mxu0
        %v1724 = vadd.f32 0.0, %v1723
        %v1725 = vpop.f32.mrb[0].mxu0
        %v1726 = vadd.f32 0.0, %v1725
        %1727 = vmatprep.mubr.f32.mxu0 0.0
        %1728 = vmatmul.mubr.f32.gmra.mrb[0].mxu0 %v488
        %v1729 = vpop.f32.mrb[0].mxu0
        %v1730 = vadd.f32 0.0, %v1729
        %v1731 = vpop.f32.mrb[0].mxu0
        %v1732 = vadd.f32 0.0, %v1731
        %1733 = vmatprep.mubr.f32.mxu0 0.0
        %1734 = vmatmul.mubr.f32.gmra.mrb[0].mxu0 %v491
        %v1735 = vpop.f32.mrb[0].mxu0
        %v1736 = vadd.f32 0.0, %v1735
        %v1737 = vpop.f32.mrb[0].mxu0
        %v1738 = vadd.f32 0.0, %v1737
        %1739 = vmatprep.mubr.f32.mxu0 0.0
        %1740 = vmatmul.mubr.f32.gmra.mrb[0].mxu0 %v494
        %v1741 = vpop.f32.mrb[0].mxu0
        %v1742 = vadd.f32 0.0, %v1741
        %v1743 = vpop.f32.mrb[0].mxu0
        %v1744 = vadd.f32 0.0, %v1743
        %1745 = vmatprep.mubr.f32.mxu0 0.0
        %1746 = vmatmul.mubr.f32.gmra.mrb[0].mxu0 %v497
        %v1747 = vpop.f32.mrb[0].mxu0
        %v1748 = vadd.f32 0.0, %v1747
        %v1749 = vpop.f32.mrb[0].mxu0
        %v1750 = vadd.f32 0.0, %v1749
        %1751 = vmatprep.mubr.f32.mxu0 0.0
        %1752 = vmatmul.mubr.f32.gmra.mrb[0].mxu0 %v500
        %v1753 = vpop.f32.mrb[0].mxu0
        %v1754 = vadd.f32 0.0, %v1753
        %v1755 = vpop.f32.mrb[0].mxu0
        %v1756 = vadd.f32 0.0, %v1755
        %1757 = vmatprep.mubr.f32.mxu0 0.0
        %1758 = vmatmul.mubr.f32.gmra.mrb[0].mxu0 %v503
        %v1759 = vpop.f32.mrb[0].mxu0
        %v1760 = vadd.f32 0.0, %v1759
        %v1761 = vpop.f32.mrb[0].mxu0
        %v1762 = vadd.f32 0.0, %v1761
        %1763 = vdwg.mxu0
        %v1764 = vrot.slane %v1598, 3
        %v1765 = vrot.slane %v1600, 3
        %v1766 = vrot.slane %v1604, 3
        %v1767 = vrot.slane %v1606, 3
        %v1768 = vrot.slane %v1610, 3
        %v1769 = vrot.slane %v1612, 3
        %v1770 = vrot.slane %v1616, 3
        %v1771 = vrot.slane %v1618, 3
        %v1772 = vrot.slane %v1622, 3
        %v1773 = vrot.slane %v1624, 3
        %v1774 = vrot.slane %v1628, 3
        %v1775 = vrot.slane %v1630, 3
        %v1776 = vrot.slane %v1634, 3
        %v1777 = vrot.slane %v1636, 3
        %v1778 = vrot.slane %v1640, 3
        %v1779 = vrot.slane %v1642, 3
        %v1780 = vrot.slane %v1646, 3
        %v1781 = vrot.slane %v1648, 3
        %v1782 = vrot.slane %v1652, 3
        %v1783 = vrot.slane %v1654, 3
        %v1784 = vrot.slane %v1658, 3
        %v1785 = vrot.slane %v1660, 3
        %v1786 = vrot.slane %v1664, 3
        %v1787 = vrot.slane %v1666, 3
        %v1788 = vrot.slane %v1670, 3
        %v1789 = vrot.slane %v1672, 3
        %v1790 = vrot.slane %v1676, 3
        %v1791 = vrot.slane %v1678, 3
        %v1792 = vrot.slane %v1682, 3
        %v1793 = vrot.slane %v1684, 3
        %v1794 = vrot.slane %v1688, 3
        %v1795 = vrot.slane %v1690, 3
        %v1796 = vrot.slane %v1694, 3
        %v1797 = vrot.slane %v1696, 3
        %v1798 = vrot.slane %v1700, 3
        %v1799 = vrot.slane %v1702, 3
        %v1800 = vrot.slane %v1706, 3
        %v1801 = vrot.slane %v1708, 3
        %v1802 = vrot.slane %v1712, 3
        %v1803 = vrot.slane %v1714, 3
        %v1804 = vrot.slane %v1718, 3
        %v1805 = vrot.slane %v1720, 3
        %v1806 = vrot.slane %v1724, 3
        %v1807 = vrot.slane %v1726, 3
        %v1808 = vrot.slane %v1730, 3
        %v1809 = vrot.slane %v1732, 3
        %v1810 = vrot.slane %v1736, 3
        %v1811 = vrot.slane %v1738, 3
        %v1812 = vrot.slane %v1742, 3
        %v1813 = vrot.slane %v1744, 3
        %v1814 = vrot.slane %v1748, 3
        %v1815 = vrot.slane %v1750, 3
        %v1816 = vrot.slane %v1754, 3
        %v1817 = vrot.slane %v1756, 3
        %v1818 = vrot.slane %v1760, 3
        %v1819 = vrot.slane %v1762, 3
        %vm1820 = vcmp.lt.s32.totalorder %v802, 5
        %v1821 = vsel %vm1820, %v1816, %v1818
        %v1822 = vsel %vm1820, %v1817, %v1819
        %v1823 = vsel %vm1820, %v1814, %v1816
        %v1824 = vsel %vm1820, %v1815, %v1817
        %v1825 = vsel %vm1820, %v1812, %v1814
        %v1826 = vsel %vm1820, %v1813, %v1815
        %v1827 = vsel %vm1820, %v1810, %v1812
        %v1828 = vsel %vm1820, %v1811, %v1813
        %v1829 = vsel %vm1820, %v1808, %v1810
        %v1830 = vsel %vm1820, %v1809, %v1811
        %v1831 = vsel %vm1820, %v1806, %v1808
        %v1832 = vsel %vm1820, %v1807, %v1809
        %v1833 = vsel %vm1820, %v1804, %v1806
        %v1834 = vsel %vm1820, %v1805, %v1807
        %v1835 = vsel %vm1820, %v1802, %v1804
        %v1836 = vsel %vm1820, %v1803, %v1805
        %v1837 = vsel %vm1820, %v1800, %v1802
        %v1838 = vsel %vm1820, %v1801, %v1803
        %v1839 = vsel %vm1820, %v1798, %v1800
        %v1840 = vsel %vm1820, %v1799, %v1801
        %v1841 = vsel %vm1820, %v1796, %v1798
        %v1842 = vsel %vm1820, %v1797, %v1799
        %v1843 = vsel %vm1820, %v1794, %v1796
        %v1844 = vsel %vm1820, %v1795, %v1797
        %v1845 = vsel %vm1820, %v1792, %v1794
        %v1846 = vsel %vm1820, %v1793, %v1795
        %v1847 = vsel %vm1820, %v1790, %v1792
        %v1848 = vsel %vm1820, %v1791, %v1793
        %v1849 = vsel %vm1820, %v1788, %v1790
        %v1850 = vsel %vm1820, %v1789, %v1791
        %v1851 = vsel %vm1820, %v1786, %v1788
        %v1852 = vsel %vm1820, %v1787, %v1789
        %v1853 = vsel %vm1820, %v1784, %v1786
        %v1854 = vsel %vm1820, %v1785, %v1787
        %v1855 = vsel %vm1820, %v1782, %v1784
        %v1856 = vsel %vm1820, %v1783, %v1785
        %v1857 = vsel %vm1820, %v1780, %v1782
        %v1858 = vsel %vm1820, %v1781, %v1783
        %v1859 = vsel %vm1820, %v1778, %v1780
        %v1860 = vsel %vm1820, %v1779, %v1781
        %v1861 = vsel %vm1820, %v1776, %v1778
        %v1862 = vsel %vm1820, %v1777, %v1779
        %v1863 = vsel %vm1820, %v1774, %v1776
        %v1864 = vsel %vm1820, %v1775, %v1777
        %v1865 = vsel %vm1820, %v1772, %v1774
        %v1866 = vsel %vm1820, %v1773, %v1775
        %v1867 = vsel %vm1820, %v1770, %v1772
        %v1868 = vsel %vm1820, %v1771, %v1773
        %v1869 = vsel %vm1820, %v1768, %v1770
        %v1870 = vsel %vm1820, %v1769, %v1771
        %v1871 = vsel %vm1820, %v1766, %v1768
        %v1872 = vsel %vm1820, %v1767, %v1769
        %v1873 = vsel %vm1820, %v1764, %v1766
        %v1874 = vsel %vm1820, %v1765, %v1767
        %v1875 = vsel %vm1820, %v1818, %v1764
        %v1876 = vsel %vm1820, %v1819, %v1765
        %v1877 = vadd.f32 %v1460, %v1873
        %v1878 = vadd.f32 %v1461, %v1874
        %v1879 = vadd.f32 %v1462, %v1871
        %v1880 = vadd.f32 %v1463, %v1872
        %v1881 = vadd.f32 %v1464, %v1869
        %v1882 = vadd.f32 %v1465, %v1870
        %v1883 = vadd.f32 %v1466, %v1867
        %v1884 = vadd.f32 %v1467, %v1868
        %v1885 = vadd.f32 %v1468, %v1865
        %v1886 = vadd.f32 %v1469, %v1866
        %v1887 = vadd.f32 %v1470, %v1863
        %v1888 = vadd.f32 %v1471, %v1864
        %v1889 = vadd.f32 %v1472, %v1861
        %v1890 = vadd.f32 %v1473, %v1862
        %v1891 = vadd.f32 %v1474, %v1859
        %v1892 = vadd.f32 %v1475, %v1860
        %v1893 = vadd.f32 %v1476, %v1857
        %v1894 = vadd.f32 %v1477, %v1858
        %v1895 = vadd.f32 %v1478, %v1855
        %v1896 = vadd.f32 %v1479, %v1856
        %v1897 = vadd.f32 %v1480, %v1853
        %v1898 = vadd.f32 %v1481, %v1854
        %v1899 = vadd.f32 %v1482, %v1851
        %v1900 = vadd.f32 %v1483, %v1852
        %v1901 = vadd.f32 %v1484, %v1849
        %v1902 = vadd.f32 %v1485, %v1850
        %v1903 = vadd.f32 %v1486, %v1847
        %v1904 = vadd.f32 %v1487, %v1848
        %v1905 = vadd.f32 %v1488, %v1845
        %v1906 = vadd.f32 %v1489, %v1846
        %v1907 = vadd.f32 %v1490, %v1843
        %v1908 = vadd.f32 %v1491, %v1844
        %v1909 = vadd.f32 %v1492, %v1841
        %v1910 = vadd.f32 %v1493, %v1842
        %v1911 = vadd.f32 %v1494, %v1839
        %v1912 = vadd.f32 %v1495, %v1840
        %v1913 = vadd.f32 %v1496, %v1837
        %v1914 = vadd.f32 %v1497, %v1838
        %v1915 = vadd.f32 %v1498, %v1835
        %v1916 = vadd.f32 %v1499, %v1836
        %v1917 = vadd.f32 %v1500, %v1833
        %v1918 = vadd.f32 %v1501, %v1834
        %v1919 = vadd.f32 %v1502, %v1831
        %v1920 = vadd.f32 %v1503, %v1832
        %v1921 = vadd.f32 %v1504, %v1829
        %v1922 = vadd.f32 %v1505, %v1830
        %v1923 = vadd.f32 %v1506, %v1827
        %v1924 = vadd.f32 %v1507, %v1828
        %v1925 = vadd.f32 %v1508, %v1825
        %v1926 = vadd.f32 %v1509, %v1826
        %v1927 = vadd.f32 %v1510, %v1823
        %v1928 = vadd.f32 %v1511, %v1824
        %v1929 = vadd.f32 %v1512, %v1821
        %v1930 = vadd.f32 %v1513, %v1822
        %v1931 = vadd.f32 %v1514, %v1875
        %v1932 = vadd.f32 %v1515, %v1876
        %s1933 = scalar_lea.vmem [#allocation2], 256
        %v1934 = vld [vmem:[%s1933] sm:$0xff]
        %v1935 = vld [vmem:[%s1933 + $0x8] sm:$0xff]
        %v1936 = vld [vmem:[%s1933 + $0x10] sm:$0xff]
        %v1937 = vld [vmem:[%s1933 + $0x18] sm:$0xff]
        %v1938 = vld [vmem:[%s1933 + $0x20] sm:$0xff]
        %v1939 = vld [vmem:[%s1933 + $0x28] sm:$0xff]
        %v1940 = vld [vmem:[%s1933 + $0x30] sm:$0xf]
        %v1941 = vld [vmem:[%s1933 + $0x38] sm:$0xf]
        %v1943 = vsel %vm505, %v1940, 0
        %v1946 = vsel %vm505, %v1941, 0
        %1948 = vmatprep.subr.mxu0 %v1935
        %1949 = vmatpush1.msra.mxu0 %v1934
        %1950 = vmatprep.subr.mxu0 %v1937
        %1951 = vmatpush1.msra.mxu0 %v1936
        %1952 = vmatprep.subr.mxu0 %v1939
        %1953 = vmatpush1.msra.mxu0 %v1938
        %1954 = vmatprep.subr.mxu0 %v1946
        %1955 = vmatpush1.msra.mxu0 %v1943
        %1956 = vmatprep.subr.mxu0 0.0
        %1957 = vmatpush1.msra.mxu0 0.0
        %1958 = vmatprep.subr.mxu0 0.0
        %1959 = vmatpush1.msra.mxu0 0.0
        %1960 = vmatprep.subr.mxu0 0.0
        %1961 = vmatpush1.msra.mxu0 0.0
        %1962 = vmatprep.subr.mxu0 0.0
        %1963 = vmatpush1.msra.mxu0 0.0
        %1964 = vmatprep.subr.mxu0 0.0
        %1965 = vmatpush1.msra.mxu0 0.0
        %1966 = vmatprep.subr.mxu0 0.0
        %1967 = vmatpush1.msra.mxu0 0.0
        %1968 = vmatprep.subr.mxu0 0.0
        %1969 = vmatpush1.msra.mxu0 0.0
        %1970 = vmatprep.subr.mxu0 0.0
        %1971 = vmatpush1.msra.mxu0 0.0
        %1972 = vmatprep.subr.mxu0 0.0
        %1973 = vmatpush1.msra.mxu0 0.0
        %1974 = vmatprep.subr.mxu0 0.0
        %1975 = vmatpush1.msra.mxu0 0.0
        %1976 = vmatprep.subr.mxu0 0.0
        %1977 = vmatpush1.msra.mxu0 0.0
        %1978 = vmatprep.subr.mxu0 0.0
        %1979 = vmatpush1.msra.mxu0 0.0
        %1980 = vmatprep.subr.mxu0 0.0
        %1981 = vmatpush1.msra.mxu0 0.0
        %1982 = vmatprep.subr.mxu0 0.0
        %1983 = vmatpush1.msra.mxu0 0.0
        %1984 = vmatprep.subr.mxu0 0.0
        %1985 = vmatpush1.msra.mxu0 0.0
        %1986 = vmatprep.subr.mxu0 0.0
        %1987 = vmatpush1.msra.mxu0 0.0
        %1988 = vmatprep.subr.mxu0 0.0
        %1989 = vmatpush1.msra.mxu0 0.0
        %1990 = vmatprep.subr.mxu0 0.0
        %1991 = vmatpush1.msra.mxu0 0.0
        %1992 = vmatprep.subr.mxu0 0.0
        %1993 = vmatpush1.msra.mxu0 0.0
        %1994 = vmatprep.subr.mxu0 0.0
        %1995 = vmatpush1.msra.mxu0 0.0
        %1996 = vmatprep.subr.mxu0 0.0
        %1997 = vmatpush1.msra.mxu0 0.0
        %1998 = vmatprep.subr.mxu0 0.0
        %1999 = vmatpush1.msra.mxu0 0.0
        %2000 = vmatprep.subr.mxu0 0.0
        %2001 = vmatpush1.msra.mxu0 0.0
        %2002 = vmatprep.subr.mxu0 0.0
        %2003 = vmatpush1.msra.mxu0 0.0
        %2004 = vmatprep.subr.mxu0 0.0
        %2005 = vmatpush1.msra.mxu0 0.0
        %2006 = vmatprep.subr.mxu0 0.0
        %2007 = vmatpush1.msra.mxu0 0.0
        %2008 = vmatprep.subr.mxu0 0.0
        %2009 = vmatpush1.msra.mxu0 0.0
        %2010 = vmatprep.subr.mxu0 0.0
        %2011 = vmatpush1.msra.mxu0 0.0
        %2012 = vmatprep.mubr.f32.mxu0 0.0
        %2013 = vmatmul.mubr.f32.gmra.mrb[0].mxu0 %v422
        %v2014 = vpop.f32.mrb[0].mxu0
        %v2015 = vadd.f32 0.0, %v2014
        %v2016 = vpop.f32.mrb[0].mxu0
        %v2017 = vadd.f32 0.0, %v2016
        %2018 = vmatprep.mubr.f32.mxu0 0.0
        %2019 = vmatmul.mubr.f32.gmra.mrb[0].mxu0 %v425
        %v2020 = vpop.f32.mrb[0].mxu0
        %v2021 = vadd.f32 0.0, %v2020
        %v2022 = vpop.f32.mrb[0].mxu0
        %v2023 = vadd.f32 0.0, %v2022
        %2024 = vmatprep.mubr.f32.mxu0 0.0
        %2025 = vmatmul.mubr.f32.gmra.mrb[0].mxu0 %v428
        %v2026 = vpop.f32.mrb[0].mxu0
        %v2027 = vadd.f32 0.0, %v2026
        %v2028 = vpop.f32.mrb[0].mxu0
        %v2029 = vadd.f32 0.0, %v2028
        %2030 = vmatprep.mubr.f32.mxu0 0.0
        %2031 = vmatmul.mubr.f32.gmra.mrb[0].mxu0 %v431
        %v2032 = vpop.f32.mrb[0].mxu0
        %v2033 = vadd.f32 0.0, %v2032
        %v2034 = vpop.f32.mrb[0].mxu0
        %v2035 = vadd.f32 0.0, %v2034
        %2036 = vmatprep.mubr.f32.mxu0 0.0
        %2037 = vmatmul.mubr.f32.gmra.mrb[0].mxu0 %v434
        %v2038 = vpop.f32.mrb[0].mxu0
        %v2039 = vadd.f32 0.0, %v2038
        %v2040 = vpop.f32.mrb[0].mxu0
        %v2041 = vadd.f32 0.0, %v2040
        %2042 = vmatprep.mubr.f32.mxu0 0.0
        %2043 = vmatmul.mubr.f32.gmra.mrb[0].mxu0 %v437
        %v2044 = vpop.f32.mrb[0].mxu0
        %v2045 = vadd.f32 0.0, %v2044
        %v2046 = vpop.f32.mrb[0].mxu0
        %v2047 = vadd.f32 0.0, %v2046
        %2048 = vmatprep.mubr.f32.mxu0 0.0
        %2049 = vmatmul.mubr.f32.gmra.mrb[0].mxu0 %v440
        %v2050 = vpop.f32.mrb[0].mxu0
        %v2051 = vadd.f32 0.0, %v2050
        %v2052 = vpop.f32.mrb[0].mxu0
        %v2053 = vadd.f32 0.0, %v2052
        %2054 = vmatprep.mubr.f32.mxu0 0.0
        %2055 = vmatmul.mubr.f32.gmra.mrb[0].mxu0 %v443
        %v2056 = vpop.f32.mrb[0].mxu0
        %v2057 = vadd.f32 0.0, %v2056
        %v2058 = vpop.f32.mrb[0].mxu0
        %v2059 = vadd.f32 0.0, %v2058
        %2060 = vmatprep.mubr.f32.mxu0 0.0
        %2061 = vmatmul.mubr.f32.gmra.mrb[0].mxu0 %v446
        %v2062 = vpop.f32.mrb[0].mxu0
        %v2063 = vadd.f32 0.0, %v2062
        %v2064 = vpop.f32.mrb[0].mxu0
        %v2065 = vadd.f32 0.0, %v2064
        %2066 = vmatprep.mubr.f32.mxu0 0.0
        %2067 = vmatmul.mubr.f32.gmra.mrb[0].mxu0 %v449
        %v2068 = vpop.f32.mrb[0].mxu0
        %v2069 = vadd.f32 0.0, %v2068
        %v2070 = vpop.f32.mrb[0].mxu0
        %v2071 = vadd.f32 0.0, %v2070
        %2072 = vmatprep.mubr.f32.mxu0 0.0
        %2073 = vmatmul.mubr.f32.gmra.mrb[0].mxu0 %v452
        %v2074 = vpop.f32.mrb[0].mxu0
        %v2075 = vadd.f32 0.0, %v2074
        %v2076 = vpop.f32.mrb[0].mxu0
        %v2077 = vadd.f32 0.0, %v2076
        %2078 = vmatprep.mubr.f32.mxu0 0.0
        %2079 = vmatmul.mubr.f32.gmra.mrb[0].mxu0 %v455
        %v2080 = vpop.f32.mrb[0].mxu0
        %v2081 = vadd.f32 0.0, %v2080
        %v2082 = vpop.f32.mrb[0].mxu0
        %v2083 = vadd.f32 0.0, %v2082
        %2084 = vmatprep.mubr.f32.mxu0 0.0
        %2085 = vmatmul.mubr.f32.gmra.mrb[0].mxu0 %v458
        %v2086 = vpop.f32.mrb[0].mxu0
        %v2087 = vadd.f32 0.0, %v2086
        %v2088 = vpop.f32.mrb[0].mxu0
        %v2089 = vadd.f32 0.0, %v2088
        %2090 = vmatprep.mubr.f32.mxu0 0.0
        %2091 = vmatmul.mubr.f32.gmra.mrb[0].mxu0 %v461
        %v2092 = vpop.f32.mrb[0].mxu0
        %v2093 = vadd.f32 0.0, %v2092
        %v2094 = vpop.f32.mrb[0].mxu0
        %v2095 = vadd.f32 0.0, %v2094
        %2096 = vmatprep.mubr.f32.mxu0 0.0
        %2097 = vmatmul.mubr.f32.gmra.mrb[0].mxu0 %v464
        %v2098 = vpop.f32.mrb[0].mxu0
        %v2099 = vadd.f32 0.0, %v2098
        %v2100 = vpop.f32.mrb[0].mxu0
        %v2101 = vadd.f32 0.0, %v2100
        %2102 = vmatprep.mubr.f32.mxu0 0.0
        %2103 = vmatmul.mubr.f32.gmra.mrb[0].mxu0 %v467
        %v2104 = vpop.f32.mrb[0].mxu0
        %v2105 = vadd.f32 0.0, %v2104
        %v2106 = vpop.f32.mrb[0].mxu0
        %v2107 = vadd.f32 0.0, %v2106
        %2108 = vmatprep.mubr.f32.mxu0 0.0
        %2109 = vmatmul.mubr.f32.gmra.mrb[0].mxu0 %v470
        %v2110 = vpop.f32.mrb[0].mxu0
        %v2111 = vadd.f32 0.0, %v2110
        %v2112 = vpop.f32.mrb[0].mxu0
        %v2113 = vadd.f32 0.0, %v2112
        %2114 = vmatprep.mubr.f32.mxu0 0.0
        %2115 = vmatmul.mubr.f32.gmra.mrb[0].mxu0 %v473
        %v2116 = vpop.f32.mrb[0].mxu0
        %v2117 = vadd.f32 0.0, %v2116
        %v2118 = vpop.f32.mrb[0].mxu0
        %v2119 = vadd.f32 0.0, %v2118
        %2120 = vmatprep.mubr.f32.mxu0 0.0
        %2121 = vmatmul.mubr.f32.gmra.mrb[0].mxu0 %v476
        %v2122 = vpop.f32.mrb[0].mxu0
        %v2123 = vadd.f32 0.0, %v2122
        %v2124 = vpop.f32.mrb[0].mxu0
        %v2125 = vadd.f32 0.0, %v2124
        %2126 = vmatprep.mubr.f32.mxu0 0.0
        %2127 = vmatmul.mubr.f32.gmra.mrb[0].mxu0 %v479
        %v2128 = vpop.f32.mrb[0].mxu0
        %v2129 = vadd.f32 0.0, %v2128
        %v2130 = vpop.f32.mrb[0].mxu0
        %v2131 = vadd.f32 0.0, %v2130
        %2132 = vmatprep.mubr.f32.mxu0 0.0
        %2133 = vmatmul.mubr.f32.gmra.mrb[0].mxu0 %v482
        %v2134 = vpop.f32.mrb[0].mxu0
        %v2135 = vadd.f32 0.0, %v2134
        %v2136 = vpop.f32.mrb[0].mxu0
        %v2137 = vadd.f32 0.0, %v2136
        %2138 = vmatprep.mubr.f32.mxu0 0.0
        %2139 = vmatmul.mubr.f32.gmra.mrb[0].mxu0 %v485
        %v2140 = vpop.f32.mrb[0].mxu0
        %v2141 = vadd.f32 0.0, %v2140
        %v2142 = vpop.f32.mrb[0].mxu0
        %v2143 = vadd.f32 0.0, %v2142
        %2144 = vmatprep.mubr.f32.mxu0 0.0
        %2145 = vmatmul.mubr.f32.gmra.mrb[0].mxu0 %v488
        %v2146 = vpop.f32.mrb[0].mxu0
        %v2147 = vadd.f32 0.0, %v2146
        %v2148 = vpop.f32.mrb[0].mxu0
        %v2149 = vadd.f32 0.0, %v2148
        %2150 = vmatprep.mubr.f32.mxu0 0.0
        %2151 = vmatmul.mubr.f32.gmra.mrb[0].mxu0 %v491
        %v2152 = vpop.f32.mrb[0].mxu0
        %v2153 = vadd.f32 0.0, %v2152
        %v2154 = vpop.f32.mrb[0].mxu0
        %v2155 = vadd.f32 0.0, %v2154
        %2156 = vmatprep.mubr.f32.mxu0 0.0
        %2157 = vmatmul.mubr.f32.gmra.mrb[0].mxu0 %v494
        %v2158 = vpop.f32.mrb[0].mxu0
        %v2159 = vadd.f32 0.0, %v2158
        %v2160 = vpop.f32.mrb[0].mxu0
        %v2161 = vadd.f32 0.0, %v2160
        %2162 = vmatprep.mubr.f32.mxu0 0.0
        %2163 = vmatmul.mubr.f32.gmra.mrb[0].mxu0 %v497
        %v2164 = vpop.f32.mrb[0].mxu0
        %v2165 = vadd.f32 0.0, %v2164
        %v2166 = vpop.f32.mrb[0].mxu0
        %v2167 = vadd.f32 0.0, %v2166
        %2168 = vmatprep.mubr.f32.mxu0 0.0
        %2169 = vmatmul.mubr.f32.gmra.mrb[0].mxu0 %v500
        %v2170 = vpop.f32.mrb[0].mxu0
        %v2171 = vadd.f32 0.0, %v2170
        %v2172 = vpop.f32.mrb[0].mxu0
        %v2173 = vadd.f32 0.0, %v2172
        %2174 = vmatprep.mubr.f32.mxu0 0.0
        %2175 = vmatmul.mubr.f32.gmra.mrb[0].mxu0 %v503
        %v2176 = vpop.f32.mrb[0].mxu0
        %v2177 = vadd.f32 0.0, %v2176
        %v2178 = vpop.f32.mrb[0].mxu0
        %v2179 = vadd.f32 0.0, %v2178
        %2180 = vdwg.mxu0
        %v2181 = vrot.slane %v2015, 4
        %v2182 = vrot.slane %v2017, 4
        %v2183 = vrot.slane %v2021, 4
        %v2184 = vrot.slane %v2023, 4
        %v2185 = vrot.slane %v2027, 4
        %v2186 = vrot.slane %v2029, 4
        %v2187 = vrot.slane %v2033, 4
        %v2188 = vrot.slane %v2035, 4
        %v2189 = vrot.slane %v2039, 4
        %v2190 = vrot.slane %v2041, 4
        %v2191 = vrot.slane %v2045, 4
        %v2192 = vrot.slane %v2047, 4
        %v2193 = vrot.slane %v2051, 4
        %v2194 = vrot.slane %v2053, 4
        %v2195 = vrot.slane %v2057, 4
        %v2196 = vrot.slane %v2059, 4
        %v2197 = vrot.slane %v2063, 4
        %v2198 = vrot.slane %v2065, 4
        %v2199 = vrot.slane %v2069, 4
        %v2200 = vrot.slane %v2071, 4
        %v2201 = vrot.slane %v2075, 4
        %v2202 = vrot.slane %v2077, 4
        %v2203 = vrot.slane %v2081, 4
        %v2204 = vrot.slane %v2083, 4
        %v2205 = vrot.slane %v2087, 4
        %v2206 = vrot.slane %v2089, 4
        %v2207 = vrot.slane %v2093, 4
        %v2208 = vrot.slane %v2095, 4
        %v2209 = vrot.slane %v2099, 4
        %v2210 = vrot.slane %v2101, 4
        %v2211 = vrot.slane %v2105, 4
        %v2212 = vrot.slane %v2107, 4
        %v2213 = vrot.slane %v2111, 4
        %v2214 = vrot.slane %v2113, 4
        %v2215 = vrot.slane %v2117, 4
        %v2216 = vrot.slane %v2119, 4
        %v2217 = vrot.slane %v2123, 4
        %v2218 = vrot.slane %v2125, 4
        %v2219 = vrot.slane %v2129, 4
        %v2220 = vrot.slane %v2131, 4
        %v2221 = vrot.slane %v2135, 4
        %v2222 = vrot.slane %v2137, 4
        %v2223 = vrot.slane %v2141, 4
        %v2224 = vrot.slane %v2143, 4
        %v2225 = vrot.slane %v2147, 4
        %v2226 = vrot.slane %v2149, 4
        %v2227 = vrot.slane %v2153, 4
        %v2228 = vrot.slane %v2155, 4
        %v2229 = vrot.slane %v2159, 4
        %v2230 = vrot.slane %v2161, 4
        %v2231 = vrot.slane %v2165, 4
        %v2232 = vrot.slane %v2167, 4
        %v2233 = vrot.slane %v2171, 4
        %v2234 = vrot.slane %v2173, 4
        %v2235 = vrot.slane %v2177, 4
        %v2236 = vrot.slane %v2179, 4
        %vm2237 = vcmp.lt.s32.totalorder %v802, 4
        %v2238 = vsel %vm2237, %v2233, %v2235
        %v2239 = vsel %vm2237, %v2234, %v2236
        %v2240 = vsel %vm2237, %v2231, %v2233
        %v2241 = vsel %vm2237, %v2232, %v2234
        %v2242 = vsel %vm2237, %v2229, %v2231
        %v2243 = vsel %vm2237, %v2230, %v2232
        %v2244 = vsel %vm2237, %v2227, %v2229
        %v2245 = vsel %vm2237, %v2228, %v2230
        %v2246 = vsel %vm2237, %v2225, %v2227
        %v2247 = vsel %vm2237, %v2226, %v2228
        %v2248 = vsel %vm2237, %v2223, %v2225
        %v2249 = vsel %vm2237, %v2224, %v2226
        %v2250 = vsel %vm2237, %v2221, %v2223
        %v2251 = vsel %vm2237, %v2222, %v2224
        %v2252 = vsel %vm2237, %v2219, %v2221
        %v2253 = vsel %vm2237, %v2220, %v2222
        %v2254 = vsel %vm2237, %v2217, %v2219
        %v2255 = vsel %vm2237, %v2218, %v2220
        %v2256 = vsel %vm2237, %v2215, %v2217
        %v2257 = vsel %vm2237, %v2216, %v2218
        %v2258 = vsel %vm2237, %v2213, %v2215
        %v2259 = vsel %vm2237, %v2214, %v2216
        %v2260 = vsel %vm2237, %v2211, %v2213
        %v2261 = vsel %vm2237, %v2212, %v2214
        %v2262 = vsel %vm2237, %v2209, %v2211
        %v2263 = vsel %vm2237, %v2210, %v2212
        %v2264 = vsel %vm2237, %v2207, %v2209
        %v2265 = vsel %vm2237, %v2208, %v2210
        %v2266 = vsel %vm2237, %v2205, %v2207
        %v2267 = vsel %vm2237, %v2206, %v2208
        %v2268 = vsel %vm2237, %v2203, %v2205
        %v2269 = vsel %vm2237, %v2204, %v2206
        %v2270 = vsel %vm2237, %v2201, %v2203
        %v2271 = vsel %vm2237, %v2202, %v2204
        %v2272 = vsel %vm2237, %v2199, %v2201
        %v2273 = vsel %vm2237, %v2200, %v2202
        %v2274 = vsel %vm2237, %v2197, %v2199
        %v2275 = vsel %vm2237, %v2198, %v2200
        %v2276 = vsel %vm2237, %v2195, %v2197
        %v2277 = vsel %vm2237, %v2196, %v2198
        %v2278 = vsel %vm2237, %v2193, %v2195
        %v2279 = vsel %vm2237, %v2194, %v2196
        %v2280 = vsel %vm2237, %v2191, %v2193
        %v2281 = vsel %vm2237, %v2192, %v2194
        %v2282 = vsel %vm2237, %v2189, %v2191
        %v2283 = vsel %vm2237, %v2190, %v2192
        %v2284 = vsel %vm2237, %v2187, %v2189
        %v2285 = vsel %vm2237, %v2188, %v2190
        %v2286 = vsel %vm2237, %v2185, %v2187
        %v2287 = vsel %vm2237, %v2186, %v2188
        %v2288 = vsel %vm2237, %v2183, %v2185
        %v2289 = vsel %vm2237, %v2184, %v2186
        %v2290 = vsel %vm2237, %v2181, %v2183
        %v2291 = vsel %vm2237, %v2182, %v2184
        %v2292 = vsel %vm2237, %v2235, %v2181
        %v2293 = vsel %vm2237, %v2236, %v2182
        %v2294 = vadd.f32 %v1877, %v2290
        %v2295 = vadd.f32 %v1878, %v2291
        %v2296 = vadd.f32 %v1879, %v2288
        %v2297 = vadd.f32 %v1880, %v2289
        %v2298 = vadd.f32 %v1881, %v2286
        %v2299 = vadd.f32 %v1882, %v2287
        %v2300 = vadd.f32 %v1883, %v2284
        %v2301 = vadd.f32 %v1884, %v2285
        %v2302 = vadd.f32 %v1885, %v2282
        %v2303 = vadd.f32 %v1886, %v2283
        %v2304 = vadd.f32 %v1887, %v2280
        %v2305 = vadd.f32 %v1888, %v2281
        %v2306 = vadd.f32 %v1889, %v2278
        %v2307 = vadd.f32 %v1890, %v2279
        %v2308 = vadd.f32 %v1891, %v2276
        %v2309 = vadd.f32 %v1892, %v2277
        %v2310 = vadd.f32 %v1893, %v2274
        %v2311 = vadd.f32 %v1894, %v2275
        %v2312 = vadd.f32 %v1895, %v2272
        %v2313 = vadd.f32 %v1896, %v2273
        %v2314 = vadd.f32 %v1897, %v2270
        %v2315 = vadd.f32 %v1898, %v2271
        %v2316 = vadd.f32 %v1899, %v2268
        %v2317 = vadd.f32 %v1900, %v2269
        %v2318 = vadd.f32 %v1901, %v2266
        %v2319 = vadd.f32 %v1902, %v2267
        %v2320 = vadd.f32 %v1903, %v2264
        %v2321 = vadd.f32 %v1904, %v2265
        %v2322 = vadd.f32 %v1905, %v2262
        %v2323 = vadd.f32 %v1906, %v2263
        %v2324 = vadd.f32 %v1907, %v2260
        %v2325 = vadd.f32 %v1908, %v2261
        %v2326 = vadd.f32 %v1909, %v2258
        %v2327 = vadd.f32 %v1910, %v2259
        %v2328 = vadd.f32 %v1911, %v2256
        %v2329 = vadd.f32 %v1912, %v2257
        %v2330 = vadd.f32 %v1913, %v2254
        %v2331 = vadd.f32 %v1914, %v2255
        %v2332 = vadd.f32 %v1915, %v2252
        %v2333 = vadd.f32 %v1916, %v2253
        %v2334 = vadd.f32 %v1917, %v2250
        %v2335 = vadd.f32 %v1918, %v2251
        %v2336 = vadd.f32 %v1919, %v2248
        %v2337 = vadd.f32 %v1920, %v2249
        %v2338 = vadd.f32 %v1921, %v2246
        %v2339 = vadd.f32 %v1922, %v2247
        %v2340 = vadd.f32 %v1923, %v2244
        %v2341 = vadd.f32 %v1924, %v2245
        %v2342 = vadd.f32 %v1925, %v2242
        %v2343 = vadd.f32 %v1926, %v2243
        %v2344 = vadd.f32 %v1927, %v2240
        %v2345 = vadd.f32 %v1928, %v2241
        %v2346 = vadd.f32 %v1929, %v2238
        %v2347 = vadd.f32 %v1930, %v2239
        %v2348 = vadd.f32 %v1931, %v2292
        %v2349 = vadd.f32 %v1932, %v2293
        %v2350 = vld [vmem:[%s2] sm:$0x3]
        %v2352 = vlaneseq
        %v2353 = vshrl.u32 %v2352, 7
        %v2354 = vsub.s32 0, %v2353
        %v2355 = vrot.slane %v2350, %v2354
        %v2356 = vlaneseq
        %v2357 = vshrl.u32 %v2356, 7
        %v2358 = vsub.s32 1, %v2357
        %v2359 = vrot.slane %v2350, %v2358
        %v2362 = vadd.f32 %v2294, %v2355
        %v2363 = vadd.f32 %v2295, %v2359
        %v2364 = vadd.f32 %v2296, %v2355
        %v2365 = vadd.f32 %v2297, %v2359
        %v2366 = vadd.f32 %v2298, %v2355
        %v2367 = vadd.f32 %v2299, %v2359
        %v2368 = vadd.f32 %v2300, %v2355
        %v2369 = vadd.f32 %v2301, %v2359
        %v2370 = vadd.f32 %v2302, %v2355
        %v2371 = vadd.f32 %v2303, %v2359
        %v2372 = vadd.f32 %v2304, %v2355
        %v2373 = vadd.f32 %v2305, %v2359
        %v2374 = vadd.f32 %v2306, %v2355
        %v2375 = vadd.f32 %v2307, %v2359
        %v2376 = vadd.f32 %v2308, %v2355
        %v2377 = vadd.f32 %v2309, %v2359
        %v2378 = vadd.f32 %v2310, %v2355
        %v2379 = vadd.f32 %v2311, %v2359
        %v2380 = vadd.f32 %v2312, %v2355
        %v2381 = vadd.f32 %v2313, %v2359
        %v2382 = vadd.f32 %v2314, %v2355
        %v2383 = vadd.f32 %v2315, %v2359
        %v2384 = vadd.f32 %v2316, %v2355
        %v2385 = vadd.f32 %v2317, %v2359
        %v2386 = vadd.f32 %v2318, %v2355
        %v2387 = vadd.f32 %v2319, %v2359
        %v2388 = vadd.f32 %v2320, %v2355
        %v2389 = vadd.f32 %v2321, %v2359
        %v2390 = vadd.f32 %v2322, %v2355
        %v2391 = vadd.f32 %v2323, %v2359
        %v2392 = vadd.f32 %v2324, %v2355
        %v2393 = vadd.f32 %v2325, %v2359
        %v2394 = vadd.f32 %v2326, %v2355
        %v2395 = vadd.f32 %v2327, %v2359
        %v2396 = vadd.f32 %v2328, %v2355
        %v2397 = vadd.f32 %v2329, %v2359
        %v2398 = vadd.f32 %v2330, %v2355
        %v2399 = vadd.f32 %v2331, %v2359
        %v2400 = vadd.f32 %v2332, %v2355
        %v2401 = vadd.f32 %v2333, %v2359
        %v2402 = vadd.f32 %v2334, %v2355
        %v2403 = vadd.f32 %v2335, %v2359
        %v2404 = vadd.f32 %v2336, %v2355
        %v2405 = vadd.f32 %v2337, %v2359
        %v2406 = vadd.f32 %v2338, %v2355
        %v2407 = vadd.f32 %v2339, %v2359
        %v2408 = vadd.f32 %v2340, %v2355
        %v2409 = vadd.f32 %v2341, %v2359
        %v2410 = vadd.f32 %v2342, %v2355
        %v2411 = vadd.f32 %v2343, %v2359
        %v2412 = vadd.f32 %v2344, %v2355
        %v2413 = vadd.f32 %v2345, %v2359
        %v2414 = vadd.f32 %v2346, %v2355
        %v2415 = vadd.f32 %v2347, %v2359
        %v2416 = vadd.f32 %v2348, %v2355
        %v2417 = vadd.f32 %v2349, %v2359
        %v2418 = vmax.f32 %v2362, %v2363
        %v2419 = vmax.f32 %v2364, %v2365
        %v2420 = vmax.f32 %v2366, %v2367
        %v2421 = vmax.f32 %v2368, %v2369
        %v2422 = vmax.f32 %v2370, %v2371
        %v2423 = vmax.f32 %v2372, %v2373
        %v2424 = vmax.f32 %v2374, %v2375
        %v2425 = vmax.f32 %v2376, %v2377
        %v2426 = vmax.f32 %v2378, %v2379
        %v2427 = vmax.f32 %v2380, %v2381
        %v2428 = vmax.f32 %v2382, %v2383
        %v2429 = vmax.f32 %v2384, %v2385
        %v2430 = vmax.f32 %v2386, %v2387
        %v2431 = vmax.f32 %v2388, %v2389
        %v2432 = vmax.f32 %v2390, %v2391
        %v2433 = vmax.f32 %v2392, %v2393
        %v2434 = vmax.f32 %v2394, %v2395
        %v2435 = vmax.f32 %v2396, %v2397
        %v2436 = vmax.f32 %v2398, %v2399
        %v2437 = vmax.f32 %v2400, %v2401
        %v2438 = vmax.f32 %v2402, %v2403
        %v2439 = vmax.f32 %v2404, %v2405
        %v2440 = vmax.f32 %v2406, %v2407
        %v2441 = vmax.f32 %v2408, %v2409
        %v2442 = vmax.f32 %v2410, %v2411
        %v2443 = vmax.f32 %v2412, %v2413
        %v2444 = vmax.f32 %v2414, %v2415
        %v2445 = vmax.f32 %v2416, %v2417
        %v2446 = vrot.slane %v2418, 1
        %v2447 = vrot.slane %v2419, 1
        %v2448 = vrot.slane %v2420, 1
        %v2449 = vrot.slane %v2421, 1
        %v2450 = vrot.slane %v2422, 1
        %v2451 = vrot.slane %v2423, 1
        %v2452 = vrot.slane %v2424, 1
        %v2453 = vrot.slane %v2425, 1
        %v2454 = vrot.slane %v2426, 1
        %v2455 = vrot.slane %v2427, 1
        %v2456 = vrot.slane %v2428, 1
        %v2457 = vrot.slane %v2429, 1
        %v2458 = vrot.slane %v2430, 1
        %v2459 = vrot.slane %v2431, 1
        %v2460 = vrot.slane %v2432, 1
        %v2461 = vrot.slane %v2433, 1
        %v2462 = vrot.slane %v2434, 1
        %v2463 = vrot.slane %v2435, 1
        %v2464 = vrot.slane %v2436, 1
        %v2465 = vrot.slane %v2437, 1
        %v2466 = vrot.slane %v2438, 1
        %v2467 = vrot.slane %v2439, 1
        %v2468 = vrot.slane %v2440, 1
        %v2469 = vrot.slane %v2441, 1
        %v2470 = vrot.slane %v2442, 1
        %v2471 = vrot.slane %v2443, 1
        %v2472 = vrot.slane %v2444, 1
        %v2473 = vrot.slane %v2445, 1
        %v2474 = vsel %vm803, %v2472, %v2473
        %v2475 = vsel %vm803, %v2471, %v2472
        %v2476 = vsel %vm803, %v2470, %v2471
        %v2477 = vsel %vm803, %v2469, %v2470
        %v2478 = vsel %vm803, %v2468, %v2469
        %v2479 = vsel %vm803, %v2467, %v2468
        %v2480 = vsel %vm803, %v2466, %v2467
        %v2481 = vsel %vm803, %v2465, %v2466
        %v2482 = vsel %vm803, %v2464, %v2465
        %v2483 = vsel %vm803, %v2463, %v2464
        %v2484 = vsel %vm803, %v2462, %v2463
        %v2485 = vsel %vm803, %v2461, %v2462
        %v2486 = vsel %vm803, %v2460, %v2461
        %v2487 = vsel %vm803, %v2459, %v2460
        %v2488 = vsel %vm803, %v2458, %v2459
        %v2489 = vsel %vm803, %v2457, %v2458
        %v2490 = vsel %vm803, %v2456, %v2457
        %v2491 = vsel %vm803, %v2455, %v2456
        %v2492 = vsel %vm803, %v2454, %v2455
        %v2493 = vsel %vm803, %v2453, %v2454
        %v2494 = vsel %vm803, %v2452, %v2453
        %v2495 = vsel %vm803, %v2451, %v2452
        %v2496 = vsel %vm803, %v2450, %v2451
        %v2497 = vsel %vm803, %v2449, %v2450
        %v2498 = vsel %vm803, %v2448, %v2449
        %v2499 = vsel %vm803, %v2447, %v2448
        %v2500 = vsel %vm803, %v2446, %v2447
        %v2501 = vsel %vm803, %v2473, %v2446
        %v2502 = vmax.f32 %v2418, %v2500
        %v2503 = vmax.f32 %v2419, %v2499
        %v2504 = vmax.f32 %v2420, %v2498
        %v2505 = vmax.f32 %v2421, %v2497
        %v2506 = vmax.f32 %v2422, %v2496
        %v2507 = vmax.f32 %v2423, %v2495
        %v2508 = vmax.f32 %v2424, %v2494
        %v2509 = vmax.f32 %v2425, %v2493
        %v2510 = vmax.f32 %v2426, %v2492
        %v2511 = vmax.f32 %v2427, %v2491
        %v2512 = vmax.f32 %v2428, %v2490
        %v2513 = vmax.f32 %v2429, %v2489
        %v2514 = vmax.f32 %v2430, %v2488
        %v2515 = vmax.f32 %v2431, %v2487
        %v2516 = vmax.f32 %v2432, %v2486
        %v2517 = vmax.f32 %v2433, %v2485
        %v2518 = vmax.f32 %v2434, %v2484
        %v2519 = vmax.f32 %v2435, %v2483
        %v2520 = vmax.f32 %v2436, %v2482
        %v2521 = vmax.f32 %v2437, %v2481
        %v2522 = vmax.f32 %v2438, %v2480
        %v2523 = vmax.f32 %v2439, %v2479
        %v2524 = vmax.f32 %v2440, %v2478
        %v2525 = vmax.f32 %v2441, %v2477
        %v2526 = vmax.f32 %v2442, %v2476
        %v2527 = vmax.f32 %v2443, %v2475
        %v2528 = vmax.f32 %v2444, %v2474
        %v2529 = vmax.f32 %v2445, %v2501
        %v2530 = vmax.f32 %v2502, 0.0
        %v2531 = vmax.f32 %v2503, 0.0
        %v2532 = vmax.f32 %v2504, 0.0
        %v2533 = vmax.f32 %v2505, 0.0
        %v2534 = vmax.f32 %v2506, 0.0
        %v2535 = vmax.f32 %v2507, 0.0
        %v2536 = vmax.f32 %v2508, 0.0
        %v2537 = vmax.f32 %v2509, 0.0
        %v2538 = vmax.f32 %v2510, 0.0
        %v2539 = vmax.f32 %v2511, 0.0
        %v2540 = vmax.f32 %v2512, 0.0
        %v2541 = vmax.f32 %v2513, 0.0
        %v2542 = vmax.f32 %v2514, 0.0
        %v2543 = vmax.f32 %v2515, 0.0
        %v2544 = vmax.f32 %v2516, 0.0
        %v2545 = vmax.f32 %v2517, 0.0
        %v2546 = vmax.f32 %v2518, 0.0
        %v2547 = vmax.f32 %v2519, 0.0
        %v2548 = vmax.f32 %v2520, 0.0
        %v2549 = vmax.f32 %v2521, 0.0
        %v2550 = vmax.f32 %v2522, 0.0
        %v2551 = vmax.f32 %v2523, 0.0
        %v2552 = vmax.f32 %v2524, 0.0
        %v2553 = vmax.f32 %v2525, 0.0
        %v2554 = vmax.f32 %v2526, 0.0
        %v2555 = vmax.f32 %v2527, 0.0
        %v2556 = vmax.f32 %v2528, 0.0
        %v2557 = vmax.f32 %v2529, 0.0
        %v2558 = vld [vmem:[%s3] sm:$0xff]
        %v2559 = vld [vmem:[%s3 + $0x8] sm:$0xff]
        %v2560 = vld [vmem:[%s3 + $0x10] sm:$0xff]
        %v2561 = vld [vmem:[%s3 + $0x18] sm:$0xff]
        %v2562 = vld [vmem:[%s3 + $0x20] sm:$0xff]
        %v2563 = vld [vmem:[%s3 + $0x28] sm:$0xff]
        %v2564 = vld [vmem:[%s3 + $0x30] sm:$0xff]
        %v2565 = vld [vmem:[%s3 + $0x38] sm:$0xff]
        %v2566 = vld [vmem:[%s3 + $0x40] sm:$0xff]
        %v2567 = vld [vmem:[%s3 + $0x48] sm:$0xff]
        %v2568 = vld [vmem:[%s3 + $0x50] sm:$0xff]
        %v2569 = vld [vmem:[%s3 + $0x58] sm:$0xff]
        %v2570 = vld [vmem:[%s3 + $0x60] sm:$0xff]
        %v2571 = vld [vmem:[%s3 + $0x68] sm:$0xff]
        %v2572 = vld [vmem:[%s3 + $0x70] sm:$0xff]
        %v2573 = vld [vmem:[%s3 + $0x78] sm:$0xff]
        %v2574 = vld [vmem:[%s3 + $0x80] sm:$0xff]
        %v2575 = vld [vmem:[%s3 + $0x88] sm:$0xff]
        %v2576 = vld [vmem:[%s3 + $0x90] sm:$0xff]
        %v2577 = vld [vmem:[%s3 + $0x98] sm:$0xff]
        %v2578 = vld [vmem:[%s3 + $0xa0] sm:$0xff]
        %v2579 = vld [vmem:[%s3 + $0xa8] sm:$0xff]
        %v2580 = vld [vmem:[%s3 + $0xb0] sm:$0xff]
        %v2581 = vld [vmem:[%s3 + $0xb8] sm:$0xff]
        %v2582 = vld [vmem:[%s3 + $0xc0] sm:$0xff]
        %v2583 = vld [vmem:[%s3 + $0xc8] sm:$0xff]
        %v2584 = vld [vmem:[%s3 + $0xd0] sm:$0xff]
        %v2585 = vld [vmem:[%s3 + $0xd8] sm:$0xff]
        %v2586 = vld [vmem:[%s3 + $0xe0] sm:$0xff]
        %v2587 = vld [vmem:[%s3 + $0xe8] sm:$0xff]
        %v2588 = vld [vmem:[%s3 + $0xf0] sm:$0xff]
        %v2589 = vld [vmem:[%s3 + $0xf8] sm:$0xff]
        %s2590 = scalar_lea.vmem %s3, 256
        %v2591 = vld [vmem:[%s2590] sm:$0xff]
        %v2592 = vld [vmem:[%s2590 + $0x8] sm:$0xff]
        %v2593 = vld [vmem:[%s2590 + $0x10] sm:$0xff]
        %v2594 = vld [vmem:[%s2590 + $0x18] sm:$0xff]
        %v2595 = vld [vmem:[%s2590 + $0x20] sm:$0xff]
        %v2596 = vld [vmem:[%s2590 + $0x28] sm:$0xff]
        %v2597 = vld [vmem:[%s2590 + $0x30] sm:$0xff]
        %v2598 = vld [vmem:[%s2590 + $0x38] sm:$0xff]
        %v2599 = vld [vmem:[%s2590 + $0x40] sm:$0xff]
        %v2600 = vld [vmem:[%s2590 + $0x48] sm:$0xff]
        %v2601 = vld [vmem:[%s2590 + $0x50] sm:$0xff]
        %v2602 = vld [vmem:[%s2590 + $0x58] sm:$0xff]
        %v2603 = vld [vmem:[%s2590 + $0x60] sm:$0xff]
        %v2604 = vld [vmem:[%s2590 + $0x68] sm:$0xff]
        %v2605 = vld [vmem:[%s2590 + $0x70] sm:$0xff]
        %v2606 = vld [vmem:[%s2590 + $0x78] sm:$0xff]
        %v2607 = vld [vmem:[%s2590 + $0x80] sm:$0xff]
        %v2608 = vld [vmem:[%s2590 + $0x88] sm:$0xff]
        %v2609 = vld [vmem:[%s2590 + $0x90] sm:$0xff]
        %v2610 = vld [vmem:[%s2590 + $0x98] sm:$0xff]
        %v2611 = vld [vmem:[%s2590 + $0xa0] sm:$0xff]
        %v2612 = vld [vmem:[%s2590 + $0xa8] sm:$0xff]
        %v2613 = vld [vmem:[%s2590 + $0xb0] sm:$0xff]
        %v2614 = vld [vmem:[%s2590 + $0xb8] sm:$0xff]
        %v2615 = vld [vmem:[%s2590 + $0xc0] sm:$0xff]
        %v2616 = vld [vmem:[%s2590 + $0xc8] sm:$0xff]
        %v2617 = vld [vmem:[%s2590 + $0xd0] sm:$0xff]
        %v2618 = vld [vmem:[%s2590 + $0xd8] sm:$0xff]
        %v2619 = vld [vmem:[%s2590 + $0xe0] sm:$0xff]
        %v2620 = vld [vmem:[%s2590 + $0xe8] sm:$0xff]
        %v2621 = vld [vmem:[%s2590 + $0xf0] sm:$0xff]
        %v2622 = vld [vmem:[%s2590 + $0xf8] sm:$0xff]
        %2623 = vmatprep.subr.mxu0 %v2592
        %2624 = vmatpush1.msra.mxu0 %v2591
        %2625 = vmatprep.subr.mxu0 %v2594
        %2626 = vmatpush1.msra.mxu0 %v2593
        %2627 = vmatprep.subr.mxu0 %v2596
        %2628 = vmatpush1.msra.mxu0 %v2595
        %2629 = vmatprep.subr.mxu0 %v2598
        %2630 = vmatpush1.msra.mxu0 %v2597
        %2631 = vmatprep.subr.mxu0 %v2600
        %2632 = vmatpush1.msra.mxu0 %v2599
        %2633 = vmatprep.subr.mxu0 %v2602
        %2634 = vmatpush1.msra.mxu0 %v2601
        %2635 = vmatprep.subr.mxu0 %v2604
        %2636 = vmatpush1.msra.mxu0 %v2603
        %2637 = vmatprep.subr.mxu0 %v2606
        %2638 = vmatpush1.msra.mxu0 %v2605
        %2639 = vmatprep.subr.mxu0 %v2608
        %2640 = vmatpush1.msra.mxu0 %v2607
        %2641 = vmatprep.subr.mxu0 %v2610
        %2642 = vmatpush1.msra.mxu0 %v2609
        %2643 = vmatprep.subr.mxu0 %v2612
        %2644 = vmatpush1.msra.mxu0 %v2611
        %2645 = vmatprep.subr.mxu0 %v2614
        %2646 = vmatpush1.msra.mxu0 %v2613
        %2647 = vmatprep.subr.mxu0 %v2616
        %2648 = vmatpush1.msra.mxu0 %v2615
        %2649 = vmatprep.subr.mxu0 %v2618
        %2650 = vmatpush1.msra.mxu0 %v2617
        %2651 = vmatprep.subr.mxu0 %v2620
        %2652 = vmatpush1.msra.mxu0 %v2619
        %2653 = vmatprep.subr.mxu0 %v2622
        %2654 = vmatpush1.msra.mxu0 %v2621
        %2655 = vmatprep.subr.mxu0 0.0
        %2656 = vmatpush1.msra.mxu0 0.0
        %2657 = vmatprep.subr.mxu0 0.0
        %2658 = vmatpush1.msra.mxu0 0.0
        %2659 = vmatprep.subr.mxu0 0.0
        %2660 = vmatpush1.msra.mxu0 0.0
        %2661 = vmatprep.subr.mxu0 0.0
        %2662 = vmatpush1.msra.mxu0 0.0
        %2663 = vmatprep.subr.mxu0 0.0
        %2664 = vmatpush1.msra.mxu0 0.0
        %2665 = vmatprep.subr.mxu0 0.0
        %2666 = vmatpush1.msra.mxu0 0.0
        %2667 = vmatprep.subr.mxu0 0.0
        %2668 = vmatpush1.msra.mxu0 0.0
        %2669 = vmatprep.subr.mxu0 0.0
        %2670 = vmatpush1.msra.mxu0 0.0
        %2671 = vmatprep.subr.mxu0 0.0
        %2672 = vmatpush1.msra.mxu0 0.0
        %2673 = vmatprep.subr.mxu0 0.0
        %2674 = vmatpush1.msra.mxu0 0.0
        %2675 = vmatprep.subr.mxu0 0.0
        %2676 = vmatpush1.msra.mxu0 0.0
        %2677 = vmatprep.subr.mxu0 0.0
        %2678 = vmatpush1.msra.mxu0 0.0
        %2679 = vmatprep.subr.mxu0 0.0
        %2680 = vmatpush1.msra.mxu0 0.0
        %2681 = vmatprep.subr.mxu0 0.0
        %2682 = vmatpush1.msra.mxu0 0.0
        %2683 = vmatprep.subr.mxu0 0.0
        %2684 = vmatpush1.msra.mxu0 0.0
        %2685 = vmatprep.subr.mxu0 0.0
        %2686 = vmatpush1.msra.mxu0 0.0
        %2687 = vmatprep.mubr.f32.mxu0 0.0
        %2688 = vmatmul.mubr.f32.gmra.mrb[0].mxu0 %v2530
        %v2689 = vpop.f32.mrb[0].mxu0
        %v2690 = vadd.f32 0.0, %v2689
        %v2691 = vpop.f32.mrb[0].mxu0
        %v2692 = vadd.f32 0.0, %v2691
        %2693 = vmatprep.mubr.f32.mxu0 0.0
        %2694 = vmatmul.mubr.f32.gmra.mrb[0].mxu0 %v2531
        %v2695 = vpop.f32.mrb[0].mxu0
        %v2696 = vadd.f32 0.0, %v2695
        %v2697 = vpop.f32.mrb[0].mxu0
        %v2698 = vadd.f32 0.0, %v2697
        %2699 = vmatprep.mubr.f32.mxu0 0.0
        %2700 = vmatmul.mubr.f32.gmra.mrb[0].mxu0 %v2532
        %v2701 = vpop.f32.mrb[0].mxu0
        %v2702 = vadd.f32 0.0, %v2701
        %v2703 = vpop.f32.mrb[0].mxu0
        %v2704 = vadd.f32 0.0, %v2703
        %2705 = vmatprep.mubr.f32.mxu0 0.0
        %2706 = vmatmul.mubr.f32.gmra.mrb[0].mxu0 %v2533
        %v2707 = vpop.f32.mrb[0].mxu0
        %v2708 = vadd.f32 0.0, %v2707
        %v2709 = vpop.f32.mrb[0].mxu0
        %v2710 = vadd.f32 0.0, %v2709
        %2711 = vmatprep.mubr.f32.mxu0 0.0
        %2712 = vmatmul.mubr.f32.gmra.mrb[0].mxu0 %v2534
        %v2713 = vpop.f32.mrb[0].mxu0
        %v2714 = vadd.f32 0.0, %v2713
        %v2715 = vpop.f32.mrb[0].mxu0
        %v2716 = vadd.f32 0.0, %v2715
        %2717 = vmatprep.mubr.f32.mxu0 0.0
        %2718 = vmatmul.mubr.f32.gmra.mrb[0].mxu0 %v2535
        %v2719 = vpop.f32.mrb[0].mxu0
        %v2720 = vadd.f32 0.0, %v2719
        %v2721 = vpop.f32.mrb[0].mxu0
        %v2722 = vadd.f32 0.0, %v2721
        %2723 = vmatprep.mubr.f32.mxu0 0.0
        %2724 = vmatmul.mubr.f32.gmra.mrb[0].mxu0 %v2536
        %v2725 = vpop.f32.mrb[0].mxu0
        %v2726 = vadd.f32 0.0, %v2725
        %v2727 = vpop.f32.mrb[0].mxu0
        %v2728 = vadd.f32 0.0, %v2727
        %2729 = vmatprep.mubr.f32.mxu0 0.0
        %2730 = vmatmul.mubr.f32.gmra.mrb[0].mxu0 %v2537
        %v2731 = vpop.f32.mrb[0].mxu0
        %v2732 = vadd.f32 0.0, %v2731
        %v2733 = vpop.f32.mrb[0].mxu0
        %v2734 = vadd.f32 0.0, %v2733
        %2735 = vmatprep.mubr.f32.mxu0 0.0
        %2736 = vmatmul.mubr.f32.gmra.mrb[0].mxu0 %v2538
        %v2737 = vpop.f32.mrb[0].mxu0
        %v2738 = vadd.f32 0.0, %v2737
        %v2739 = vpop.f32.mrb[0].mxu0
        %v2740 = vadd.f32 0.0, %v2739
        %2741 = vmatprep.mubr.f32.mxu0 0.0
        %2742 = vmatmul.mubr.f32.gmra.mrb[0].mxu0 %v2539
        %v2743 = vpop.f32.mrb[0].mxu0
        %v2744 = vadd.f32 0.0, %v2743
        %v2745 = vpop.f32.mrb[0].mxu0
        %v2746 = vadd.f32 0.0, %v2745
        %2747 = vmatprep.mubr.f32.mxu0 0.0
        %2748 = vmatmul.mubr.f32.gmra.mrb[0].mxu0 %v2540
        %v2749 = vpop.f32.mrb[0].mxu0
        %v2750 = vadd.f32 0.0, %v2749
        %v2751 = vpop.f32.mrb[0].mxu0
        %v2752 = vadd.f32 0.0, %v2751
        %2753 = vmatprep.mubr.f32.mxu0 0.0
        %2754 = vmatmul.mubr.f32.gmra.mrb[0].mxu0 %v2541
        %v2755 = vpop.f32.mrb[0].mxu0
        %v2756 = vadd.f32 0.0, %v2755
        %v2757 = vpop.f32.mrb[0].mxu0
        %v2758 = vadd.f32 0.0, %v2757
        %2759 = vmatprep.mubr.f32.mxu0 0.0
        %2760 = vmatmul.mubr.f32.gmra.mrb[0].mxu0 %v2542
        %v2761 = vpop.f32.mrb[0].mxu0
        %v2762 = vadd.f32 0.0, %v2761
        %v2763 = vpop.f32.mrb[0].mxu0
        %v2764 = vadd.f32 0.0, %v2763
        %2765 = vmatprep.mubr.f32.mxu0 0.0
        %2766 = vmatmul.mubr.f32.gmra.mrb[0].mxu0 %v2543
        %v2767 = vpop.f32.mrb[0].mxu0
        %v2768 = vadd.f32 0.0, %v2767
        %v2769 = vpop.f32.mrb[0].mxu0
        %v2770 = vadd.f32 0.0, %v2769
        %2771 = vmatprep.mubr.f32.mxu0 0.0
        %2772 = vmatmul.mubr.f32.gmra.mrb[0].mxu0 %v2544
        %v2773 = vpop.f32.mrb[0].mxu0
        %v2774 = vadd.f32 0.0, %v2773
        %v2775 = vpop.f32.mrb[0].mxu0
        %v2776 = vadd.f32 0.0, %v2775
        %2777 = vmatprep.mubr.f32.mxu0 0.0
        %2778 = vmatmul.mubr.f32.gmra.mrb[0].mxu0 %v2545
        %v2779 = vpop.f32.mrb[0].mxu0
        %v2780 = vadd.f32 0.0, %v2779
        %v2781 = vpop.f32.mrb[0].mxu0
        %v2782 = vadd.f32 0.0, %v2781
        %2783 = vmatprep.mubr.f32.mxu0 0.0
        %2784 = vmatmul.mubr.f32.gmra.mrb[0].mxu0 %v2546
        %v2785 = vpop.f32.mrb[0].mxu0
        %v2786 = vadd.f32 0.0, %v2785
        %v2787 = vpop.f32.mrb[0].mxu0
        %v2788 = vadd.f32 0.0, %v2787
        %2789 = vmatprep.mubr.f32.mxu0 0.0
        %2790 = vmatmul.mubr.f32.gmra.mrb[0].mxu0 %v2547
        %v2791 = vpop.f32.mrb[0].mxu0
        %v2792 = vadd.f32 0.0, %v2791
        %v2793 = vpop.f32.mrb[0].mxu0
        %v2794 = vadd.f32 0.0, %v2793
        %2795 = vmatprep.mubr.f32.mxu0 0.0
        %2796 = vmatmul.mubr.f32.gmra.mrb[0].mxu0 %v2548
        %v2797 = vpop.f32.mrb[0].mxu0
        %v2798 = vadd.f32 0.0, %v2797
        %v2799 = vpop.f32.mrb[0].mxu0
        %v2800 = vadd.f32 0.0, %v2799
        %2801 = vmatprep.mubr.f32.mxu0 0.0
        %2802 = vmatmul.mubr.f32.gmra.mrb[0].mxu0 %v2549
        %v2803 = vpop.f32.mrb[0].mxu0
        %v2804 = vadd.f32 0.0, %v2803
        %v2805 = vpop.f32.mrb[0].mxu0
        %v2806 = vadd.f32 0.0, %v2805
        %2807 = vmatprep.mubr.f32.mxu0 0.0
        %2808 = vmatmul.mubr.f32.gmra.mrb[0].mxu0 %v2550
        %v2809 = vpop.f32.mrb[0].mxu0
        %v2810 = vadd.f32 0.0, %v2809
        %v2811 = vpop.f32.mrb[0].mxu0
        %v2812 = vadd.f32 0.0, %v2811
        %2813 = vmatprep.mubr.f32.mxu0 0.0
        %2814 = vmatmul.mubr.f32.gmra.mrb[0].mxu0 %v2551
        %v2815 = vpop.f32.mrb[0].mxu0
        %v2816 = vadd.f32 0.0, %v2815
        %v2817 = vpop.f32.mrb[0].mxu0
        %v2818 = vadd.f32 0.0, %v2817
        %2819 = vmatprep.mubr.f32.mxu0 0.0
        %2820 = vmatmul.mubr.f32.gmra.mrb[0].mxu0 %v2552
        %v2821 = vpop.f32.mrb[0].mxu0
        %v2822 = vadd.f32 0.0, %v2821
        %v2823 = vpop.f32.mrb[0].mxu0
        %v2824 = vadd.f32 0.0, %v2823
        %2825 = vmatprep.mubr.f32.mxu0 0.0
        %2826 = vmatmul.mubr.f32.gmra.mrb[0].mxu0 %v2553
        %v2827 = vpop.f32.mrb[0].mxu0
        %v2828 = vadd.f32 0.0, %v2827
        %v2829 = vpop.f32.mrb[0].mxu0
        %v2830 = vadd.f32 0.0, %v2829
        %2831 = vmatprep.mubr.f32.mxu0 0.0
        %2832 = vmatmul.mubr.f32.gmra.mrb[0].mxu0 %v2554
        %v2833 = vpop.f32.mrb[0].mxu0
        %v2834 = vadd.f32 0.0, %v2833
        %v2835 = vpop.f32.mrb[0].mxu0
        %v2836 = vadd.f32 0.0, %v2835
        %2837 = vmatprep.mubr.f32.mxu0 0.0
        %2838 = vmatmul.mubr.f32.gmra.mrb[0].mxu0 %v2555
        %v2839 = vpop.f32.mrb[0].mxu0
        %v2840 = vadd.f32 0.0, %v2839
        %v2841 = vpop.f32.mrb[0].mxu0
        %v2842 = vadd.f32 0.0, %v2841
        %2843 = vmatprep.mubr.f32.mxu0 0.0
        %2844 = vmatmul.mubr.f32.gmra.mrb[0].mxu0 %v2556
        %v2845 = vpop.f32.mrb[0].mxu0
        %v2846 = vadd.f32 0.0, %v2845
        %v2847 = vpop.f32.mrb[0].mxu0
        %v2848 = vadd.f32 0.0, %v2847
        %2849 = vmatprep.mubr.f32.mxu0 0.0
        %2850 = vmatmul.mubr.f32.gmra.mrb[0].mxu0 %v2557
        %v2851 = vpop.f32.mrb[0].mxu0
        %v2852 = vadd.f32 0.0, %v2851
        %v2853 = vpop.f32.mrb[0].mxu0
        %v2854 = vadd.f32 0.0, %v2853
        %2855 = vdwg.mxu0
        %v2856 = vrot.slane %v2690, 2
        %v2857 = vrot.slane %v2692, 2
        %v2858 = vrot.slane %v2696, 2
        %v2859 = vrot.slane %v2698, 2
        %v2860 = vrot.slane %v2702, 2
        %v2861 = vrot.slane %v2704, 2
        %v2862 = vrot.slane %v2708, 2
        %v2863 = vrot.slane %v2710, 2
        %v2864 = vrot.slane %v2714, 2
        %v2865 = vrot.slane %v2716, 2
        %v2866 = vrot.slane %v2720, 2
        %v2867 = vrot.slane %v2722, 2
        %v2868 = vrot.slane %v2726, 2
        %v2869 = vrot.slane %v2728, 2
        %v2870 = vrot.slane %v2732, 2
        %v2871 = vrot.slane %v2734, 2
        %v2872 = vrot.slane %v2738, 2
        %v2873 = vrot.slane %v2740, 2
        %v2874 = vrot.slane %v2744, 2
        %v2875 = vrot.slane %v2746, 2
        %v2876 = vrot.slane %v2750, 2
        %v2877 = vrot.slane %v2752, 2
        %v2878 = vrot.slane %v2756, 2
        %v2879 = vrot.slane %v2758, 2
        %v2880 = vrot.slane %v2762, 2
        %v2881 = vrot.slane %v2764, 2
        %v2882 = vrot.slane %v2768, 2
        %v2883 = vrot.slane %v2770, 2
        %v2884 = vrot.slane %v2774, 2
        %v2885 = vrot.slane %v2776, 2
        %v2886 = vrot.slane %v2780, 2
        %v2887 = vrot.slane %v2782, 2
        %v2888 = vrot.slane %v2786, 2
        %v2889 = vrot.slane %v2788, 2
        %v2890 = vrot.slane %v2792, 2
        %v2891 = vrot.slane %v2794, 2
        %v2892 = vrot.slane %v2798, 2
        %v2893 = vrot.slane %v2800, 2
        %v2894 = vrot.slane %v2804, 2
        %v2895 = vrot.slane %v2806, 2
        %v2896 = vrot.slane %v2810, 2
        %v2897 = vrot.slane %v2812, 2
        %v2898 = vrot.slane %v2816, 2
        %v2899 = vrot.slane %v2818, 2
        %v2900 = vrot.slane %v2822, 2
        %v2901 = vrot.slane %v2824, 2
        %v2902 = vrot.slane %v2828, 2
        %v2903 = vrot.slane %v2830, 2
        %v2904 = vrot.slane %v2834, 2
        %v2905 = vrot.slane %v2836, 2
        %v2906 = vrot.slane %v2840, 2
        %v2907 = vrot.slane %v2842, 2
        %v2908 = vrot.slane %v2846, 2
        %v2909 = vrot.slane %v2848, 2
        %v2910 = vrot.slane %v2852, 2
        %v2911 = vrot.slane %v2854, 2
        %v2912 = vsel %vm1403, %v2908, %v2910
        %v2913 = vsel %vm1403, %v2909, %v2911
        %v2914 = vsel %vm1403, %v2906, %v2908
        %v2915 = vsel %vm1403, %v2907, %v2909
        %v2916 = vsel %vm1403, %v2904, %v2906
        %v2917 = vsel %vm1403, %v2905, %v2907
        %v2918 = vsel %vm1403, %v2902, %v2904
        %v2919 = vsel %vm1403, %v2903, %v2905
        %v2920 = vsel %vm1403, %v2900, %v2902
        %v2921 = vsel %vm1403, %v2901, %v2903
        %v2922 = vsel %vm1403, %v2898, %v2900
        %v2923 = vsel %vm1403, %v2899, %v2901
        %v2924 = vsel %vm1403, %v2896, %v2898
        %v2925 = vsel %vm1403, %v2897, %v2899
        %v2926 = vsel %vm1403, %v2894, %v2896
        %v2927 = vsel %vm1403, %v2895, %v2897
        %v2928 = vsel %vm1403, %v2892, %v2894
        %v2929 = vsel %vm1403, %v2893, %v2895
        %v2930 = vsel %vm1403, %v2890, %v2892
        %v2931 = vsel %vm1403, %v2891, %v2893
        %v2932 = vsel %vm1403, %v2888, %v2890
        %v2933 = vsel %vm1403, %v2889, %v2891
        %v2934 = vsel %vm1403, %v2886, %v2888
        %v2935 = vsel %vm1403, %v2887, %v2889
        %v2936 = vsel %vm1403, %v2884, %v2886
        %v2937 = vsel %vm1403, %v2885, %v2887
        %v2938 = vsel %vm1403, %v2882, %v2884
        %v2939 = vsel %vm1403, %v2883, %v2885
        %v2940 = vsel %vm1403, %v2880, %v2882
        %v2941 = vsel %vm1403, %v2881, %v2883
        %v2942 = vsel %vm1403, %v2878, %v2880
        %v2943 = vsel %vm1403, %v2879, %v2881
        %v2944 = vsel %vm1403, %v2876, %v2878
        %v2945 = vsel %vm1403, %v2877, %v2879
        %v2946 = vsel %vm1403, %v2874, %v2876
        %v2947 = vsel %vm1403, %v2875, %v2877
        %v2948 = vsel %vm1403, %v2872, %v2874
        %v2949 = vsel %vm1403, %v2873, %v2875
        %v2950 = vsel %vm1403, %v2870, %v2872
        %v2951 = vsel %vm1403, %v2871, %v2873
        %v2952 = vsel %vm1403, %v2868, %v2870
        %v2953 = vsel %vm1403, %v2869, %v2871
        %v2954 = vsel %vm1403, %v2866, %v2868
        %v2955 = vsel %vm1403, %v2867, %v2869
        %v2956 = vsel %vm1403, %v2864, %v2866
        %v2957 = vsel %vm1403, %v2865, %v2867
        %v2958 = vsel %vm1403, %v2862, %v2864
        %v2959 = vsel %vm1403, %v2863, %v2865
        %v2960 = vsel %vm1403, %v2860, %v2862
        %v2961 = vsel %vm1403, %v2861, %v2863
        %v2962 = vsel %vm1403, %v2858, %v2860
        %v2963 = vsel %vm1403, %v2859, %v2861
        %v2964 = vsel %vm1403, %v2856, %v2858
        %v2965 = vsel %vm1403, %v2857, %v2859
        %v2966 = vsel %vm1403, %v2910, %v2856
        %v2967 = vsel %vm1403, %v2911, %v2857
        %2968 = vmatprep.subr.mxu0 %v2559
        %2969 = vmatpush1.msra.mxu0 %v2558
        %2970 = vmatprep.subr.mxu0 %v2561
        %2971 = vmatpush1.msra.mxu0 %v2560
        %2972 = vmatprep.subr.mxu0 %v2563
        %2973 = vmatpush1.msra.mxu0 %v2562
        %2974 = vmatprep.subr.mxu0 %v2565
        %2975 = vmatpush1.msra.mxu0 %v2564
        %2976 = vmatprep.subr.mxu0 %v2567
        %2977 = vmatpush1.msra.mxu0 %v2566
        %2978 = vmatprep.subr.mxu0 %v2569
        %2979 = vmatpush1.msra.mxu0 %v2568
        %2980 = vmatprep.subr.mxu0 %v2571
        %2981 = vmatpush1.msra.mxu0 %v2570
        %2982 = vmatprep.subr.mxu0 %v2573
        %2983 = vmatpush1.msra.mxu0 %v2572
        %2984 = vmatprep.subr.mxu0 %v2575
        %2985 = vmatpush1.msra.mxu0 %v2574
        %2986 = vmatprep.subr.mxu0 %v2577
        %2987 = vmatpush1.msra.mxu0 %v2576
        %2988 = vmatprep.subr.mxu0 %v2579
        %2989 = vmatpush1.msra.mxu0 %v2578
        %2990 = vmatprep.subr.mxu0 %v2581
        %2991 = vmatpush1.msra.mxu0 %v2580
        %2992 = vmatprep.subr.mxu0 %v2583
        %2993 = vmatpush1.msra.mxu0 %v2582
        %2994 = vmatprep.subr.mxu0 %v2585
        %2995 = vmatpush1.msra.mxu0 %v2584
        %2996 = vmatprep.subr.mxu0 %v2587
        %2997 = vmatpush1.msra.mxu0 %v2586
        %2998 = vmatprep.subr.mxu0 %v2589
        %2999 = vmatpush1.msra.mxu0 %v2588
        %3000 = vmatprep.subr.mxu0 0.0
        %3001 = vmatpush1.msra.mxu0 0.0
        %3002 = vmatprep.subr.mxu0 0.0
        %3003 = vmatpush1.msra.mxu0 0.0
        %3004 = vmatprep.subr.mxu0 0.0
        %3005 = vmatpush1.msra.mxu0 0.0
        %3006 = vmatprep.subr.mxu0 0.0
        %3007 = vmatpush1.msra.mxu0 0.0
        %3008 = vmatprep.subr.mxu0 0.0
        %3009 = vmatpush1.msra.mxu0 0.0
        %3010 = vmatprep.subr.mxu0 0.0
        %3011 = vmatpush1.msra.mxu0 0.0
        %3012 = vmatprep.subr.mxu0 0.0
        %3013 = vmatpush1.msra.mxu0 0.0
        %3014 = vmatprep.subr.mxu0 0.0
        %3015 = vmatpush1.msra.mxu0 0.0
        %3016 = vmatprep.subr.mxu0 0.0
        %3017 = vmatpush1.msra.mxu0 0.0
        %3018 = vmatprep.subr.mxu0 0.0
        %3019 = vmatpush1.msra.mxu0 0.0
        %3020 = vmatprep.subr.mxu0 0.0
        %3021 = vmatpush1.msra.mxu0 0.0
        %3022 = vmatprep.subr.mxu0 0.0
        %3023 = vmatpush1.msra.mxu0 0.0
        %3024 = vmatprep.subr.mxu0 0.0
        %3025 = vmatpush1.msra.mxu0 0.0
        %3026 = vmatprep.subr.mxu0 0.0
        %3027 = vmatpush1.msra.mxu0 0.0
        %3028 = vmatprep.subr.mxu0 0.0
        %3029 = vmatpush1.msra.mxu0 0.0
        %3030 = vmatprep.subr.mxu0 0.0
        %3031 = vmatpush1.msra.mxu0 0.0
        %3032 = vmatprep.mubr.f32.mxu0 0.0
        %3033 = vmatmul.mubr.f32.gmra.mrb[0].mxu0 %v2530
        %v3034 = vpop.f32.mrb[0].mxu0
        %v3035 = vadd.f32 %v2964, %v3034
        %v3036 = vpop.f32.mrb[0].mxu0
        %v3037 = vadd.f32 %v2965, %v3036
        %3038 = vmatprep.mubr.f32.mxu0 0.0
        %3039 = vmatmul.mubr.f32.gmra.mrb[0].mxu0 %v2531
        %v3040 = vpop.f32.mrb[0].mxu0
        %v3041 = vadd.f32 %v2962, %v3040
        %v3042 = vpop.f32.mrb[0].mxu0
        %v3043 = vadd.f32 %v2963, %v3042
        %3044 = vmatprep.mubr.f32.mxu0 0.0
        %3045 = vmatmul.mubr.f32.gmra.mrb[0].mxu0 %v2532
        %v3046 = vpop.f32.mrb[0].mxu0
        %v3047 = vadd.f32 %v2960, %v3046
        %v3048 = vpop.f32.mrb[0].mxu0
        %v3049 = vadd.f32 %v2961, %v3048
        %3050 = vmatprep.mubr.f32.mxu0 0.0
        %3051 = vmatmul.mubr.f32.gmra.mrb[0].mxu0 %v2533
        %v3052 = vpop.f32.mrb[0].mxu0
        %v3053 = vadd.f32 %v2958, %v3052
        %v3054 = vpop.f32.mrb[0].mxu0
        %v3055 = vadd.f32 %v2959, %v3054
        %3056 = vmatprep.mubr.f32.mxu0 0.0
        %3057 = vmatmul.mubr.f32.gmra.mrb[0].mxu0 %v2534
        %v3058 = vpop.f32.mrb[0].mxu0
        %v3059 = vadd.f32 %v2956, %v3058
        %v3060 = vpop.f32.mrb[0].mxu0
        %v3061 = vadd.f32 %v2957, %v3060
        %3062 = vmatprep.mubr.f32.mxu0 0.0
        %3063 = vmatmul.mubr.f32.gmra.mrb[0].mxu0 %v2535
        %v3064 = vpop.f32.mrb[0].mxu0
        %v3065 = vadd.f32 %v2954, %v3064
        %v3066 = vpop.f32.mrb[0].mxu0
        %v3067 = vadd.f32 %v2955, %v3066
        %3068 = vmatprep.mubr.f32.mxu0 0.0
        %3069 = vmatmul.mubr.f32.gmra.mrb[0].mxu0 %v2536
        %v3070 = vpop.f32.mrb[0].mxu0
        %v3071 = vadd.f32 %v2952, %v3070
        %v3072 = vpop.f32.mrb[0].mxu0
        %v3073 = vadd.f32 %v2953, %v3072
        %3074 = vmatprep.mubr.f32.mxu0 0.0
        %3075 = vmatmul.mubr.f32.gmra.mrb[0].mxu0 %v2537
        %v3076 = vpop.f32.mrb[0].mxu0
        %v3077 = vadd.f32 %v2950, %v3076
        %v3078 = vpop.f32.mrb[0].mxu0
        %v3079 = vadd.f32 %v2951, %v3078
        %3080 = vmatprep.mubr.f32.mxu0 0.0
        %3081 = vmatmul.mubr.f32.gmra.mrb[0].mxu0 %v2538
        %v3082 = vpop.f32.mrb[0].mxu0
        %v3083 = vadd.f32 %v2948, %v3082
        %v3084 = vpop.f32.mrb[0].mxu0
        %v3085 = vadd.f32 %v2949, %v3084
        %3086 = vmatprep.mubr.f32.mxu0 0.0
        %3087 = vmatmul.mubr.f32.gmra.mrb[0].mxu0 %v2539
        %v3088 = vpop.f32.mrb[0].mxu0
        %v3089 = vadd.f32 %v2946, %v3088
        %v3090 = vpop.f32.mrb[0].mxu0
        %v3091 = vadd.f32 %v2947, %v3090
        %3092 = vmatprep.mubr.f32.mxu0 0.0
        %3093 = vmatmul.mubr.f32.gmra.mrb[0].mxu0 %v2540
        %v3094 = vpop.f32.mrb[0].mxu0
        %v3095 = vadd.f32 %v2944, %v3094
        %v3096 = vpop.f32.mrb[0].mxu0
        %v3097 = vadd.f32 %v2945, %v3096
        %3098 = vmatprep.mubr.f32.mxu0 0.0
        %3099 = vmatmul.mubr.f32.gmra.mrb[0].mxu0 %v2541
        %v3100 = vpop.f32.mrb[0].mxu0
        %v3101 = vadd.f32 %v2942, %v3100
        %v3102 = vpop.f32.mrb[0].mxu0
        %v3103 = vadd.f32 %v2943, %v3102
        %3104 = vmatprep.mubr.f32.mxu0 0.0
        %3105 = vmatmul.mubr.f32.gmra.mrb[0].mxu0 %v2542
        %v3106 = vpop.f32.mrb[0].mxu0
        %v3107 = vadd.f32 %v2940, %v3106
        %v3108 = vpop.f32.mrb[0].mxu0
        %v3109 = vadd.f32 %v2941, %v3108
        %3110 = vmatprep.mubr.f32.mxu0 0.0
        %3111 = vmatmul.mubr.f32.gmra.mrb[0].mxu0 %v2543
        %v3112 = vpop.f32.mrb[0].mxu0
        %v3113 = vadd.f32 %v2938, %v3112
        %v3114 = vpop.f32.mrb[0].mxu0
        %v3115 = vadd.f32 %v2939, %v3114
        %3116 = vmatprep.mubr.f32.mxu0 0.0
        %3117 = vmatmul.mubr.f32.gmra.mrb[0].mxu0 %v2544
        %v3118 = vpop.f32.mrb[0].mxu0
        %v3119 = vadd.f32 %v2936, %v3118
        %v3120 = vpop.f32.mrb[0].mxu0
        %v3121 = vadd.f32 %v2937, %v3120
        %3122 = vmatprep.mubr.f32.mxu0 0.0
        %3123 = vmatmul.mubr.f32.gmra.mrb[0].mxu0 %v2545
        %v3124 = vpop.f32.mrb[0].mxu0
        %v3125 = vadd.f32 %v2934, %v3124
        %v3126 = vpop.f32.mrb[0].mxu0
        %v3127 = vadd.f32 %v2935, %v3126
        %3128 = vmatprep.mubr.f32.mxu0 0.0
        %3129 = vmatmul.mubr.f32.gmra.mrb[0].mxu0 %v2546
        %v3130 = vpop.f32.mrb[0].mxu0
        %v3131 = vadd.f32 %v2932, %v3130
        %v3132 = vpop.f32.mrb[0].mxu0
        %v3133 = vadd.f32 %v2933, %v3132
        %3134 = vmatprep.mubr.f32.mxu0 0.0
        %3135 = vmatmul.mubr.f32.gmra.mrb[0].mxu0 %v2547
        %v3136 = vpop.f32.mrb[0].mxu0
        %v3137 = vadd.f32 %v2930, %v3136
        %v3138 = vpop.f32.mrb[0].mxu0
        %v3139 = vadd.f32 %v2931, %v3138
        %3140 = vmatprep.mubr.f32.mxu0 0.0
        %3141 = vmatmul.mubr.f32.gmra.mrb[0].mxu0 %v2548
        %v3142 = vpop.f32.mrb[0].mxu0
        %v3143 = vadd.f32 %v2928, %v3142
        %v3144 = vpop.f32.mrb[0].mxu0
        %v3145 = vadd.f32 %v2929, %v3144
        %3146 = vmatprep.mubr.f32.mxu0 0.0
        %3147 = vmatmul.mubr.f32.gmra.mrb[0].mxu0 %v2549
        %v3148 = vpop.f32.mrb[0].mxu0
        %v3149 = vadd.f32 %v2926, %v3148
        %v3150 = vpop.f32.mrb[0].mxu0
        %v3151 = vadd.f32 %v2927, %v3150
        %3152 = vmatprep.mubr.f32.mxu0 0.0
        %3153 = vmatmul.mubr.f32.gmra.mrb[0].mxu0 %v2550
        %v3154 = vpop.f32.mrb[0].mxu0
        %v3155 = vadd.f32 %v2924, %v3154
        %v3156 = vpop.f32.mrb[0].mxu0
        %v3157 = vadd.f32 %v2925, %v3156
        %3158 = vmatprep.mubr.f32.mxu0 0.0
        %3159 = vmatmul.mubr.f32.gmra.mrb[0].mxu0 %v2551
        %v3160 = vpop.f32.mrb[0].mxu0
        %v3161 = vadd.f32 %v2922, %v3160
        %v3162 = vpop.f32.mrb[0].mxu0
        %v3163 = vadd.f32 %v2923, %v3162
        %3164 = vmatprep.mubr.f32.mxu0 0.0
        %3165 = vmatmul.mubr.f32.gmra.mrb[0].mxu0 %v2552
        %v3166 = vpop.f32.mrb[0].mxu0
        %v3167 = vadd.f32 %v2920, %v3166
        %v3168 = vpop.f32.mrb[0].mxu0
        %v3169 = vadd.f32 %v2921, %v3168
        %3170 = vmatprep.mubr.f32.mxu0 0.0
        %3171 = vmatmul.mubr.f32.gmra.mrb[0].mxu0 %v2553
        %v3172 = vpop.f32.mrb[0].mxu0
        %v3173 = vadd.f32 %v2918, %v3172
        %v3174 = vpop.f32.mrb[0].mxu0
        %v3175 = vadd.f32 %v2919, %v3174
        %3176 = vmatprep.mubr.f32.mxu0 0.0
        %3177 = vmatmul.mubr.f32.gmra.mrb[0].mxu0 %v2554
        %v3178 = vpop.f32.mrb[0].mxu0
        %v3179 = vadd.f32 %v2916, %v3178
        %v3180 = vpop.f32.mrb[0].mxu0
        %v3181 = vadd.f32 %v2917, %v3180
        %3182 = vmatprep.mubr.f32.mxu0 0.0
        %3183 = vmatmul.mubr.f32.gmra.mrb[0].mxu0 %v2555
        %v3184 = vpop.f32.mrb[0].mxu0
        %v3185 = vadd.f32 %v2914, %v3184
        %v3186 = vpop.f32.mrb[0].mxu0
        %v3187 = vadd.f32 %v2915, %v3186
        %3188 = vmatprep.mubr.f32.mxu0 0.0
        %3189 = vmatmul.mubr.f32.gmra.mrb[0].mxu0 %v2556
        %v3190 = vpop.f32.mrb[0].mxu0
        %v3191 = vadd.f32 %v2912, %v3190
        %v3192 = vpop.f32.mrb[0].mxu0
        %v3193 = vadd.f32 %v2913, %v3192
        %3194 = vmatprep.mubr.f32.mxu0 0.0
        %3195 = vmatmul.mubr.f32.gmra.mrb[0].mxu0 %v2557
        %v3196 = vpop.f32.mrb[0].mxu0
        %v3197 = vadd.f32 %v2966, %v3196
        %v3198 = vpop.f32.mrb[0].mxu0
        %v3199 = vadd.f32 %v2967, %v3198
        %3200 = vdwg.mxu0
        %s3201 = scalar_lea.vmem %s3, 512
        %v3202 = vld [vmem:[%s3201] sm:$0xff]
        %v3203 = vld [vmem:[%s3201 + $0x8] sm:$0xff]
        %v3204 = vld [vmem:[%s3201 + $0x10] sm:$0xff]
        %v3205 = vld [vmem:[%s3201 + $0x18] sm:$0xff]
        %v3206 = vld [vmem:[%s3201 + $0x20] sm:$0xff]
        %v3207 = vld [vmem:[%s3201 + $0x28] sm:$0xff]
        %v3208 = vld [vmem:[%s3201 + $0x30] sm:$0xff]
        %v3209 = vld [vmem:[%s3201 + $0x38] sm:$0xff]
        %v3210 = vld [vmem:[%s3201 + $0x40] sm:$0xff]
        %v3211 = vld [vmem:[%s3201 + $0x48] sm:$0xff]
        %v3212 = vld [vmem:[%s3201 + $0x50] sm:$0xff]
        %v3213 = vld [vmem:[%s3201 + $0x58] sm:$0xff]
        %v3214 = vld [vmem:[%s3201 + $0x60] sm:$0xff]
        %v3215 = vld [vmem:[%s3201 + $0x68] sm:$0xff]
        %v3216 = vld [vmem:[%s3201 + $0x70] sm:$0xff]
        %v3217 = vld [vmem:[%s3201 + $0x78] sm:$0xff]
        %v3218 = vld [vmem:[%s3201 + $0x80] sm:$0xff]
        %v3219 = vld [vmem:[%s3201 + $0x88] sm:$0xff]
        %v3220 = vld [vmem:[%s3201 + $0x90] sm:$0xff]
        %v3221 = vld [vmem:[%s3201 + $0x98] sm:$0xff]
        %v3222 = vld [vmem:[%s3201 + $0xa0] sm:$0xff]
        %v3223 = vld [vmem:[%s3201 + $0xa8] sm:$0xff]
        %v3224 = vld [vmem:[%s3201 + $0xb0] sm:$0xff]
        %v3225 = vld [vmem:[%s3201 + $0xb8] sm:$0xff]
        %v3226 = vld [vmem:[%s3201 + $0xc0] sm:$0xff]
        %v3227 = vld [vmem:[%s3201 + $0xc8] sm:$0xff]
        %v3228 = vld [vmem:[%s3201 + $0xd0] sm:$0xff]
        %v3229 = vld [vmem:[%s3201 + $0xd8] sm:$0xff]
        %v3230 = vld [vmem:[%s3201 + $0xe0] sm:$0xff]
        %v3231 = vld [vmem:[%s3201 + $0xe8] sm:$0xff]
        %v3232 = vld [vmem:[%s3201 + $0xf0] sm:$0xff]
        %v3233 = vld [vmem:[%s3201 + $0xf8] sm:$0xff]
        %3234 = vmatprep.subr.mxu0 %v3203
        %3235 = vmatpush1.msra.mxu0 %v3202
        %3236 = vmatprep.subr.mxu0 %v3205
        %3237 = vmatpush1.msra.mxu0 %v3204
        %3238 = vmatprep.subr.mxu0 %v3207
        %3239 = vmatpush1.msra.mxu0 %v3206
        %3240 = vmatprep.subr.mxu0 %v3209
        %3241 = vmatpush1.msra.mxu0 %v3208
        %3242 = vmatprep.subr.mxu0 %v3211
        %3243 = vmatpush1.msra.mxu0 %v3210
        %3244 = vmatprep.subr.mxu0 %v3213
        %3245 = vmatpush1.msra.mxu0 %v3212
        %3246 = vmatprep.subr.mxu0 %v3215
        %3247 = vmatpush1.msra.mxu0 %v3214
        %3248 = vmatprep.subr.mxu0 %v3217
        %3249 = vmatpush1.msra.mxu0 %v3216
        %3250 = vmatprep.subr.mxu0 %v3219
        %3251 = vmatpush1.msra.mxu0 %v3218
        %3252 = vmatprep.subr.mxu0 %v3221
        %3253 = vmatpush1.msra.mxu0 %v3220
        %3254 = vmatprep.subr.mxu0 %v3223
        %3255 = vmatpush1.msra.mxu0 %v3222
        %3256 = vmatprep.subr.mxu0 %v3225
        %3257 = vmatpush1.msra.mxu0 %v3224
        %3258 = vmatprep.subr.mxu0 %v3227
        %3259 = vmatpush1.msra.mxu0 %v3226
        %3260 = vmatprep.subr.mxu0 %v3229
        %3261 = vmatpush1.msra.mxu0 %v3228
        %3262 = vmatprep.subr.mxu0 %v3231
        %3263 = vmatpush1.msra.mxu0 %v3230
        %3264 = vmatprep.subr.mxu0 %v3233
        %3265 = vmatpush1.msra.mxu0 %v3232
        %3266 = vmatprep.subr.mxu0 0.0
        %3267 = vmatpush1.msra.mxu0 0.0
        %3268 = vmatprep.subr.mxu0 0.0
        %3269 = vmatpush1.msra.mxu0 0.0
        %3270 = vmatprep.subr.mxu0 0.0
        %3271 = vmatpush1.msra.mxu0 0.0
        %3272 = vmatprep.subr.mxu0 0.0
        %3273 = vmatpush1.msra.mxu0 0.0
        %3274 = vmatprep.subr.mxu0 0.0
        %3275 = vmatpush1.msra.mxu0 0.0
        %3276 = vmatprep.subr.mxu0 0.0
        %3277 = vmatpush1.msra.mxu0 0.0
        %3278 = vmatprep.subr.mxu0 0.0
        %3279 = vmatpush1.msra.mxu0 0.0
        %3280 = vmatprep.subr.mxu0 0.0
        %3281 = vmatpush1.msra.mxu0 0.0
        %3282 = vmatprep.subr.mxu0 0.0
        %3283 = vmatpush1.msra.mxu0 0.0
        %3284 = vmatprep.subr.mxu0 0.0
        %3285 = vmatpush1.msra.mxu0 0.0
        %3286 = vmatprep.subr.mxu0 0.0
        %3287 = vmatpush1.msra.mxu0 0.0
        %3288 = vmatprep.subr.mxu0 0.0
        %3289 = vmatpush1.msra.mxu0 0.0
        %3290 = vmatprep.subr.mxu0 0.0
        %3291 = vmatpush1.msra.mxu0 0.0
        %3292 = vmatprep.subr.mxu0 0.0
        %3293 = vmatpush1.msra.mxu0 0.0
        %3294 = vmatprep.subr.mxu0 0.0
        %3295 = vmatpush1.msra.mxu0 0.0
        %3296 = vmatprep.subr.mxu0 0.0
        %3297 = vmatpush1.msra.mxu0 0.0
        %3298 = vmatprep.mubr.f32.mxu0 0.0
        %3299 = vmatmul.mubr.f32.gmra.mrb[0].mxu0 %v2530
        %v3300 = vpop.f32.mrb[0].mxu0
        %v3301 = vadd.f32 0.0, %v3300
        %v3302 = vpop.f32.mrb[0].mxu0
        %v3303 = vadd.f32 0.0, %v3302
        %3304 = vmatprep.mubr.f32.mxu0 0.0
        %3305 = vmatmul.mubr.f32.gmra.mrb[0].mxu0 %v2531
        %v3306 = vpop.f32.mrb[0].mxu0
        %v3307 = vadd.f32 0.0, %v3306
        %v3308 = vpop.f32.mrb[0].mxu0
        %v3309 = vadd.f32 0.0, %v3308
        %3310 = vmatprep.mubr.f32.mxu0 0.0
        %3311 = vmatmul.mubr.f32.gmra.mrb[0].mxu0 %v2532
        %v3312 = vpop.f32.mrb[0].mxu0
        %v3313 = vadd.f32 0.0, %v3312
        %v3314 = vpop.f32.mrb[0].mxu0
        %v3315 = vadd.f32 0.0, %v3314
        %3316 = vmatprep.mubr.f32.mxu0 0.0
        %3317 = vmatmul.mubr.f32.gmra.mrb[0].mxu0 %v2533
        %v3318 = vpop.f32.mrb[0].mxu0
        %v3319 = vadd.f32 0.0, %v3318
        %v3320 = vpop.f32.mrb[0].mxu0
        %v3321 = vadd.f32 0.0, %v3320
        %3322 = vmatprep.mubr.f32.mxu0 0.0
        %3323 = vmatmul.mubr.f32.gmra.mrb[0].mxu0 %v2534
        %v3324 = vpop.f32.mrb[0].mxu0
        %v3325 = vadd.f32 0.0, %v3324
        %v3326 = vpop.f32.mrb[0].mxu0
        %v3327 = vadd.f32 0.0, %v3326
        %3328 = vmatprep.mubr.f32.mxu0 0.0
        %3329 = vmatmul.mubr.f32.gmra.mrb[0].mxu0 %v2535
        %v3330 = vpop.f32.mrb[0].mxu0
        %v3331 = vadd.f32 0.0, %v3330
        %v3332 = vpop.f32.mrb[0].mxu0
        %v3333 = vadd.f32 0.0, %v3332
        %3334 = vmatprep.mubr.f32.mxu0 0.0
        %3335 = vmatmul.mubr.f32.gmra.mrb[0].mxu0 %v2536
        %v3336 = vpop.f32.mrb[0].mxu0
        %v3337 = vadd.f32 0.0, %v3336
        %v3338 = vpop.f32.mrb[0].mxu0
        %v3339 = vadd.f32 0.0, %v3338
        %3340 = vmatprep.mubr.f32.mxu0 0.0
        %3341 = vmatmul.mubr.f32.gmra.mrb[0].mxu0 %v2537
        %v3342 = vpop.f32.mrb[0].mxu0
        %v3343 = vadd.f32 0.0, %v3342
        %v3344 = vpop.f32.mrb[0].mxu0
        %v3345 = vadd.f32 0.0, %v3344
        %3346 = vmatprep.mubr.f32.mxu0 0.0
        %3347 = vmatmul.mubr.f32.gmra.mrb[0].mxu0 %v2538
        %v3348 = vpop.f32.mrb[0].mxu0
        %v3349 = vadd.f32 0.0, %v3348
        %v3350 = vpop.f32.mrb[0].mxu0
        %v3351 = vadd.f32 0.0, %v3350
        %3352 = vmatprep.mubr.f32.mxu0 0.0
        %3353 = vmatmul.mubr.f32.gmra.mrb[0].mxu0 %v2539
        %v3354 = vpop.f32.mrb[0].mxu0
        %v3355 = vadd.f32 0.0, %v3354
        %v3356 = vpop.f32.mrb[0].mxu0
        %v3357 = vadd.f32 0.0, %v3356
        %3358 = vmatprep.mubr.f32.mxu0 0.0
        %3359 = vmatmul.mubr.f32.gmra.mrb[0].mxu0 %v2540
        %v3360 = vpop.f32.mrb[0].mxu0
        %v3361 = vadd.f32 0.0, %v3360
        %v3362 = vpop.f32.mrb[0].mxu0
        %v3363 = vadd.f32 0.0, %v3362
        %3364 = vmatprep.mubr.f32.mxu0 0.0
        %3365 = vmatmul.mubr.f32.gmra.mrb[0].mxu0 %v2541
        %v3366 = vpop.f32.mrb[0].mxu0
        %v3367 = vadd.f32 0.0, %v3366
        %v3368 = vpop.f32.mrb[0].mxu0
        %v3369 = vadd.f32 0.0, %v3368
        %3370 = vmatprep.mubr.f32.mxu0 0.0
        %3371 = vmatmul.mubr.f32.gmra.mrb[0].mxu0 %v2542
        %v3372 = vpop.f32.mrb[0].mxu0
        %v3373 = vadd.f32 0.0, %v3372
        %v3374 = vpop.f32.mrb[0].mxu0
        %v3375 = vadd.f32 0.0, %v3374
        %3376 = vmatprep.mubr.f32.mxu0 0.0
        %3377 = vmatmul.mubr.f32.gmra.mrb[0].mxu0 %v2543
        %v3378 = vpop.f32.mrb[0].mxu0
        %v3379 = vadd.f32 0.0, %v3378
        %v3380 = vpop.f32.mrb[0].mxu0
        %v3381 = vadd.f32 0.0, %v3380
        %3382 = vmatprep.mubr.f32.mxu0 0.0
        %3383 = vmatmul.mubr.f32.gmra.mrb[0].mxu0 %v2544
        %v3384 = vpop.f32.mrb[0].mxu0
        %v3385 = vadd.f32 0.0, %v3384
        %v3386 = vpop.f32.mrb[0].mxu0
        %v3387 = vadd.f32 0.0, %v3386
        %3388 = vmatprep.mubr.f32.mxu0 0.0
        %3389 = vmatmul.mubr.f32.gmra.mrb[0].mxu0 %v2545
        %v3390 = vpop.f32.mrb[0].mxu0
        %v3391 = vadd.f32 0.0, %v3390
        %v3392 = vpop.f32.mrb[0].mxu0
        %v3393 = vadd.f32 0.0, %v3392
        %3394 = vmatprep.mubr.f32.mxu0 0.0
        %3395 = vmatmul.mubr.f32.gmra.mrb[0].mxu0 %v2546
        %v3396 = vpop.f32.mrb[0].mxu0
        %v3397 = vadd.f32 0.0, %v3396
        %v3398 = vpop.f32.mrb[0].mxu0
        %v3399 = vadd.f32 0.0, %v3398
        %3400 = vmatprep.mubr.f32.mxu0 0.0
        %3401 = vmatmul.mubr.f32.gmra.mrb[0].mxu0 %v2547
        %v3402 = vpop.f32.mrb[0].mxu0
        %v3403 = vadd.f32 0.0, %v3402
        %v3404 = vpop.f32.mrb[0].mxu0
        %v3405 = vadd.f32 0.0, %v3404
        %3406 = vmatprep.mubr.f32.mxu0 0.0
        %3407 = vmatmul.mubr.f32.gmra.mrb[0].mxu0 %v2548
        %v3408 = vpop.f32.mrb[0].mxu0
        %v3409 = vadd.f32 0.0, %v3408
        %v3410 = vpop.f32.mrb[0].mxu0
        %v3411 = vadd.f32 0.0, %v3410
        %3412 = vmatprep.mubr.f32.mxu0 0.0
        %3413 = vmatmul.mubr.f32.gmra.mrb[0].mxu0 %v2549
        %v3414 = vpop.f32.mrb[0].mxu0
        %v3415 = vadd.f32 0.0, %v3414
        %v3416 = vpop.f32.mrb[0].mxu0
        %v3417 = vadd.f32 0.0, %v3416
        %3418 = vmatprep.mubr.f32.mxu0 0.0
        %3419 = vmatmul.mubr.f32.gmra.mrb[0].mxu0 %v2550
        %v3420 = vpop.f32.mrb[0].mxu0
        %v3421 = vadd.f32 0.0, %v3420
        %v3422 = vpop.f32.mrb[0].mxu0
        %v3423 = vadd.f32 0.0, %v3422
        %3424 = vmatprep.mubr.f32.mxu0 0.0
        %3425 = vmatmul.mubr.f32.gmra.mrb[0].mxu0 %v2551
        %v3426 = vpop.f32.mrb[0].mxu0
        %v3427 = vadd.f32 0.0, %v3426
        %v3428 = vpop.f32.mrb[0].mxu0
        %v3429 = vadd.f32 0.0, %v3428
        %3430 = vmatprep.mubr.f32.mxu0 0.0
        %3431 = vmatmul.mubr.f32.gmra.mrb[0].mxu0 %v2552
        %v3432 = vpop.f32.mrb[0].mxu0
        %v3433 = vadd.f32 0.0, %v3432
        %v3434 = vpop.f32.mrb[0].mxu0
        %v3435 = vadd.f32 0.0, %v3434
        %3436 = vmatprep.mubr.f32.mxu0 0.0
        %3437 = vmatmul.mubr.f32.gmra.mrb[0].mxu0 %v2553
        %v3438 = vpop.f32.mrb[0].mxu0
        %v3439 = vadd.f32 0.0, %v3438
        %v3440 = vpop.f32.mrb[0].mxu0
        %v3441 = vadd.f32 0.0, %v3440
        %3442 = vmatprep.mubr.f32.mxu0 0.0
        %3443 = vmatmul.mubr.f32.gmra.mrb[0].mxu0 %v2554
        %v3444 = vpop.f32.mrb[0].mxu0
        %v3445 = vadd.f32 0.0, %v3444
        %v3446 = vpop.f32.mrb[0].mxu0
        %v3447 = vadd.f32 0.0, %v3446
        %3448 = vmatprep.mubr.f32.mxu0 0.0
        %3449 = vmatmul.mubr.f32.gmra.mrb[0].mxu0 %v2555
        %v3450 = vpop.f32.mrb[0].mxu0
        %v3451 = vadd.f32 0.0, %v3450
        %v3452 = vpop.f32.mrb[0].mxu0
        %v3453 = vadd.f32 0.0, %v3452
        %3454 = vmatprep.mubr.f32.mxu0 0.0
        %3455 = vmatmul.mubr.f32.gmra.mrb[0].mxu0 %v2556
        %v3456 = vpop.f32.mrb[0].mxu0
        %v3457 = vadd.f32 0.0, %v3456
        %v3458 = vpop.f32.mrb[0].mxu0
        %v3459 = vadd.f32 0.0, %v3458
        %3460 = vmatprep.mubr.f32.mxu0 0.0
        %3461 = vmatmul.mubr.f32.gmra.mrb[0].mxu0 %v2557
        %v3462 = vpop.f32.mrb[0].mxu0
        %v3463 = vadd.f32 0.0, %v3462
        %v3464 = vpop.f32.mrb[0].mxu0
        %v3465 = vadd.f32 0.0, %v3464
        %3466 = vdwg.mxu0
        %v3467 = vrot.slane %v3301, 4
        %v3468 = vrot.slane %v3303, 4
        %v3469 = vrot.slane %v3307, 4
        %v3470 = vrot.slane %v3309, 4
        %v3471 = vrot.slane %v3313, 4
        %v3472 = vrot.slane %v3315, 4
        %v3473 = vrot.slane %v3319, 4
        %v3474 = vrot.slane %v3321, 4
        %v3475 = vrot.slane %v3325, 4
        %v3476 = vrot.slane %v3327, 4
        %v3477 = vrot.slane %v3331, 4
        %v3478 = vrot.slane %v3333, 4
        %v3479 = vrot.slane %v3337, 4
        %v3480 = vrot.slane %v3339, 4
        %v3481 = vrot.slane %v3343, 4
        %v3482 = vrot.slane %v3345, 4
        %v3483 = vrot.slane %v3349, 4
        %v3484 = vrot.slane %v3351, 4
        %v3485 = vrot.slane %v3355, 4
        %v3486 = vrot.slane %v3357, 4
        %v3487 = vrot.slane %v3361, 4
        %v3488 = vrot.slane %v3363, 4
        %v3489 = vrot.slane %v3367, 4
        %v3490 = vrot.slane %v3369, 4
        %v3491 = vrot.slane %v3373, 4
        %v3492 = vrot.slane %v3375, 4
        %v3493 = vrot.slane %v3379, 4
        %v3494 = vrot.slane %v3381, 4
        %v3495 = vrot.slane %v3385, 4
        %v3496 = vrot.slane %v3387, 4
        %v3497 = vrot.slane %v3391, 4
        %v3498 = vrot.slane %v3393, 4
        %v3499 = vrot.slane %v3397, 4
        %v3500 = vrot.slane %v3399, 4
        %v3501 = vrot.slane %v3403, 4
        %v3502 = vrot.slane %v3405, 4
        %v3503 = vrot.slane %v3409, 4
        %v3504 = vrot.slane %v3411, 4
        %v3505 = vrot.slane %v3415, 4
        %v3506 = vrot.slane %v3417, 4
        %v3507 = vrot.slane %v3421, 4
        %v3508 = vrot.slane %v3423, 4
        %v3509 = vrot.slane %v3427, 4
        %v3510 = vrot.slane %v3429, 4
        %v3511 = vrot.slane %v3433, 4
        %v3512 = vrot.slane %v3435, 4
        %v3513 = vrot.slane %v3439, 4
        %v3514 = vrot.slane %v3441, 4
        %v3515 = vrot.slane %v3445, 4
        %v3516 = vrot.slane %v3447, 4
        %v3517 = vrot.slane %v3451, 4
        %v3518 = vrot.slane %v3453, 4
        %v3519 = vrot.slane %v3457, 4
        %v3520 = vrot.slane %v3459, 4
        %v3521 = vrot.slane %v3463, 4
        %v3522 = vrot.slane %v3465, 4
        %v3523 = vsel %vm2237, %v3519, %v3521
        %v3524 = vsel %vm2237, %v3520, %v3522
        %v3525 = vsel %vm2237, %v3517, %v3519
        %v3526 = vsel %vm2237, %v3518, %v3520
        %v3527 = vsel %vm2237, %v3515, %v3517
        %v3528 = vsel %vm2237, %v3516, %v3518
        %v3529 = vsel %vm2237, %v3513, %v3515
        %v3530 = vsel %vm2237, %v3514, %v3516
        %v3531 = vsel %vm2237, %v3511, %v3513
        %v3532 = vsel %vm2237, %v3512, %v3514
        %v3533 = vsel %vm2237, %v3509, %v3511
        %v3534 = vsel %vm2237, %v3510, %v3512
        %v3535 = vsel %vm2237, %v3507, %v3509
        %v3536 = vsel %vm2237, %v3508, %v3510
        %v3537 = vsel %vm2237, %v3505, %v3507
        %v3538 = vsel %vm2237, %v3506, %v3508
        %v3539 = vsel %vm2237, %v3503, %v3505
        %v3540 = vsel %vm2237, %v3504, %v3506
        %v3541 = vsel %vm2237, %v3501, %v3503
        %v3542 = vsel %vm2237, %v3502, %v3504
        %v3543 = vsel %vm2237, %v3499, %v3501
        %v3544 = vsel %vm2237, %v3500, %v3502
        %v3545 = vsel %vm2237, %v3497, %v3499
        %v3546 = vsel %vm2237, %v3498, %v3500
        %v3547 = vsel %vm2237, %v3495, %v3497
        %v3548 = vsel %vm2237, %v3496, %v3498
        %v3549 = vsel %vm2237, %v3493, %v3495
        %v3550 = vsel %vm2237, %v3494, %v3496
        %v3551 = vsel %vm2237, %v3491, %v3493
        %v3552 = vsel %vm2237, %v3492, %v3494
        %v3553 = vsel %vm2237, %v3489, %v3491
        %v3554 = vsel %vm2237, %v3490, %v3492
        %v3555 = vsel %vm2237, %v3487, %v3489
        %v3556 = vsel %vm2237, %v3488, %v3490
        %v3557 = vsel %vm2237, %v3485, %v3487
        %v3558 = vsel %vm2237, %v3486, %v3488
        %v3559 = vsel %vm2237, %v3483, %v3485
        %v3560 = vsel %vm2237, %v3484, %v3486
        %v3561 = vsel %vm2237, %v3481, %v3483
        %v3562 = vsel %vm2237, %v3482, %v3484
        %v3563 = vsel %vm2237, %v3479, %v3481
        %v3564 = vsel %vm2237, %v3480, %v3482
        %v3565 = vsel %vm2237, %v3477, %v3479
        %v3566 = vsel %vm2237, %v3478, %v3480
        %v3567 = vsel %vm2237, %v3475, %v3477
        %v3568 = vsel %vm2237, %v3476, %v3478
        %v3569 = vsel %vm2237, %v3473, %v3475
        %v3570 = vsel %vm2237, %v3474, %v3476
        %v3571 = vsel %vm2237, %v3471, %v3473
        %v3572 = vsel %vm2237, %v3472, %v3474
        %v3573 = vsel %vm2237, %v3469, %v3471
        %v3574 = vsel %vm2237, %v3470, %v3472
        %v3575 = vsel %vm2237, %v3467, %v3469
        %v3576 = vsel %vm2237, %v3468, %v3470
        %v3577 = vsel %vm2237, %v3521, %v3467
        %v3578 = vsel %vm2237, %v3522, %v3468
        %v3579 = vadd.f32 %v3035, %v3575
        %v3580 = vadd.f32 %v3037, %v3576
        %v3581 = vadd.f32 %v3041, %v3573
        %v3582 = vadd.f32 %v3043, %v3574
        %v3583 = vadd.f32 %v3047, %v3571
        %v3584 = vadd.f32 %v3049, %v3572
        %v3585 = vadd.f32 %v3053, %v3569
        %v3586 = vadd.f32 %v3055, %v3570
        %v3587 = vadd.f32 %v3059, %v3567
        %v3588 = vadd.f32 %v3061, %v3568
        %v3589 = vadd.f32 %v3065, %v3565
        %v3590 = vadd.f32 %v3067, %v3566
        %v3591 = vadd.f32 %v3071, %v3563
        %v3592 = vadd.f32 %v3073, %v3564
        %v3593 = vadd.f32 %v3077, %v3561
        %v3594 = vadd.f32 %v3079, %v3562
        %v3595 = vadd.f32 %v3083, %v3559
        %v3596 = vadd.f32 %v3085, %v3560
        %v3597 = vadd.f32 %v3089, %v3557
        %v3598 = vadd.f32 %v3091, %v3558
        %v3599 = vadd.f32 %v3095, %v3555
        %v3600 = vadd.f32 %v3097, %v3556
        %v3601 = vadd.f32 %v3101, %v3553
        %v3602 = vadd.f32 %v3103, %v3554
        %v3603 = vadd.f32 %v3107, %v3551
        %v3604 = vadd.f32 %v3109, %v3552
        %v3605 = vadd.f32 %v3113, %v3549
        %v3606 = vadd.f32 %v3115, %v3550
        %v3607 = vadd.f32 %v3119, %v3547
        %v3608 = vadd.f32 %v3121, %v3548
        %v3609 = vadd.f32 %v3125, %v3545
        %v3610 = vadd.f32 %v3127, %v3546
        %v3611 = vadd.f32 %v3131, %v3543
        %v3612 = vadd.f32 %v3133, %v3544
        %v3613 = vadd.f32 %v3137, %v3541
        %v3614 = vadd.f32 %v3139, %v3542
        %v3615 = vadd.f32 %v3143, %v3539
        %v3616 = vadd.f32 %v3145, %v3540
        %v3617 = vadd.f32 %v3149, %v3537
        %v3618 = vadd.f32 %v3151, %v3538
        %v3619 = vadd.f32 %v3155, %v3535
        %v3620 = vadd.f32 %v3157, %v3536
        %v3621 = vadd.f32 %v3161, %v3533
        %v3622 = vadd.f32 %v3163, %v3534
        %v3623 = vadd.f32 %v3167, %v3531
        %v3624 = vadd.f32 %v3169, %v3532
        %v3625 = vadd.f32 %v3173, %v3529
        %v3626 = vadd.f32 %v3175, %v3530
        %v3627 = vadd.f32 %v3179, %v3527
        %v3628 = vadd.f32 %v3181, %v3528
        %v3629 = vadd.f32 %v3185, %v3525
        %v3630 = vadd.f32 %v3187, %v3526
        %v3631 = vadd.f32 %v3191, %v3523
        %v3632 = vadd.f32 %v3193, %v3524
        %v3633 = vadd.f32 %v3197, %v3577
        %v3634 = vadd.f32 %v3199, %v3578
        %s3635 = scalar_lea.vmem %s3, 768
        %v3636 = vld [vmem:[%s3635] sm:$0xff]
        %v3637 = vld [vmem:[%s3635 + $0x8] sm:$0xff]
        %v3638 = vld [vmem:[%s3635 + $0x10] sm:$0xff]
        %v3639 = vld [vmem:[%s3635 + $0x18] sm:$0xff]
        %v3640 = vld [vmem:[%s3635 + $0x20] sm:$0xff]
        %v3641 = vld [vmem:[%s3635 + $0x28] sm:$0xff]
        %v3642 = vld [vmem:[%s3635 + $0x30] sm:$0xff]
        %v3643 = vld [vmem:[%s3635 + $0x38] sm:$0xff]
        %v3644 = vld [vmem:[%s3635 + $0x40] sm:$0xff]
        %v3645 = vld [vmem:[%s3635 + $0x48] sm:$0xff]
        %v3646 = vld [vmem:[%s3635 + $0x50] sm:$0xff]
        %v3647 = vld [vmem:[%s3635 + $0x58] sm:$0xff]
        %v3648 = vld [vmem:[%s3635 + $0x60] sm:$0xff]
        %v3649 = vld [vmem:[%s3635 + $0x68] sm:$0xff]
        %v3650 = vld [vmem:[%s3635 + $0x70] sm:$0xff]
        %v3651 = vld [vmem:[%s3635 + $0x78] sm:$0xff]
        %v3652 = vld [vmem:[%s3635 + $0x80] sm:$0xff]
        %v3653 = vld [vmem:[%s3635 + $0x88] sm:$0xff]
        %v3654 = vld [vmem:[%s3635 + $0x90] sm:$0xff]
        %v3655 = vld [vmem:[%s3635 + $0x98] sm:$0xff]
        %v3656 = vld [vmem:[%s3635 + $0xa0] sm:$0xff]
        %v3657 = vld [vmem:[%s3635 + $0xa8] sm:$0xff]
        %v3658 = vld [vmem:[%s3635 + $0xb0] sm:$0xff]
        %v3659 = vld [vmem:[%s3635 + $0xb8] sm:$0xff]
        %v3660 = vld [vmem:[%s3635 + $0xc0] sm:$0xff]
        %v3661 = vld [vmem:[%s3635 + $0xc8] sm:$0xff]
        %v3662 = vld [vmem:[%s3635 + $0xd0] sm:$0xff]
        %v3663 = vld [vmem:[%s3635 + $0xd8] sm:$0xff]
        %v3664 = vld [vmem:[%s3635 + $0xe0] sm:$0xff]
        %v3665 = vld [vmem:[%s3635 + $0xe8] sm:$0xff]
        %v3666 = vld [vmem:[%s3635 + $0xf0] sm:$0xff]
        %v3667 = vld [vmem:[%s3635 + $0xf8] sm:$0xff]
        %3668 = vmatprep.subr.mxu0 %v3637
        %3669 = vmatpush1.msra.mxu0 %v3636
        %3670 = vmatprep.subr.mxu0 %v3639
        %3671 = vmatpush1.msra.mxu0 %v3638
        %3672 = vmatprep.subr.mxu0 %v3641
        %3673 = vmatpush1.msra.mxu0 %v3640
        %3674 = vmatprep.subr.mxu0 %v3643
        %3675 = vmatpush1.msra.mxu0 %v3642
        %3676 = vmatprep.subr.mxu0 %v3645
        %3677 = vmatpush1.msra.mxu0 %v3644
        %3678 = vmatprep.subr.mxu0 %v3647
        %3679 = vmatpush1.msra.mxu0 %v3646
        %3680 = vmatprep.subr.mxu0 %v3649
        %3681 = vmatpush1.msra.mxu0 %v3648
        %3682 = vmatprep.subr.mxu0 %v3651
        %3683 = vmatpush1.msra.mxu0 %v3650
        %3684 = vmatprep.subr.mxu0 %v3653
        %3685 = vmatpush1.msra.mxu0 %v3652
        %3686 = vmatprep.subr.mxu0 %v3655
        %3687 = vmatpush1.msra.mxu0 %v3654
        %3688 = vmatprep.subr.mxu0 %v3657
        %3689 = vmatpush1.msra.mxu0 %v3656
        %3690 = vmatprep.subr.mxu0 %v3659
        %3691 = vmatpush1.msra.mxu0 %v3658
        %3692 = vmatprep.subr.mxu0 %v3661
        %3693 = vmatpush1.msra.mxu0 %v3660
        %3694 = vmatprep.subr.mxu0 %v3663
        %3695 = vmatpush1.msra.mxu0 %v3662
        %3696 = vmatprep.subr.mxu0 %v3665
        %3697 = vmatpush1.msra.mxu0 %v3664
        %3698 = vmatprep.subr.mxu0 %v3667
        %3699 = vmatpush1.msra.mxu0 %v3666
        %3700 = vmatprep.subr.mxu0 0.0
        %3701 = vmatpush1.msra.mxu0 0.0
        %3702 = vmatprep.subr.mxu0 0.0
        %3703 = vmatpush1.msra.mxu0 0.0
        %3704 = vmatprep.subr.mxu0 0.0
        %3705 = vmatpush1.msra.mxu0 0.0
        %3706 = vmatprep.subr.mxu0 0.0
        %3707 = vmatpush1.msra.mxu0 0.0
        %3708 = vmatprep.subr.mxu0 0.0
        %3709 = vmatpush1.msra.mxu0 0.0
        %3710 = vmatprep.subr.mxu0 0.0
        %3711 = vmatpush1.msra.mxu0 0.0
        %3712 = vmatprep.subr.mxu0 0.0
        %3713 = vmatpush1.msra.mxu0 0.0
        %3714 = vmatprep.subr.mxu0 0.0
        %3715 = vmatpush1.msra.mxu0 0.0
        %3716 = vmatprep.subr.mxu0 0.0
        %3717 = vmatpush1.msra.mxu0 0.0
        %3718 = vmatprep.subr.mxu0 0.0
        %3719 = vmatpush1.msra.mxu0 0.0
        %3720 = vmatprep.subr.mxu0 0.0
        %3721 = vmatpush1.msra.mxu0 0.0
        %3722 = vmatprep.subr.mxu0 0.0
        %3723 = vmatpush1.msra.mxu0 0.0
        %3724 = vmatprep.subr.mxu0 0.0
        %3725 = vmatpush1.msra.mxu0 0.0
        %3726 = vmatprep.subr.mxu0 0.0
        %3727 = vmatpush1.msra.mxu0 0.0
        %3728 = vmatprep.subr.mxu0 0.0
        %3729 = vmatpush1.msra.mxu0 0.0
        %3730 = vmatprep.subr.mxu0 0.0
        %3731 = vmatpush1.msra.mxu0 0.0
        %3732 = vmatprep.mubr.f32.mxu0 0.0
        %3733 = vmatmul.mubr.f32.gmra.mrb[0].mxu0 %v2530
        %v3734 = vpop.f32.mrb[0].mxu0
        %v3735 = vadd.f32 0.0, %v3734
        %v3736 = vpop.f32.mrb[0].mxu0
        %v3737 = vadd.f32 0.0, %v3736
        %3738 = vmatprep.mubr.f32.mxu0 0.0
        %3739 = vmatmul.mubr.f32.gmra.mrb[0].mxu0 %v2531
        %v3740 = vpop.f32.mrb[0].mxu0
        %v3741 = vadd.f32 0.0, %v3740
        %v3742 = vpop.f32.mrb[0].mxu0
        %v3743 = vadd.f32 0.0, %v3742
        %3744 = vmatprep.mubr.f32.mxu0 0.0
        %3745 = vmatmul.mubr.f32.gmra.mrb[0].mxu0 %v2532
        %v3746 = vpop.f32.mrb[0].mxu0
        %v3747 = vadd.f32 0.0, %v3746
        %v3748 = vpop.f32.mrb[0].mxu0
        %v3749 = vadd.f32 0.0, %v3748
        %3750 = vmatprep.mubr.f32.mxu0 0.0
        %3751 = vmatmul.mubr.f32.gmra.mrb[0].mxu0 %v2533
        %v3752 = vpop.f32.mrb[0].mxu0
        %v3753 = vadd.f32 0.0, %v3752
        %v3754 = vpop.f32.mrb[0].mxu0
        %v3755 = vadd.f32 0.0, %v3754
        %3756 = vmatprep.mubr.f32.mxu0 0.0
        %3757 = vmatmul.mubr.f32.gmra.mrb[0].mxu0 %v2534
        %v3758 = vpop.f32.mrb[0].mxu0
        %v3759 = vadd.f32 0.0, %v3758
        %v3760 = vpop.f32.mrb[0].mxu0
        %v3761 = vadd.f32 0.0, %v3760
        %3762 = vmatprep.mubr.f32.mxu0 0.0
        %3763 = vmatmul.mubr.f32.gmra.mrb[0].mxu0 %v2535
        %v3764 = vpop.f32.mrb[0].mxu0
        %v3765 = vadd.f32 0.0, %v3764
        %v3766 = vpop.f32.mrb[0].mxu0
        %v3767 = vadd.f32 0.0, %v3766
        %3768 = vmatprep.mubr.f32.mxu0 0.0
        %3769 = vmatmul.mubr.f32.gmra.mrb[0].mxu0 %v2536
        %v3770 = vpop.f32.mrb[0].mxu0
        %v3771 = vadd.f32 0.0, %v3770
        %v3772 = vpop.f32.mrb[0].mxu0
        %v3773 = vadd.f32 0.0, %v3772
        %3774 = vmatprep.mubr.f32.mxu0 0.0
        %3775 = vmatmul.mubr.f32.gmra.mrb[0].mxu0 %v2537
        %v3776 = vpop.f32.mrb[0].mxu0
        %v3777 = vadd.f32 0.0, %v3776
        %v3778 = vpop.f32.mrb[0].mxu0
        %v3779 = vadd.f32 0.0, %v3778
        %3780 = vmatprep.mubr.f32.mxu0 0.0
        %3781 = vmatmul.mubr.f32.gmra.mrb[0].mxu0 %v2538
        %v3782 = vpop.f32.mrb[0].mxu0
        %v3783 = vadd.f32 0.0, %v3782
        %v3784 = vpop.f32.mrb[0].mxu0
        %v3785 = vadd.f32 0.0, %v3784
        %3786 = vmatprep.mubr.f32.mxu0 0.0
        %3787 = vmatmul.mubr.f32.gmra.mrb[0].mxu0 %v2539
        %v3788 = vpop.f32.mrb[0].mxu0
        %v3789 = vadd.f32 0.0, %v3788
        %v3790 = vpop.f32.mrb[0].mxu0
        %v3791 = vadd.f32 0.0, %v3790
        %3792 = vmatprep.mubr.f32.mxu0 0.0
        %3793 = vmatmul.mubr.f32.gmra.mrb[0].mxu0 %v2540
        %v3794 = vpop.f32.mrb[0].mxu0
        %v3795 = vadd.f32 0.0, %v3794
        %v3796 = vpop.f32.mrb[0].mxu0
        %v3797 = vadd.f32 0.0, %v3796
        %3798 = vmatprep.mubr.f32.mxu0 0.0
        %3799 = vmatmul.mubr.f32.gmra.mrb[0].mxu0 %v2541
        %v3800 = vpop.f32.mrb[0].mxu0
        %v3801 = vadd.f32 0.0, %v3800
        %v3802 = vpop.f32.mrb[0].mxu0
        %v3803 = vadd.f32 0.0, %v3802
        %3804 = vmatprep.mubr.f32.mxu0 0.0
        %3805 = vmatmul.mubr.f32.gmra.mrb[0].mxu0 %v2542
        %v3806 = vpop.f32.mrb[0].mxu0
        %v3807 = vadd.f32 0.0, %v3806
        %v3808 = vpop.f32.mrb[0].mxu0
        %v3809 = vadd.f32 0.0, %v3808
        %3810 = vmatprep.mubr.f32.mxu0 0.0
        %3811 = vmatmul.mubr.f32.gmra.mrb[0].mxu0 %v2543
        %v3812 = vpop.f32.mrb[0].mxu0
        %v3813 = vadd.f32 0.0, %v3812
        %v3814 = vpop.f32.mrb[0].mxu0
        %v3815 = vadd.f32 0.0, %v3814
        %3816 = vmatprep.mubr.f32.mxu0 0.0
        %3817 = vmatmul.mubr.f32.gmra.mrb[0].mxu0 %v2544
        %v3818 = vpop.f32.mrb[0].mxu0
        %v3819 = vadd.f32 0.0, %v3818
        %v3820 = vpop.f32.mrb[0].mxu0
        %v3821 = vadd.f32 0.0, %v3820
        %3822 = vmatprep.mubr.f32.mxu0 0.0
        %3823 = vmatmul.mubr.f32.gmra.mrb[0].mxu0 %v2545
        %v3824 = vpop.f32.mrb[0].mxu0
        %v3825 = vadd.f32 0.0, %v3824
        %v3826 = vpop.f32.mrb[0].mxu0
        %v3827 = vadd.f32 0.0, %v3826
        %3828 = vmatprep.mubr.f32.mxu0 0.0
        %3829 = vmatmul.mubr.f32.gmra.mrb[0].mxu0 %v2546
        %v3830 = vpop.f32.mrb[0].mxu0
        %v3831 = vadd.f32 0.0, %v3830
        %v3832 = vpop.f32.mrb[0].mxu0
        %v3833 = vadd.f32 0.0, %v3832
        %3834 = vmatprep.mubr.f32.mxu0 0.0
        %3835 = vmatmul.mubr.f32.gmra.mrb[0].mxu0 %v2547
        %v3836 = vpop.f32.mrb[0].mxu0
        %v3837 = vadd.f32 0.0, %v3836
        %v3838 = vpop.f32.mrb[0].mxu0
        %v3839 = vadd.f32 0.0, %v3838
        %3840 = vmatprep.mubr.f32.mxu0 0.0
        %3841 = vmatmul.mubr.f32.gmra.mrb[0].mxu0 %v2548
        %v3842 = vpop.f32.mrb[0].mxu0
        %v3843 = vadd.f32 0.0, %v3842
        %v3844 = vpop.f32.mrb[0].mxu0
        %v3845 = vadd.f32 0.0, %v3844
        %3846 = vmatprep.mubr.f32.mxu0 0.0
        %3847 = vmatmul.mubr.f32.gmra.mrb[0].mxu0 %v2549
        %v3848 = vpop.f32.mrb[0].mxu0
        %v3849 = vadd.f32 0.0, %v3848
        %v3850 = vpop.f32.mrb[0].mxu0
        %v3851 = vadd.f32 0.0, %v3850
        %3852 = vmatprep.mubr.f32.mxu0 0.0
        %3853 = vmatmul.mubr.f32.gmra.mrb[0].mxu0 %v2550
        %v3854 = vpop.f32.mrb[0].mxu0
        %v3855 = vadd.f32 0.0, %v3854
        %v3856 = vpop.f32.mrb[0].mxu0
        %v3857 = vadd.f32 0.0, %v3856
        %3858 = vmatprep.mubr.f32.mxu0 0.0
        %3859 = vmatmul.mubr.f32.gmra.mrb[0].mxu0 %v2551
        %v3860 = vpop.f32.mrb[0].mxu0
        %v3861 = vadd.f32 0.0, %v3860
        %v3862 = vpop.f32.mrb[0].mxu0
        %v3863 = vadd.f32 0.0, %v3862
        %3864 = vmatprep.mubr.f32.mxu0 0.0
        %3865 = vmatmul.mubr.f32.gmra.mrb[0].mxu0 %v2552
        %v3866 = vpop.f32.mrb[0].mxu0
        %v3867 = vadd.f32 0.0, %v3866
        %v3868 = vpop.f32.mrb[0].mxu0
        %v3869 = vadd.f32 0.0, %v3868
        %3870 = vmatprep.mubr.f32.mxu0 0.0
        %3871 = vmatmul.mubr.f32.gmra.mrb[0].mxu0 %v2553
        %v3872 = vpop.f32.mrb[0].mxu0
        %v3873 = vadd.f32 0.0, %v3872
        %v3874 = vpop.f32.mrb[0].mxu0
        %v3875 = vadd.f32 0.0, %v3874
        %3876 = vmatprep.mubr.f32.mxu0 0.0
        %3877 = vmatmul.mubr.f32.gmra.mrb[0].mxu0 %v2554
        %v3878 = vpop.f32.mrb[0].mxu0
        %v3879 = vadd.f32 0.0, %v3878
        %v3880 = vpop.f32.mrb[0].mxu0
        %v3881 = vadd.f32 0.0, %v3880
        %3882 = vmatprep.mubr.f32.mxu0 0.0
        %3883 = vmatmul.mubr.f32.gmra.mrb[0].mxu0 %v2555
        %v3884 = vpop.f32.mrb[0].mxu0
        %v3885 = vadd.f32 0.0, %v3884
        %v3886 = vpop.f32.mrb[0].mxu0
        %v3887 = vadd.f32 0.0, %v3886
        %3888 = vmatprep.mubr.f32.mxu0 0.0
        %3889 = vmatmul.mubr.f32.gmra.mrb[0].mxu0 %v2556
        %v3890 = vpop.f32.mrb[0].mxu0
        %v3891 = vadd.f32 0.0, %v3890
        %v3892 = vpop.f32.mrb[0].mxu0
        %v3893 = vadd.f32 0.0, %v3892
        %3894 = vmatprep.mubr.f32.mxu0 0.0
        %3895 = vmatmul.mubr.f32.gmra.mrb[0].mxu0 %v2557
        %v3896 = vpop.f32.mrb[0].mxu0
        %v3897 = vadd.f32 0.0, %v3896
        %v3898 = vpop.f32.mrb[0].mxu0
        %v3899 = vadd.f32 0.0, %v3898
        %3900 = vdwg.mxu0
        %v3901 = vrot.slane %v3735, 6
        %v3902 = vrot.slane %v3737, 6
        %v3903 = vrot.slane %v3741, 6
        %v3904 = vrot.slane %v3743, 6
        %v3905 = vrot.slane %v3747, 6
        %v3906 = vrot.slane %v3749, 6
        %v3907 = vrot.slane %v3753, 6
        %v3908 = vrot.slane %v3755, 6
        %v3909 = vrot.slane %v3759, 6
        %v3910 = vrot.slane %v3761, 6
        %v3911 = vrot.slane %v3765, 6
        %v3912 = vrot.slane %v3767, 6
        %v3913 = vrot.slane %v3771, 6
        %v3914 = vrot.slane %v3773, 6
        %v3915 = vrot.slane %v3777, 6
        %v3916 = vrot.slane %v3779, 6
        %v3917 = vrot.slane %v3783, 6
        %v3918 = vrot.slane %v3785, 6
        %v3919 = vrot.slane %v3789, 6
        %v3920 = vrot.slane %v3791, 6
        %v3921 = vrot.slane %v3795, 6
        %v3922 = vrot.slane %v3797, 6
        %v3923 = vrot.slane %v3801, 6
        %v3924 = vrot.slane %v3803, 6
        %v3925 = vrot.slane %v3807, 6
        %v3926 = vrot.slane %v3809, 6
        %v3927 = vrot.slane %v3813, 6
        %v3928 = vrot.slane %v3815, 6
        %v3929 = vrot.slane %v3819, 6
        %v3930 = vrot.slane %v3821, 6
        %v3931 = vrot.slane %v3825, 6
        %v3932 = vrot.slane %v3827, 6
        %v3933 = vrot.slane %v3831, 6
        %v3934 = vrot.slane %v3833, 6
        %v3935 = vrot.slane %v3837, 6
        %v3936 = vrot.slane %v3839, 6
        %v3937 = vrot.slane %v3843, 6
        %v3938 = vrot.slane %v3845, 6
        %v3939 = vrot.slane %v3849, 6
        %v3940 = vrot.slane %v3851, 6
        %v3941 = vrot.slane %v3855, 6
        %v3942 = vrot.slane %v3857, 6
        %v3943 = vrot.slane %v3861, 6
        %v3944 = vrot.slane %v3863, 6
        %v3945 = vrot.slane %v3867, 6
        %v3946 = vrot.slane %v3869, 6
        %v3947 = vrot.slane %v3873, 6
        %v3948 = vrot.slane %v3875, 6
        %v3949 = vrot.slane %v3879, 6
        %v3950 = vrot.slane %v3881, 6
        %v3951 = vrot.slane %v3885, 6
        %v3952 = vrot.slane %v3887, 6
        %v3953 = vrot.slane %v3891, 6
        %v3954 = vrot.slane %v3893, 6
        %v3955 = vrot.slane %v3897, 6
        %v3956 = vrot.slane %v3899, 6
        %vm3957 = vcmp.lt.s32.totalorder %v802, 2
        %v3958 = vsel %vm3957, %v3953, %v3955
        %v3959 = vsel %vm3957, %v3954, %v3956
        %v3960 = vsel %vm3957, %v3951, %v3953
        %v3961 = vsel %vm3957, %v3952, %v3954
        %v3962 = vsel %vm3957, %v3949, %v3951
        %v3963 = vsel %vm3957, %v3950, %v3952
        %v3964 = vsel %vm3957, %v3947, %v3949
        %v3965 = vsel %vm3957, %v3948, %v3950
        %v3966 = vsel %vm3957, %v3945, %v3947
        %v3967 = vsel %vm3957, %v3946, %v3948
        %v3968 = vsel %vm3957, %v3943, %v3945
        %v3969 = vsel %vm3957, %v3944, %v3946
        %v3970 = vsel %vm3957, %v3941, %v3943
        %v3971 = vsel %vm3957, %v3942, %v3944
        %v3972 = vsel %vm3957, %v3939, %v3941
        %v3973 = vsel %vm3957, %v3940, %v3942
        %v3974 = vsel %vm3957, %v3937, %v3939
        %v3975 = vsel %vm3957, %v3938, %v3940
        %v3976 = vsel %vm3957, %v3935, %v3937
        %v3977 = vsel %vm3957, %v3936, %v3938
        %v3978 = vsel %vm3957, %v3933, %v3935
        %v3979 = vsel %vm3957, %v3934, %v3936
        %v3980 = vsel %vm3957, %v3931, %v3933
        %v3981 = vsel %vm3957, %v3932, %v3934
        %v3982 = vsel %vm3957, %v3929, %v3931
        %v3983 = vsel %vm3957, %v3930, %v3932
        %v3984 = vsel %vm3957, %v3927, %v3929
        %v3985 = vsel %vm3957, %v3928, %v3930
        %v3986 = vsel %vm3957, %v3925, %v3927
        %v3987 = vsel %vm3957, %v3926, %v3928
        %v3988 = vsel %vm3957, %v3923, %v3925
        %v3989 = vsel %vm3957, %v3924, %v3926
        %v3990 = vsel %vm3957, %v3921, %v3923
        %v3991 = vsel %vm3957, %v3922, %v3924
        %v3992 = vsel %vm3957, %v3919, %v3921
        %v3993 = vsel %vm3957, %v3920, %v3922
        %v3994 = vsel %vm3957, %v3917, %v3919
        %v3995 = vsel %vm3957, %v3918, %v3920
        %v3996 = vsel %vm3957, %v3915, %v3917
        %v3997 = vsel %vm3957, %v3916, %v3918
        %v3998 = vsel %vm3957, %v3913, %v3915
        %v3999 = vsel %vm3957, %v3914, %v3916
        %v4000 = vsel %vm3957, %v3911, %v3913
        %v4001 = vsel %vm3957, %v3912, %v3914
        %v4002 = vsel %vm3957, %v3909, %v3911
        %v4003 = vsel %vm3957, %v3910, %v3912
        %v4004 = vsel %vm3957, %v3907, %v3909
        %v4005 = vsel %vm3957, %v3908, %v3910
        %v4006 = vsel %vm3957, %v3905, %v3907
        %v4007 = vsel %vm3957, %v3906, %v3908
        %v4008 = vsel %vm3957, %v3903, %v3905
        %v4009 = vsel %vm3957, %v3904, %v3906
        %v4010 = vsel %vm3957, %v3901, %v3903
        %v4011 = vsel %vm3957, %v3902, %v3904
        %v4012 = vsel %vm3957, %v3955, %v3901
        %v4013 = vsel %vm3957, %v3956, %v3902
        %v4014 = vadd.f32 %v3579, %v4010
        %v4015 = vadd.f32 %v3580, %v4011
        %v4016 = vadd.f32 %v3581, %v4008
        %v4017 = vadd.f32 %v3582, %v4009
        %v4018 = vadd.f32 %v3583, %v4006
        %v4019 = vadd.f32 %v3584, %v4007
        %v4020 = vadd.f32 %v3585, %v4004
        %v4021 = vadd.f32 %v3586, %v4005
        %v4022 = vadd.f32 %v3587, %v4002
        %v4023 = vadd.f32 %v3588, %v4003
        %v4024 = vadd.f32 %v3589, %v4000
        %v4025 = vadd.f32 %v3590, %v4001
        %v4026 = vadd.f32 %v3591, %v3998
        %v4027 = vadd.f32 %v3592, %v3999
        %v4028 = vadd.f32 %v3593, %v3996
        %v4029 = vadd.f32 %v3594, %v3997
        %v4030 = vadd.f32 %v3595, %v3994
        %v4031 = vadd.f32 %v3596, %v3995
        %v4032 = vadd.f32 %v3597, %v3992
        %v4033 = vadd.f32 %v3598, %v3993
        %v4034 = vadd.f32 %v3599, %v3990
        %v4035 = vadd.f32 %v3600, %v3991
        %v4036 = vadd.f32 %v3601, %v3988
        %v4037 = vadd.f32 %v3602, %v3989
        %v4038 = vadd.f32 %v3603, %v3986
        %v4039 = vadd.f32 %v3604, %v3987
        %v4040 = vadd.f32 %v3605, %v3984
        %v4041 = vadd.f32 %v3606, %v3985
        %v4042 = vadd.f32 %v3607, %v3982
        %v4043 = vadd.f32 %v3608, %v3983
        %v4044 = vadd.f32 %v3609, %v3980
        %v4045 = vadd.f32 %v3610, %v3981
        %v4046 = vadd.f32 %v3611, %v3978
        %v4047 = vadd.f32 %v3612, %v3979
        %v4048 = vadd.f32 %v3613, %v3976
        %v4049 = vadd.f32 %v3614, %v3977
        %v4050 = vadd.f32 %v3615, %v3974
        %v4051 = vadd.f32 %v3616, %v3975
        %v4052 = vadd.f32 %v3617, %v3972
        %v4053 = vadd.f32 %v3618, %v3973
        %v4054 = vadd.f32 %v3619, %v3970
        %v4055 = vadd.f32 %v3620, %v3971
        %v4056 = vadd.f32 %v3621, %v3968
        %v4057 = vadd.f32 %v3622, %v3969
        %v4058 = vadd.f32 %v3623, %v3966
        %v4059 = vadd.f32 %v3624, %v3967
        %v4060 = vadd.f32 %v3625, %v3964
        %v4061 = vadd.f32 %v3626, %v3965
        %v4062 = vadd.f32 %v3627, %v3962
        %v4063 = vadd.f32 %v3628, %v3963
        %v4064 = vadd.f32 %v3629, %v3960
        %v4065 = vadd.f32 %v3630, %v3961
        %v4066 = vadd.f32 %v3631, %v3958
        %v4067 = vadd.f32 %v3632, %v3959
        %v4068 = vadd.f32 %v3633, %v4012
        %v4069 = vadd.f32 %v3634, %v4013
        %s4070 = scalar_lea.vmem %s3, 1024
        %v4071 = vld [vmem:[%s4070] sm:$0xff]
        %v4072 = vld [vmem:[%s4070 + $0x8] sm:$0xff]
        %v4073 = vld [vmem:[%s4070 + $0x10] sm:$0xff]
        %v4074 = vld [vmem:[%s4070 + $0x18] sm:$0xff]
        %v4075 = vld [vmem:[%s4070 + $0x20] sm:$0xff]
        %v4076 = vld [vmem:[%s4070 + $0x28] sm:$0xff]
        %v4077 = vld [vmem:[%s4070 + $0x30] sm:$0xff]
        %v4078 = vld [vmem:[%s4070 + $0x38] sm:$0xff]
        %v4079 = vld [vmem:[%s4070 + $0x40] sm:$0xff]
        %v4080 = vld [vmem:[%s4070 + $0x48] sm:$0xff]
        %v4081 = vld [vmem:[%s4070 + $0x50] sm:$0xff]
        %v4082 = vld [vmem:[%s4070 + $0x58] sm:$0xff]
        %v4083 = vld [vmem:[%s4070 + $0x60] sm:$0xff]
        %v4084 = vld [vmem:[%s4070 + $0x68] sm:$0xff]
        %v4085 = vld [vmem:[%s4070 + $0x70] sm:$0xff]
        %v4086 = vld [vmem:[%s4070 + $0x78] sm:$0xff]
        %v4087 = vld [vmem:[%s4070 + $0x80] sm:$0xff]
        %v4088 = vld [vmem:[%s4070 + $0x88] sm:$0xff]
        %v4089 = vld [vmem:[%s4070 + $0x90] sm:$0xff]
        %v4090 = vld [vmem:[%s4070 + $0x98] sm:$0xff]
        %v4091 = vld [vmem:[%s4070 + $0xa0] sm:$0xff]
        %v4092 = vld [vmem:[%s4070 + $0xa8] sm:$0xff]
        %v4093 = vld [vmem:[%s4070 + $0xb0] sm:$0xff]
        %v4094 = vld [vmem:[%s4070 + $0xb8] sm:$0xff]
        %v4095 = vld [vmem:[%s4070 + $0xc0] sm:$0xff]
        %v4096 = vld [vmem:[%s4070 + $0xc8] sm:$0xff]
        %v4097 = vld [vmem:[%s4070 + $0xd0] sm:$0xff]
        %v4098 = vld [vmem:[%s4070 + $0xd8] sm:$0xff]
        %v4099 = vld [vmem:[%s4070 + $0xe0] sm:$0xff]
        %v4100 = vld [vmem:[%s4070 + $0xe8] sm:$0xff]
        %v4101 = vld [vmem:[%s4070 + $0xf0] sm:$0xff]
        %v4102 = vld [vmem:[%s4070 + $0xf8] sm:$0xff]
        %4103 = vmatprep.subr.mxu0 %v4072
        %4104 = vmatpush1.msra.mxu0 %v4071
        %4105 = vmatprep.subr.mxu0 %v4074
        %4106 = vmatpush1.msra.mxu0 %v4073
        %4107 = vmatprep.subr.mxu0 %v4076
        %4108 = vmatpush1.msra.mxu0 %v4075
        %4109 = vmatprep.subr.mxu0 %v4078
        %4110 = vmatpush1.msra.mxu0 %v4077
        %4111 = vmatprep.subr.mxu0 %v4080
        %4112 = vmatpush1.msra.mxu0 %v4079
        %4113 = vmatprep.subr.mxu0 %v4082
        %4114 = vmatpush1.msra.mxu0 %v4081
        %4115 = vmatprep.subr.mxu0 %v4084
        %4116 = vmatpush1.msra.mxu0 %v4083
        %4117 = vmatprep.subr.mxu0 %v4086
        %4118 = vmatpush1.msra.mxu0 %v4085
        %4119 = vmatprep.subr.mxu0 %v4088
        %4120 = vmatpush1.msra.mxu0 %v4087
        %4121 = vmatprep.subr.mxu0 %v4090
        %4122 = vmatpush1.msra.mxu0 %v4089
        %4123 = vmatprep.subr.mxu0 %v4092
        %4124 = vmatpush1.msra.mxu0 %v4091
        %4125 = vmatprep.subr.mxu0 %v4094
        %4126 = vmatpush1.msra.mxu0 %v4093
        %4127 = vmatprep.subr.mxu0 %v4096
        %4128 = vmatpush1.msra.mxu0 %v4095
        %4129 = vmatprep.subr.mxu0 %v4098
        %4130 = vmatpush1.msra.mxu0 %v4097
        %4131 = vmatprep.subr.mxu0 %v4100
        %4132 = vmatpush1.msra.mxu0 %v4099
        %4133 = vmatprep.subr.mxu0 %v4102
        %4134 = vmatpush1.msra.mxu0 %v4101
        %4135 = vmatprep.subr.mxu0 0.0
        %4136 = vmatpush1.msra.mxu0 0.0
        %4137 = vmatprep.subr.mxu0 0.0
        %4138 = vmatpush1.msra.mxu0 0.0
        %4139 = vmatprep.subr.mxu0 0.0
        %4140 = vmatpush1.msra.mxu0 0.0
        %4141 = vmatprep.subr.mxu0 0.0
        %4142 = vmatpush1.msra.mxu0 0.0
        %4143 = vmatprep.subr.mxu0 0.0
        %4144 = vmatpush1.msra.mxu0 0.0
        %4145 = vmatprep.subr.mxu0 0.0
        %4146 = vmatpush1.msra.mxu0 0.0
        %4147 = vmatprep.subr.mxu0 0.0
        %4148 = vmatpush1.msra.mxu0 0.0
        %4149 = vmatprep.subr.mxu0 0.0
        %4150 = vmatpush1.msra.mxu0 0.0
        %4151 = vmatprep.subr.mxu0 0.0
        %4152 = vmatpush1.msra.mxu0 0.0
        %4153 = vmatprep.subr.mxu0 0.0
        %4154 = vmatpush1.msra.mxu0 0.0
        %4155 = vmatprep.subr.mxu0 0.0
        %4156 = vmatpush1.msra.mxu0 0.0
        %4157 = vmatprep.subr.mxu0 0.0
        %4158 = vmatpush1.msra.mxu0 0.0
        %4159 = vmatprep.subr.mxu0 0.0
        %4160 = vmatpush1.msra.mxu0 0.0
        %4161 = vmatprep.subr.mxu0 0.0
        %4162 = vmatpush1.msra.mxu0 0.0
        %4163 = vmatprep.subr.mxu0 0.0
        %4164 = vmatpush1.msra.mxu0 0.0
        %4165 = vmatprep.subr.mxu0 0.0
        %4166 = vmatpush1.msra.mxu0 0.0
        %4167 = vmatprep.mubr.f32.mxu0 0.0
        %4168 = vmatmul.mubr.f32.gmra.mrb[0].mxu0 %v2530
        %v4169 = vpop.f32.mrb[0].mxu0
        %v4170 = vadd.f32 0.0, %v4169
        %v4171 = vpop.f32.mrb[0].mxu0
        %v4172 = vadd.f32 0.0, %v4171
        %4173 = vmatprep.mubr.f32.mxu0 0.0
        %4174 = vmatmul.mubr.f32.gmra.mrb[0].mxu0 %v2531
        %v4175 = vpop.f32.mrb[0].mxu0
        %v4176 = vadd.f32 0.0, %v4175
        %v4177 = vpop.f32.mrb[0].mxu0
        %v4178 = vadd.f32 0.0, %v4177
        %4179 = vmatprep.mubr.f32.mxu0 0.0
        %4180 = vmatmul.mubr.f32.gmra.mrb[0].mxu0 %v2532
        %v4181 = vpop.f32.mrb[0].mxu0
        %v4182 = vadd.f32 0.0, %v4181
        %v4183 = vpop.f32.mrb[0].mxu0
        %v4184 = vadd.f32 0.0, %v4183
        %4185 = vmatprep.mubr.f32.mxu0 0.0
        %4186 = vmatmul.mubr.f32.gmra.mrb[0].mxu0 %v2533
        %v4187 = vpop.f32.mrb[0].mxu0
        %v4188 = vadd.f32 0.0, %v4187
        %v4189 = vpop.f32.mrb[0].mxu0
        %v4190 = vadd.f32 0.0, %v4189
        %4191 = vmatprep.mubr.f32.mxu0 0.0
        %4192 = vmatmul.mubr.f32.gmra.mrb[0].mxu0 %v2534
        %v4193 = vpop.f32.mrb[0].mxu0
        %v4194 = vadd.f32 0.0, %v4193
        %v4195 = vpop.f32.mrb[0].mxu0
        %v4196 = vadd.f32 0.0, %v4195
        %4197 = vmatprep.mubr.f32.mxu0 0.0
        %4198 = vmatmul.mubr.f32.gmra.mrb[0].mxu0 %v2535
        %v4199 = vpop.f32.mrb[0].mxu0
        %v4200 = vadd.f32 0.0, %v4199
        %v4201 = vpop.f32.mrb[0].mxu0
        %v4202 = vadd.f32 0.0, %v4201
        %4203 = vmatprep.mubr.f32.mxu0 0.0
        %4204 = vmatmul.mubr.f32.gmra.mrb[0].mxu0 %v2536
        %v4205 = vpop.f32.mrb[0].mxu0
        %v4206 = vadd.f32 0.0, %v4205
        %v4207 = vpop.f32.mrb[0].mxu0
        %v4208 = vadd.f32 0.0, %v4207
        %4209 = vmatprep.mubr.f32.mxu0 0.0
        %4210 = vmatmul.mubr.f32.gmra.mrb[0].mxu0 %v2537
        %v4211 = vpop.f32.mrb[0].mxu0
        %v4212 = vadd.f32 0.0, %v4211
        %v4213 = vpop.f32.mrb[0].mxu0
        %v4214 = vadd.f32 0.0, %v4213
        %4215 = vmatprep.mubr.f32.mxu0 0.0
        %4216 = vmatmul.mubr.f32.gmra.mrb[0].mxu0 %v2538
        %v4217 = vpop.f32.mrb[0].mxu0
        %v4218 = vadd.f32 0.0, %v4217
        %v4219 = vpop.f32.mrb[0].mxu0
        %v4220 = vadd.f32 0.0, %v4219
        %4221 = vmatprep.mubr.f32.mxu0 0.0
        %4222 = vmatmul.mubr.f32.gmra.mrb[0].mxu0 %v2539
        %v4223 = vpop.f32.mrb[0].mxu0
        %v4224 = vadd.f32 0.0, %v4223
        %v4225 = vpop.f32.mrb[0].mxu0
        %v4226 = vadd.f32 0.0, %v4225
        %4227 = vmatprep.mubr.f32.mxu0 0.0
        %4228 = vmatmul.mubr.f32.gmra.mrb[0].mxu0 %v2540
        %v4229 = vpop.f32.mrb[0].mxu0
        %v4230 = vadd.f32 0.0, %v4229
        %v4231 = vpop.f32.mrb[0].mxu0
        %v4232 = vadd.f32 0.0, %v4231
        %4233 = vmatprep.mubr.f32.mxu0 0.0
        %4234 = vmatmul.mubr.f32.gmra.mrb[0].mxu0 %v2541
        %v4235 = vpop.f32.mrb[0].mxu0
        %v4236 = vadd.f32 0.0, %v4235
        %v4237 = vpop.f32.mrb[0].mxu0
        %v4238 = vadd.f32 0.0, %v4237
        %4239 = vmatprep.mubr.f32.mxu0 0.0
        %4240 = vmatmul.mubr.f32.gmra.mrb[0].mxu0 %v2542
        %v4241 = vpop.f32.mrb[0].mxu0
        %v4242 = vadd.f32 0.0, %v4241
        %v4243 = vpop.f32.mrb[0].mxu0
        %v4244 = vadd.f32 0.0, %v4243
        %4245 = vmatprep.mubr.f32.mxu0 0.0
        %4246 = vmatmul.mubr.f32.gmra.mrb[0].mxu0 %v2543
        %v4247 = vpop.f32.mrb[0].mxu0
        %v4248 = vadd.f32 0.0, %v4247
        %v4249 = vpop.f32.mrb[0].mxu0
        %v4250 = vadd.f32 0.0, %v4249
        %4251 = vmatprep.mubr.f32.mxu0 0.0
        %4252 = vmatmul.mubr.f32.gmra.mrb[0].mxu0 %v2544
        %v4253 = vpop.f32.mrb[0].mxu0
        %v4254 = vadd.f32 0.0, %v4253
        %v4255 = vpop.f32.mrb[0].mxu0
        %v4256 = vadd.f32 0.0, %v4255
        %4257 = vmatprep.mubr.f32.mxu0 0.0
        %4258 = vmatmul.mubr.f32.gmra.mrb[0].mxu0 %v2545
        %v4259 = vpop.f32.mrb[0].mxu0
        %v4260 = vadd.f32 0.0, %v4259
        %v4261 = vpop.f32.mrb[0].mxu0
        %v4262 = vadd.f32 0.0, %v4261
        %4263 = vmatprep.mubr.f32.mxu0 0.0
        %4264 = vmatmul.mubr.f32.gmra.mrb[0].mxu0 %v2546
        %v4265 = vpop.f32.mrb[0].mxu0
        %v4266 = vadd.f32 0.0, %v4265
        %v4267 = vpop.f32.mrb[0].mxu0
        %v4268 = vadd.f32 0.0, %v4267
        %4269 = vmatprep.mubr.f32.mxu0 0.0
        %4270 = vmatmul.mubr.f32.gmra.mrb[0].mxu0 %v2547
        %v4271 = vpop.f32.mrb[0].mxu0
        %v4272 = vadd.f32 0.0, %v4271
        %v4273 = vpop.f32.mrb[0].mxu0
        %v4274 = vadd.f32 0.0, %v4273
        %4275 = vmatprep.mubr.f32.mxu0 0.0
        %4276 = vmatmul.mubr.f32.gmra.mrb[0].mxu0 %v2548
        %v4277 = vpop.f32.mrb[0].mxu0
        %v4278 = vadd.f32 0.0, %v4277
        %v4279 = vpop.f32.mrb[0].mxu0
        %v4280 = vadd.f32 0.0, %v4279
        %4281 = vmatprep.mubr.f32.mxu0 0.0
        %4282 = vmatmul.mubr.f32.gmra.mrb[0].mxu0 %v2549
        %v4283 = vpop.f32.mrb[0].mxu0
        %v4284 = vadd.f32 0.0, %v4283
        %v4285 = vpop.f32.mrb[0].mxu0
        %v4286 = vadd.f32 0.0, %v4285
        %4287 = vmatprep.mubr.f32.mxu0 0.0
        %4288 = vmatmul.mubr.f32.gmra.mrb[0].mxu0 %v2550
        %v4289 = vpop.f32.mrb[0].mxu0
        %v4290 = vadd.f32 0.0, %v4289
        %v4291 = vpop.f32.mrb[0].mxu0
        %v4292 = vadd.f32 0.0, %v4291
        %4293 = vmatprep.mubr.f32.mxu0 0.0
        %4294 = vmatmul.mubr.f32.gmra.mrb[0].mxu0 %v2551
        %v4295 = vpop.f32.mrb[0].mxu0
        %v4296 = vadd.f32 0.0, %v4295
        %v4297 = vpop.f32.mrb[0].mxu0
        %v4298 = vadd.f32 0.0, %v4297
        %4299 = vmatprep.mubr.f32.mxu0 0.0
        %4300 = vmatmul.mubr.f32.gmra.mrb[0].mxu0 %v2552
        %v4301 = vpop.f32.mrb[0].mxu0
        %v4302 = vadd.f32 0.0, %v4301
        %v4303 = vpop.f32.mrb[0].mxu0
        %v4304 = vadd.f32 0.0, %v4303
        %4305 = vmatprep.mubr.f32.mxu0 0.0
        %4306 = vmatmul.mubr.f32.gmra.mrb[0].mxu0 %v2553
        %v4307 = vpop.f32.mrb[0].mxu0
        %v4308 = vadd.f32 0.0, %v4307
        %v4309 = vpop.f32.mrb[0].mxu0
        %v4310 = vadd.f32 0.0, %v4309
        %4311 = vmatprep.mubr.f32.mxu0 0.0
        %4312 = vmatmul.mubr.f32.gmra.mrb[0].mxu0 %v2554
        %v4313 = vpop.f32.mrb[0].mxu0
        %v4314 = vadd.f32 0.0, %v4313
        %v4315 = vpop.f32.mrb[0].mxu0
        %v4316 = vadd.f32 0.0, %v4315
        %4317 = vmatprep.mubr.f32.mxu0 0.0
        %4318 = vmatmul.mubr.f32.gmra.mrb[0].mxu0 %v2555
        %v4319 = vpop.f32.mrb[0].mxu0
        %v4320 = vadd.f32 0.0, %v4319
        %v4321 = vpop.f32.mrb[0].mxu0
        %v4322 = vadd.f32 0.0, %v4321
        %4323 = vmatprep.mubr.f32.mxu0 0.0
        %4324 = vmatmul.mubr.f32.gmra.mrb[0].mxu0 %v2556
        %v4325 = vpop.f32.mrb[0].mxu0
        %v4326 = vadd.f32 0.0, %v4325
        %v4327 = vpop.f32.mrb[0].mxu0
        %v4328 = vadd.f32 0.0, %v4327
        %4329 = vmatprep.mubr.f32.mxu0 0.0
        %4330 = vmatmul.mubr.f32.gmra.mrb[0].mxu0 %v2557
        %v4331 = vpop.f32.mrb[0].mxu0
        %v4332 = vadd.f32 0.0, %v4331
        %v4333 = vpop.f32.mrb[0].mxu0
        %v4334 = vadd.f32 0.0, %v4333
        %4335 = vdwg.mxu0
        %v4336 = vadd.f32 %v4014, %v4176
        %v4337 = vadd.f32 %v4015, %v4178
        %v4338 = vadd.f32 %v4016, %v4182
        %v4339 = vadd.f32 %v4017, %v4184
        %v4340 = vadd.f32 %v4018, %v4188
        %v4341 = vadd.f32 %v4019, %v4190
        %v4342 = vadd.f32 %v4020, %v4194
        %v4343 = vadd.f32 %v4021, %v4196
        %v4344 = vadd.f32 %v4022, %v4200
        %v4345 = vadd.f32 %v4023, %v4202
        %v4346 = vadd.f32 %v4024, %v4206
        %v4347 = vadd.f32 %v4025, %v4208
        %v4348 = vadd.f32 %v4026, %v4212
        %v4349 = vadd.f32 %v4027, %v4214
        %v4350 = vadd.f32 %v4028, %v4218
        %v4351 = vadd.f32 %v4029, %v4220
        %v4352 = vadd.f32 %v4030, %v4224
        %v4353 = vadd.f32 %v4031, %v4226
        %v4354 = vadd.f32 %v4032, %v4230
        %v4355 = vadd.f32 %v4033, %v4232
        %v4356 = vadd.f32 %v4034, %v4236
        %v4357 = vadd.f32 %v4035, %v4238
        %v4358 = vadd.f32 %v4036, %v4242
        %v4359 = vadd.f32 %v4037, %v4244
        %v4360 = vadd.f32 %v4038, %v4248
        %v4361 = vadd.f32 %v4039, %v4250
        %v4362 = vadd.f32 %v4040, %v4254
        %v4363 = vadd.f32 %v4041, %v4256
        %v4364 = vadd.f32 %v4042, %v4260
        %v4365 = vadd.f32 %v4043, %v4262
        %v4366 = vadd.f32 %v4044, %v4266
        %v4367 = vadd.f32 %v4045, %v4268
        %v4368 = vadd.f32 %v4046, %v4272
        %v4369 = vadd.f32 %v4047, %v4274
        %v4370 = vadd.f32 %v4048, %v4278
        %v4371 = vadd.f32 %v4049, %v4280
        %v4372 = vadd.f32 %v4050, %v4284
        %v4373 = vadd.f32 %v4051, %v4286
        %v4374 = vadd.f32 %v4052, %v4290
        %v4375 = vadd.f32 %v4053, %v4292
        %v4376 = vadd.f32 %v4054, %v4296
        %v4377 = vadd.f32 %v4055, %v4298
        %v4378 = vadd.f32 %v4056, %v4302
        %v4379 = vadd.f32 %v4057, %v4304
        %v4380 = vadd.f32 %v4058, %v4308
        %v4381 = vadd.f32 %v4059, %v4310
        %v4382 = vadd.f32 %v4060, %v4314
        %v4383 = vadd.f32 %v4061, %v4316
        %v4384 = vadd.f32 %v4062, %v4320
        %v4385 = vadd.f32 %v4063, %v4322
        %v4386 = vadd.f32 %v4064, %v4326
        %v4387 = vadd.f32 %v4065, %v4328
        %v4388 = vadd.f32 %v4066, %v4332
        %v4389 = vadd.f32 %v4067, %v4334
        %v4390 = vadd.f32 %v4068, %v4170
        %v4391 = vadd.f32 %v4069, %v4172
        %v4392 = vld [vmem:[%s4] sm:$0x3]
        %v4394 = vlaneseq
        %v4395 = vshrl.u32 %v4394, 7
        %v4396 = vsub.s32 0, %v4395
        %v4397 = vrot.slane %v4392, %v4396
        %v4398 = vlaneseq
        %v4399 = vshrl.u32 %v4398, 7
        %v4400 = vsub.s32 1, %v4399
        %v4401 = vrot.slane %v4392, %v4400
        %v4404 = vadd.f32 %v4336, %v4397
        %v4405 = vadd.f32 %v4337, %v4401
        %v4406 = vadd.f32 %v4338, %v4397
        %v4407 = vadd.f32 %v4339, %v4401
        %v4408 = vadd.f32 %v4340, %v4397
        %v4409 = vadd.f32 %v4341, %v4401
        %v4410 = vadd.f32 %v4342, %v4397
        %v4411 = vadd.f32 %v4343, %v4401
        %v4412 = vadd.f32 %v4344, %v4397
        %v4413 = vadd.f32 %v4345, %v4401
        %v4414 = vadd.f32 %v4346, %v4397
        %v4415 = vadd.f32 %v4347, %v4401
        %v4416 = vadd.f32 %v4348, %v4397
        %v4417 = vadd.f32 %v4349, %v4401
        %v4418 = vadd.f32 %v4350, %v4397
        %v4419 = vadd.f32 %v4351, %v4401
        %v4420 = vadd.f32 %v4352, %v4397
        %v4421 = vadd.f32 %v4353, %v4401
        %v4422 = vadd.f32 %v4354, %v4397
        %v4423 = vadd.f32 %v4355, %v4401
        %v4424 = vadd.f32 %v4356, %v4397
        %v4425 = vadd.f32 %v4357, %v4401
        %v4426 = vadd.f32 %v4358, %v4397
        %v4427 = vadd.f32 %v4359, %v4401
        %v4428 = vadd.f32 %v4360, %v4397
        %v4429 = vadd.f32 %v4361, %v4401
        %v4430 = vadd.f32 %v4362, %v4397
        %v4431 = vadd.f32 %v4363, %v4401
        %v4432 = vadd.f32 %v4364, %v4397
        %v4433 = vadd.f32 %v4365, %v4401
        %v4434 = vadd.f32 %v4366, %v4397
        %v4435 = vadd.f32 %v4367, %v4401
        %v4436 = vadd.f32 %v4368, %v4397
        %v4437 = vadd.f32 %v4369, %v4401
        %v4438 = vadd.f32 %v4370, %v4397
        %v4439 = vadd.f32 %v4371, %v4401
        %v4440 = vadd.f32 %v4372, %v4397
        %v4441 = vadd.f32 %v4373, %v4401
        %v4442 = vadd.f32 %v4374, %v4397
        %v4443 = vadd.f32 %v4375, %v4401
        %v4444 = vadd.f32 %v4376, %v4397
        %v4445 = vadd.f32 %v4377, %v4401
        %v4446 = vadd.f32 %v4378, %v4397
        %v4447 = vadd.f32 %v4379, %v4401
        %v4448 = vadd.f32 %v4380, %v4397
        %v4449 = vadd.f32 %v4381, %v4401
        %v4450 = vadd.f32 %v4382, %v4397
        %v4451 = vadd.f32 %v4383, %v4401
        %v4452 = vadd.f32 %v4384, %v4397
        %v4453 = vadd.f32 %v4385, %v4401
        %v4454 = vadd.f32 %v4386, %v4397
        %v4455 = vadd.f32 %v4387, %v4401
        %v4456 = vadd.f32 %v4388, %v4397
        %v4457 = vadd.f32 %v4389, %v4401
        %v4458 = vadd.f32 %v4390, %v4397
        %v4459 = vadd.f32 %v4391, %v4401
        %v4460 = vmax.f32 %v4404, %v4405
        %v4461 = vmax.f32 %v4406, %v4407
        %v4462 = vmax.f32 %v4408, %v4409
        %v4463 = vmax.f32 %v4410, %v4411
        %v4464 = vmax.f32 %v4412, %v4413
        %v4465 = vmax.f32 %v4414, %v4415
        %v4466 = vmax.f32 %v4416, %v4417
        %v4467 = vmax.f32 %v4418, %v4419
        %v4468 = vmax.f32 %v4420, %v4421
        %v4469 = vmax.f32 %v4422, %v4423
        %v4470 = vmax.f32 %v4424, %v4425
        %v4471 = vmax.f32 %v4426, %v4427
        %v4472 = vmax.f32 %v4428, %v4429
        %v4473 = vmax.f32 %v4430, %v4431
        %v4474 = vmax.f32 %v4432, %v4433
        %v4475 = vmax.f32 %v4434, %v4435
        %v4476 = vmax.f32 %v4436, %v4437
        %v4477 = vmax.f32 %v4438, %v4439
        %v4478 = vmax.f32 %v4440, %v4441
        %v4479 = vmax.f32 %v4442, %v4443
        %v4480 = vmax.f32 %v4444, %v4445
        %v4481 = vmax.f32 %v4446, %v4447
        %v4482 = vmax.f32 %v4448, %v4449
        %v4483 = vmax.f32 %v4450, %v4451
        %v4484 = vmax.f32 %v4452, %v4453
        %v4485 = vmax.f32 %v4454, %v4455
        %v4486 = vmax.f32 %v4456, %v4457
        %v4487 = vmax.f32 %v4458, %v4459
        %v4488 = vrot.slane %v4460, 2
        %v4489 = vrot.slane %v4461, 2
        %v4490 = vrot.slane %v4462, 2
        %v4491 = vrot.slane %v4463, 2
        %v4492 = vrot.slane %v4464, 2
        %v4493 = vrot.slane %v4465, 2
        %v4494 = vrot.slane %v4466, 2
        %v4495 = vrot.slane %v4467, 2
        %v4496 = vrot.slane %v4468, 2
        %v4497 = vrot.slane %v4469, 2
        %v4498 = vrot.slane %v4470, 2
        %v4499 = vrot.slane %v4471, 2
        %v4500 = vrot.slane %v4472, 2
        %v4501 = vrot.slane %v4473, 2
        %v4502 = vrot.slane %v4474, 2
        %v4503 = vrot.slane %v4475, 2
        %v4504 = vrot.slane %v4476, 2
        %v4505 = vrot.slane %v4477, 2
        %v4506 = vrot.slane %v4478, 2
        %v4507 = vrot.slane %v4479, 2
        %v4508 = vrot.slane %v4480, 2
        %v4509 = vrot.slane %v4481, 2
        %v4510 = vrot.slane %v4482, 2
        %v4511 = vrot.slane %v4483, 2
        %v4512 = vrot.slane %v4484, 2
        %v4513 = vrot.slane %v4485, 2
        %v4514 = vrot.slane %v4486, 2
        %v4515 = vrot.slane %v4487, 2
        %v4516 = vsel %vm1403, %v4514, %v4515
        %v4517 = vsel %vm1403, %v4513, %v4514
        %v4518 = vsel %vm1403, %v4512, %v4513
        %v4519 = vsel %vm1403, %v4511, %v4512
        %v4520 = vsel %vm1403, %v4510, %v4511
        %v4521 = vsel %vm1403, %v4509, %v4510
        %v4522 = vsel %vm1403, %v4508, %v4509
        %v4523 = vsel %vm1403, %v4507, %v4508
        %v4524 = vsel %vm1403, %v4506, %v4507
        %v4525 = vsel %vm1403, %v4505, %v4506
        %v4526 = vsel %vm1403, %v4504, %v4505
        %v4527 = vsel %vm1403, %v4503, %v4504
        %v4528 = vsel %vm1403, %v4502, %v4503
        %v4529 = vsel %vm1403, %v4501, %v4502
        %v4530 = vsel %vm1403, %v4500, %v4501
        %v4531 = vsel %vm1403, %v4499, %v4500
        %v4532 = vsel %vm1403, %v4498, %v4499
        %v4533 = vsel %vm1403, %v4497, %v4498
        %v4534 = vsel %vm1403, %v4496, %v4497
        %v4535 = vsel %vm1403, %v4495, %v4496
        %v4536 = vsel %vm1403, %v4494, %v4495
        %v4537 = vsel %vm1403, %v4493, %v4494
        %v4538 = vsel %vm1403, %v4492, %v4493
        %v4539 = vsel %vm1403, %v4491, %v4492
        %v4540 = vsel %vm1403, %v4490, %v4491
        %v4541 = vsel %vm1403, %v4489, %v4490
        %v4542 = vsel %vm1403, %v4488, %v4489
        %v4543 = vsel %vm1403, %v4515, %v4488
        %v4544 = vmax.f32 %v4460, %v4542
        %v4545 = vmax.f32 %v4461, %v4541
        %v4546 = vmax.f32 %v4462, %v4540
        %v4547 = vmax.f32 %v4463, %v4539
        %v4548 = vmax.f32 %v4464, %v4538
        %v4549 = vmax.f32 %v4465, %v4537
        %v4550 = vmax.f32 %v4466, %v4536
        %v4551 = vmax.f32 %v4467, %v4535
        %v4552 = vmax.f32 %v4468, %v4534
        %v4553 = vmax.f32 %v4469, %v4533
        %v4554 = vmax.f32 %v4470, %v4532
        %v4555 = vmax.f32 %v4471, %v4531
        %v4556 = vmax.f32 %v4472, %v4530
        %v4557 = vmax.f32 %v4473, %v4529
        %v4558 = vmax.f32 %v4474, %v4528
        %v4559 = vmax.f32 %v4475, %v4527
        %v4560 = vmax.f32 %v4476, %v4526
        %v4561 = vmax.f32 %v4477, %v4525
        %v4562 = vmax.f32 %v4478, %v4524
        %v4563 = vmax.f32 %v4479, %v4523
        %v4564 = vmax.f32 %v4480, %v4522
        %v4565 = vmax.f32 %v4481, %v4521
        %v4566 = vmax.f32 %v4482, %v4520
        %v4567 = vmax.f32 %v4483, %v4519
        %v4568 = vmax.f32 %v4484, %v4518
        %v4569 = vmax.f32 %v4485, %v4517
        %v4570 = vmax.f32 %v4486, %v4516
        %v4571 = vmax.f32 %v4487, %v4543
        %v4572 = vmax.f32 %v4544, 0.0
        %v4573 = vmax.f32 %v4545, 0.0
        %v4574 = vmax.f32 %v4546, 0.0
        %v4575 = vmax.f32 %v4547, 0.0
        %v4576 = vmax.f32 %v4548, 0.0
        %v4577 = vmax.f32 %v4549, 0.0
        %v4578 = vmax.f32 %v4550, 0.0
        %v4579 = vmax.f32 %v4551, 0.0
        %v4580 = vmax.f32 %v4552, 0.0
        %v4581 = vmax.f32 %v4553, 0.0
        %v4582 = vmax.f32 %v4554, 0.0
        %v4583 = vmax.f32 %v4555, 0.0
        %v4584 = vmax.f32 %v4556, 0.0
        %v4585 = vmax.f32 %v4557, 0.0
        %v4586 = vmax.f32 %v4558, 0.0
        %v4587 = vmax.f32 %v4559, 0.0
        %v4588 = vmax.f32 %v4560, 0.0
        %v4589 = vmax.f32 %v4561, 0.0
        %v4590 = vmax.f32 %v4562, 0.0
        %v4591 = vmax.f32 %v4563, 0.0
        %v4592 = vmax.f32 %v4564, 0.0
        %v4593 = vmax.f32 %v4565, 0.0
        %v4594 = vmax.f32 %v4566, 0.0
        %v4595 = vmax.f32 %v4567, 0.0
        %v4596 = vmax.f32 %v4568, 0.0
        %v4597 = vmax.f32 %v4569, 0.0
        %v4598 = vmax.f32 %v4570, 0.0
        %v4599 = vmax.f32 %v4571, 0.0
        %v4600 = vld [vmem:[%s5] sm:$0xff]
        %v4601 = vld [vmem:[%s5 + $0x8] sm:$0xff]
        %v4602 = vld [vmem:[%s5 + $0x10] sm:$0xff]
        %v4603 = vld [vmem:[%s5 + $0x18] sm:$0xff]
        %v4604 = vld [vmem:[%s5 + $0x20] sm:$0xff]
        %v4605 = vld [vmem:[%s5 + $0x28] sm:$0xff]
        %v4606 = vld [vmem:[%s5 + $0x30] sm:$0xff]
        %v4607 = vld [vmem:[%s5 + $0x38] sm:$0xff]
        %v4608 = vld [vmem:[%s5 + $0x40] sm:$0xff]
        %v4609 = vld [vmem:[%s5 + $0x48] sm:$0xff]
        %v4610 = vld [vmem:[%s5 + $0x50] sm:$0xff]
        %v4611 = vld [vmem:[%s5 + $0x58] sm:$0xff]
        %v4612 = vld [vmem:[%s5 + $0x60] sm:$0xff]
        %v4613 = vld [vmem:[%s5 + $0x68] sm:$0xff]
        %v4614 = vld [vmem:[%s5 + $0x70] sm:$0xff]
        %v4615 = vld [vmem:[%s5 + $0x78] sm:$0xff]
        %s4616 = scalar_lea.vmem %s5, 128
        %v4617 = vld [vmem:[%s4616] sm:$0xff]
        %v4618 = vld [vmem:[%s4616 + $0x8] sm:$0xff]
        %v4619 = vld [vmem:[%s4616 + $0x10] sm:$0xff]
        %v4620 = vld [vmem:[%s4616 + $0x18] sm:$0xff]
        %v4621 = vld [vmem:[%s4616 + $0x20] sm:$0xff]
        %v4622 = vld [vmem:[%s4616 + $0x28] sm:$0xff]
        %v4623 = vld [vmem:[%s4616 + $0x30] sm:$0xff]
        %v4624 = vld [vmem:[%s4616 + $0x38] sm:$0xff]
        %v4625 = vld [vmem:[%s4616 + $0x40] sm:$0xff]
        %v4626 = vld [vmem:[%s4616 + $0x48] sm:$0xff]
        %v4627 = vld [vmem:[%s4616 + $0x50] sm:$0xff]
        %v4628 = vld [vmem:[%s4616 + $0x58] sm:$0xff]
        %v4629 = vld [vmem:[%s4616 + $0x60] sm:$0xff]
        %v4630 = vld [vmem:[%s4616 + $0x68] sm:$0xff]
        %v4631 = vld [vmem:[%s4616 + $0x70] sm:$0xff]
        %v4632 = vld [vmem:[%s4616 + $0x78] sm:$0xff]
        %4633 = vmatprep.subr.mxu0 0.0
        %4634 = vmatpush1.msra.mxu0 %v4617
        %4635 = vmatprep.subr.mxu0 0.0
        %4636 = vmatpush1.msra.mxu0 %v4618
        %4637 = vmatprep.subr.mxu0 0.0
        %4638 = vmatpush1.msra.mxu0 %v4619
        %4639 = vmatprep.subr.mxu0 0.0
        %4640 = vmatpush1.msra.mxu0 %v4620
        %4641 = vmatprep.subr.mxu0 0.0
        %4642 = vmatpush1.msra.mxu0 %v4621
        %4643 = vmatprep.subr.mxu0 0.0
        %4644 = vmatpush1.msra.mxu0 %v4622
        %4645 = vmatprep.subr.mxu0 0.0
        %4646 = vmatpush1.msra.mxu0 %v4623
        %4647 = vmatprep.subr.mxu0 0.0
        %4648 = vmatpush1.msra.mxu0 %v4624
        %4649 = vmatprep.subr.mxu0 0.0
        %4650 = vmatpush1.msra.mxu0 %v4625
        %4651 = vmatprep.subr.mxu0 0.0
        %4652 = vmatpush1.msra.mxu0 %v4626
        %4653 = vmatprep.subr.mxu0 0.0
        %4654 = vmatpush1.msra.mxu0 %v4627
        %4655 = vmatprep.subr.mxu0 0.0
        %4656 = vmatpush1.msra.mxu0 %v4628
        %4657 = vmatprep.subr.mxu0 0.0
        %4658 = vmatpush1.msra.mxu0 %v4629
        %4659 = vmatprep.subr.mxu0 0.0
        %4660 = vmatpush1.msra.mxu0 %v4630
        %4661 = vmatprep.subr.mxu0 0.0
        %4662 = vmatpush1.msra.mxu0 %v4631
        %4663 = vmatprep.subr.mxu0 0.0
        %4664 = vmatpush1.msra.mxu0 %v4632
        %4665 = vmatprep.subr.mxu0 0.0
        %4666 = vmatpush1.msra.mxu0 0.0
        %4667 = vmatprep.subr.mxu0 0.0
        %4668 = vmatpush1.msra.mxu0 0.0
        %4669 = vmatprep.subr.mxu0 0.0
        %4670 = vmatpush1.msra.mxu0 0.0
        %4671 = vmatprep.subr.mxu0 0.0
        %4672 = vmatpush1.msra.mxu0 0.0
        %4673 = vmatprep.subr.mxu0 0.0
        %4674 = vmatpush1.msra.mxu0 0.0
        %4675 = vmatprep.subr.mxu0 0.0
        %4676 = vmatpush1.msra.mxu0 0.0
        %4677 = vmatprep.subr.mxu0 0.0
        %4678 = vmatpush1.msra.mxu0 0.0
        %4679 = vmatprep.subr.mxu0 0.0
        %4680 = vmatpush1.msra.mxu0 0.0
        %4681 = vmatprep.subr.mxu0 0.0
        %4682 = vmatpush1.msra.mxu0 0.0
        %4683 = vmatprep.subr.mxu0 0.0
        %4684 = vmatpush1.msra.mxu0 0.0
        %4685 = vmatprep.subr.mxu0 0.0
        %4686 = vmatpush1.msra.mxu0 0.0
        %4687 = vmatprep.subr.mxu0 0.0
        %4688 = vmatpush1.msra.mxu0 0.0
        %4689 = vmatprep.subr.mxu0 0.0
        %4690 = vmatpush1.msra.mxu0 0.0
        %4691 = vmatprep.subr.mxu0 0.0
        %4692 = vmatpush1.msra.mxu0 0.0
        %4693 = vmatprep.subr.mxu0 0.0
        %4694 = vmatpush1.msra.mxu0 0.0
        %4695 = vmatprep.subr.mxu0 0.0
        %4696 = vmatpush1.msra.mxu0 0.0
        %4697 = vmatprep.mubr.f32.mxu0 0.0
        %4698 = vmatmul.mubr.f32.gmra.mrb[0].mxu0 %v4572
        %v4699 = vpop.f32.mrb[0].mxu0
        %v4700 = vadd.f32 0.0, %v4699
        %v4701 = vpop.f32.mrb[0].mxu0
        %4702 = vmatprep.mubr.f32.mxu0 0.0
        %4703 = vmatmul.mubr.f32.gmra.mrb[0].mxu0 %v4573
        %v4704 = vpop.f32.mrb[0].mxu0
        %v4705 = vadd.f32 0.0, %v4704
        %v4706 = vpop.f32.mrb[0].mxu0
        %4707 = vmatprep.mubr.f32.mxu0 0.0
        %4708 = vmatmul.mubr.f32.gmra.mrb[0].mxu0 %v4574
        %v4709 = vpop.f32.mrb[0].mxu0
        %v4710 = vadd.f32 0.0, %v4709
        %v4711 = vpop.f32.mrb[0].mxu0
        %4712 = vmatprep.mubr.f32.mxu0 0.0
        %4713 = vmatmul.mubr.f32.gmra.mrb[0].mxu0 %v4575
        %v4714 = vpop.f32.mrb[0].mxu0
        %v4715 = vadd.f32 0.0, %v4714
        %v4716 = vpop.f32.mrb[0].mxu0
        %4717 = vmatprep.mubr.f32.mxu0 0.0
        %4718 = vmatmul.mubr.f32.gmra.mrb[0].mxu0 %v4576
        %v4719 = vpop.f32.mrb[0].mxu0
        %v4720 = vadd.f32 0.0, %v4719
        %v4721 = vpop.f32.mrb[0].mxu0
        %4722 = vmatprep.mubr.f32.mxu0 0.0
        %4723 = vmatmul.mubr.f32.gmra.mrb[0].mxu0 %v4577
        %v4724 = vpop.f32.mrb[0].mxu0
        %v4725 = vadd.f32 0.0, %v4724
        %v4726 = vpop.f32.mrb[0].mxu0
        %4727 = vmatprep.mubr.f32.mxu0 0.0
        %4728 = vmatmul.mubr.f32.gmra.mrb[0].mxu0 %v4578
        %v4729 = vpop.f32.mrb[0].mxu0
        %v4730 = vadd.f32 0.0, %v4729
        %v4731 = vpop.f32.mrb[0].mxu0
        %4732 = vmatprep.mubr.f32.mxu0 0.0
        %4733 = vmatmul.mubr.f32.gmra.mrb[0].mxu0 %v4579
        %v4734 = vpop.f32.mrb[0].mxu0
        %v4735 = vadd.f32 0.0, %v4734
        %v4736 = vpop.f32.mrb[0].mxu0
        %4737 = vmatprep.mubr.f32.mxu0 0.0
        %4738 = vmatmul.mubr.f32.gmra.mrb[0].mxu0 %v4580
        %v4739 = vpop.f32.mrb[0].mxu0
        %v4740 = vadd.f32 0.0, %v4739
        %v4741 = vpop.f32.mrb[0].mxu0
        %4742 = vmatprep.mubr.f32.mxu0 0.0
        %4743 = vmatmul.mubr.f32.gmra.mrb[0].mxu0 %v4581
        %v4744 = vpop.f32.mrb[0].mxu0
        %v4745 = vadd.f32 0.0, %v4744
        %v4746 = vpop.f32.mrb[0].mxu0
        %4747 = vmatprep.mubr.f32.mxu0 0.0
        %4748 = vmatmul.mubr.f32.gmra.mrb[0].mxu0 %v4582
        %v4749 = vpop.f32.mrb[0].mxu0
        %v4750 = vadd.f32 0.0, %v4749
        %v4751 = vpop.f32.mrb[0].mxu0
        %4752 = vmatprep.mubr.f32.mxu0 0.0
        %4753 = vmatmul.mubr.f32.gmra.mrb[0].mxu0 %v4583
        %v4754 = vpop.f32.mrb[0].mxu0
        %v4755 = vadd.f32 0.0, %v4754
        %v4756 = vpop.f32.mrb[0].mxu0
        %4757 = vmatprep.mubr.f32.mxu0 0.0
        %4758 = vmatmul.mubr.f32.gmra.mrb[0].mxu0 %v4584
        %v4759 = vpop.f32.mrb[0].mxu0
        %v4760 = vadd.f32 0.0, %v4759
        %v4761 = vpop.f32.mrb[0].mxu0
        %4762 = vmatprep.mubr.f32.mxu0 0.0
        %4763 = vmatmul.mubr.f32.gmra.mrb[0].mxu0 %v4585
        %v4764 = vpop.f32.mrb[0].mxu0
        %v4765 = vadd.f32 0.0, %v4764
        %v4766 = vpop.f32.mrb[0].mxu0
        %4767 = vmatprep.mubr.f32.mxu0 0.0
        %4768 = vmatmul.mubr.f32.gmra.mrb[0].mxu0 %v4586
        %v4769 = vpop.f32.mrb[0].mxu0
        %v4770 = vadd.f32 0.0, %v4769
        %v4771 = vpop.f32.mrb[0].mxu0
        %4772 = vmatprep.mubr.f32.mxu0 0.0
        %4773 = vmatmul.mubr.f32.gmra.mrb[0].mxu0 %v4587
        %v4774 = vpop.f32.mrb[0].mxu0
        %v4775 = vadd.f32 0.0, %v4774
        %v4776 = vpop.f32.mrb[0].mxu0
        %4777 = vmatprep.mubr.f32.mxu0 0.0
        %4778 = vmatmul.mubr.f32.gmra.mrb[0].mxu0 %v4588
        %v4779 = vpop.f32.mrb[0].mxu0
        %v4780 = vadd.f32 0.0, %v4779
        %v4781 = vpop.f32.mrb[0].mxu0
        %4782 = vmatprep.mubr.f32.mxu0 0.0
        %4783 = vmatmul.mubr.f32.gmra.mrb[0].mxu0 %v4589
        %v4784 = vpop.f32.mrb[0].mxu0
        %v4785 = vadd.f32 0.0, %v4784
        %v4786 = vpop.f32.mrb[0].mxu0
        %4787 = vmatprep.mubr.f32.mxu0 0.0
        %4788 = vmatmul.mubr.f32.gmra.mrb[0].mxu0 %v4590
        %v4789 = vpop.f32.mrb[0].mxu0
        %v4790 = vadd.f32 0.0, %v4789
        %v4791 = vpop.f32.mrb[0].mxu0
        %4792 = vmatprep.mubr.f32.mxu0 0.0
        %4793 = vmatmul.mubr.f32.gmra.mrb[0].mxu0 %v4591
        %v4794 = vpop.f32.mrb[0].mxu0
        %v4795 = vadd.f32 0.0, %v4794
        %v4796 = vpop.f32.mrb[0].mxu0
        %4797 = vmatprep.mubr.f32.mxu0 0.0
        %4798 = vmatmul.mubr.f32.gmra.mrb[0].mxu0 %v4592
        %v4799 = vpop.f32.mrb[0].mxu0
        %v4800 = vadd.f32 0.0, %v4799
        %v4801 = vpop.f32.mrb[0].mxu0
        %4802 = vmatprep.mubr.f32.mxu0 0.0
        %4803 = vmatmul.mubr.f32.gmra.mrb[0].mxu0 %v4593
        %v4804 = vpop.f32.mrb[0].mxu0
        %v4805 = vadd.f32 0.0, %v4804
        %v4806 = vpop.f32.mrb[0].mxu0
        %4807 = vmatprep.mubr.f32.mxu0 0.0
        %4808 = vmatmul.mubr.f32.gmra.mrb[0].mxu0 %v4594
        %v4809 = vpop.f32.mrb[0].mxu0
        %v4810 = vadd.f32 0.0, %v4809
        %v4811 = vpop.f32.mrb[0].mxu0
        %4812 = vmatprep.mubr.f32.mxu0 0.0
        %4813 = vmatmul.mubr.f32.gmra.mrb[0].mxu0 %v4595
        %v4814 = vpop.f32.mrb[0].mxu0
        %v4815 = vadd.f32 0.0, %v4814
        %v4816 = vpop.f32.mrb[0].mxu0
        %4817 = vmatprep.mubr.f32.mxu0 0.0
        %4818 = vmatmul.mubr.f32.gmra.mrb[0].mxu0 %v4596
        %v4819 = vpop.f32.mrb[0].mxu0
        %v4820 = vadd.f32 0.0, %v4819
        %v4821 = vpop.f32.mrb[0].mxu0
        %4822 = vmatprep.mubr.f32.mxu0 0.0
        %4823 = vmatmul.mubr.f32.gmra.mrb[0].mxu0 %v4597
        %v4824 = vpop.f32.mrb[0].mxu0
        %v4825 = vadd.f32 0.0, %v4824
        %v4826 = vpop.f32.mrb[0].mxu0
        %4827 = vmatprep.mubr.f32.mxu0 0.0
        %4828 = vmatmul.mubr.f32.gmra.mrb[0].mxu0 %v4598
        %v4829 = vpop.f32.mrb[0].mxu0
        %v4830 = vadd.f32 0.0, %v4829
        %v4831 = vpop.f32.mrb[0].mxu0
        %4832 = vmatprep.mubr.f32.mxu0 0.0
        %4833 = vmatmul.mubr.f32.gmra.mrb[0].mxu0 %v4599
        %v4834 = vpop.f32.mrb[0].mxu0
        %v4835 = vadd.f32 0.0, %v4834
        %v4836 = vpop.f32.mrb[0].mxu0
        %4837 = vdwg.mxu0
        %v4838 = vrot.slane %v4700, 4
        %v4839 = vrot.slane %v4705, 4
        %v4840 = vrot.slane %v4710, 4
        %v4841 = vrot.slane %v4715, 4
        %v4842 = vrot.slane %v4720, 4
        %v4843 = vrot.slane %v4725, 4
        %v4844 = vrot.slane %v4730, 4
        %v4845 = vrot.slane %v4735, 4
        %v4846 = vrot.slane %v4740, 4
        %v4847 = vrot.slane %v4745, 4
        %v4848 = vrot.slane %v4750, 4
        %v4849 = vrot.slane %v4755, 4
        %v4850 = vrot.slane %v4760, 4
        %v4851 = vrot.slane %v4765, 4
        %v4852 = vrot.slane %v4770, 4
        %v4853 = vrot.slane %v4775, 4
        %v4854 = vrot.slane %v4780, 4
        %v4855 = vrot.slane %v4785, 4
        %v4856 = vrot.slane %v4790, 4
        %v4857 = vrot.slane %v4795, 4
        %v4858 = vrot.slane %v4800, 4
        %v4859 = vrot.slane %v4805, 4
        %v4860 = vrot.slane %v4810, 4
        %v4861 = vrot.slane %v4815, 4
        %v4862 = vrot.slane %v4820, 4
        %v4863 = vrot.slane %v4825, 4
        %v4864 = vrot.slane %v4830, 4
        %v4865 = vrot.slane %v4835, 4
        %v4866 = vsel %vm2237, %v4864, %v4865
        %v4867 = vsel %vm2237, %v4863, %v4864
        %v4868 = vsel %vm2237, %v4862, %v4863
        %v4869 = vsel %vm2237, %v4861, %v4862
        %v4870 = vsel %vm2237, %v4860, %v4861
        %v4871 = vsel %vm2237, %v4859, %v4860
        %v4872 = vsel %vm2237, %v4858, %v4859
        %v4873 = vsel %vm2237, %v4857, %v4858
        %v4874 = vsel %vm2237, %v4856, %v4857
        %v4875 = vsel %vm2237, %v4855, %v4856
        %v4876 = vsel %vm2237, %v4854, %v4855
        %v4877 = vsel %vm2237, %v4853, %v4854
        %v4878 = vsel %vm2237, %v4852, %v4853
        %v4879 = vsel %vm2237, %v4851, %v4852
        %v4880 = vsel %vm2237, %v4850, %v4851
        %v4881 = vsel %vm2237, %v4849, %v4850
        %v4882 = vsel %vm2237, %v4848, %v4849
        %v4883 = vsel %vm2237, %v4847, %v4848
        %v4884 = vsel %vm2237, %v4846, %v4847
        %v4885 = vsel %vm2237, %v4845, %v4846
        %v4886 = vsel %vm2237, %v4844, %v4845
        %v4887 = vsel %vm2237, %v4843, %v4844
        %v4888 = vsel %vm2237, %v4842, %v4843
        %v4889 = vsel %vm2237, %v4841, %v4842
        %v4890 = vsel %vm2237, %v4840, %v4841
        %v4891 = vsel %vm2237, %v4839, %v4840
        %v4892 = vsel %vm2237, %v4838, %v4839
        %v4893 = vsel %vm2237, %v4865, %v4838
        %4894 = vmatprep.subr.mxu0 0.0
        %4895 = vmatpush1.msra.mxu0 %v4600
        %4896 = vmatprep.subr.mxu0 0.0
        %4897 = vmatpush1.msra.mxu0 %v4601
        %4898 = vmatprep.subr.mxu0 0.0
        %4899 = vmatpush1.msra.mxu0 %v4602
        %4900 = vmatprep.subr.mxu0 0.0
        %4901 = vmatpush1.msra.mxu0 %v4603
        %4902 = vmatprep.subr.mxu0 0.0
        %4903 = vmatpush1.msra.mxu0 %v4604
        %4904 = vmatprep.subr.mxu0 0.0
        %4905 = vmatpush1.msra.mxu0 %v4605
        %4906 = vmatprep.subr.mxu0 0.0
        %4907 = vmatpush1.msra.mxu0 %v4606
        %4908 = vmatprep.subr.mxu0 0.0
        %4909 = vmatpush1.msra.mxu0 %v4607
        %4910 = vmatprep.subr.mxu0 0.0
        %4911 = vmatpush1.msra.mxu0 %v4608
        %4912 = vmatprep.subr.mxu0 0.0
        %4913 = vmatpush1.msra.mxu0 %v4609
        %4914 = vmatprep.subr.mxu0 0.0
        %4915 = vmatpush1.msra.mxu0 %v4610
        %4916 = vmatprep.subr.mxu0 0.0
        %4917 = vmatpush1.msra.mxu0 %v4611
        %4918 = vmatprep.subr.mxu0 0.0
        %4919 = vmatpush1.msra.mxu0 %v4612
        %4920 = vmatprep.subr.mxu0 0.0
        %4921 = vmatpush1.msra.mxu0 %v4613
        %4922 = vmatprep.subr.mxu0 0.0
        %4923 = vmatpush1.msra.mxu0 %v4614
        %4924 = vmatprep.subr.mxu0 0.0
        %4925 = vmatpush1.msra.mxu0 %v4615
        %4926 = vmatprep.subr.mxu0 0.0
        %4927 = vmatpush1.msra.mxu0 0.0
        %4928 = vmatprep.subr.mxu0 0.0
        %4929 = vmatpush1.msra.mxu0 0.0
        %4930 = vmatprep.subr.mxu0 0.0
        %4931 = vmatpush1.msra.mxu0 0.0
        %4932 = vmatprep.subr.mxu0 0.0
        %4933 = vmatpush1.msra.mxu0 0.0
        %4934 = vmatprep.subr.mxu0 0.0
        %4935 = vmatpush1.msra.mxu0 0.0
        %4936 = vmatprep.subr.mxu0 0.0
        %4937 = vmatpush1.msra.mxu0 0.0
        %4938 = vmatprep.subr.mxu0 0.0
        %4939 = vmatpush1.msra.mxu0 0.0
        %4940 = vmatprep.subr.mxu0 0.0
        %4941 = vmatpush1.msra.mxu0 0.0
        %4942 = vmatprep.subr.mxu0 0.0
        %4943 = vmatpush1.msra.mxu0 0.0
        %4944 = vmatprep.subr.mxu0 0.0
        %4945 = vmatpush1.msra.mxu0 0.0
        %4946 = vmatprep.subr.mxu0 0.0
        %4947 = vmatpush1.msra.mxu0 0.0
        %4948 = vmatprep.subr.mxu0 0.0
        %4949 = vmatpush1.msra.mxu0 0.0
        %4950 = vmatprep.subr.mxu0 0.0
        %4951 = vmatpush1.msra.mxu0 0.0
        %4952 = vmatprep.subr.mxu0 0.0
        %4953 = vmatpush1.msra.mxu0 0.0
        %4954 = vmatprep.subr.mxu0 0.0
        %4955 = vmatpush1.msra.mxu0 0.0
        %4956 = vmatprep.subr.mxu0 0.0
        %4957 = vmatpush1.msra.mxu0 0.0
        %4958 = vmatprep.mubr.f32.mxu0 0.0
        %4959 = vmatmul.mubr.f32.gmra.mrb[0].mxu0 %v4572
        %v4960 = vpop.f32.mrb[0].mxu0
        %v4961 = vadd.f32 %v4892, %v4960
        %v4962 = vpop.f32.mrb[0].mxu0
        %4963 = vmatprep.mubr.f32.mxu0 0.0
        %4964 = vmatmul.mubr.f32.gmra.mrb[0].mxu0 %v4573
        %v4965 = vpop.f32.mrb[0].mxu0
        %v4966 = vadd.f32 %v4891, %v4965
        %v4967 = vpop.f32.mrb[0].mxu0
        %4968 = vmatprep.mubr.f32.mxu0 0.0
        %4969 = vmatmul.mubr.f32.gmra.mrb[0].mxu0 %v4574
        %v4970 = vpop.f32.mrb[0].mxu0
        %v4971 = vadd.f32 %v4890, %v4970
        %v4972 = vpop.f32.mrb[0].mxu0
        %4973 = vmatprep.mubr.f32.mxu0 0.0
        %4974 = vmatmul.mubr.f32.gmra.mrb[0].mxu0 %v4575
        %v4975 = vpop.f32.mrb[0].mxu0
        %v4976 = vadd.f32 %v4889, %v4975
        %v4977 = vpop.f32.mrb[0].mxu0
        %4978 = vmatprep.mubr.f32.mxu0 0.0
        %4979 = vmatmul.mubr.f32.gmra.mrb[0].mxu0 %v4576
        %v4980 = vpop.f32.mrb[0].mxu0
        %v4981 = vadd.f32 %v4888, %v4980
        %v4982 = vpop.f32.mrb[0].mxu0
        %4983 = vmatprep.mubr.f32.mxu0 0.0
        %4984 = vmatmul.mubr.f32.gmra.mrb[0].mxu0 %v4577
        %v4985 = vpop.f32.mrb[0].mxu0
        %v4986 = vadd.f32 %v4887, %v4985
        %v4987 = vpop.f32.mrb[0].mxu0
        %4988 = vmatprep.mubr.f32.mxu0 0.0
        %4989 = vmatmul.mubr.f32.gmra.mrb[0].mxu0 %v4578
        %v4990 = vpop.f32.mrb[0].mxu0
        %v4991 = vadd.f32 %v4886, %v4990
        %v4992 = vpop.f32.mrb[0].mxu0
        %4993 = vmatprep.mubr.f32.mxu0 0.0
        %4994 = vmatmul.mubr.f32.gmra.mrb[0].mxu0 %v4579
        %v4995 = vpop.f32.mrb[0].mxu0
        %v4996 = vadd.f32 %v4885, %v4995
        %v4997 = vpop.f32.mrb[0].mxu0
        %4998 = vmatprep.mubr.f32.mxu0 0.0
        %4999 = vmatmul.mubr.f32.gmra.mrb[0].mxu0 %v4580
        %v5000 = vpop.f32.mrb[0].mxu0
        %v5001 = vadd.f32 %v4884, %v5000
        %v5002 = vpop.f32.mrb[0].mxu0
        %5003 = vmatprep.mubr.f32.mxu0 0.0
        %5004 = vmatmul.mubr.f32.gmra.mrb[0].mxu0 %v4581
        %v5005 = vpop.f32.mrb[0].mxu0
        %v5006 = vadd.f32 %v4883, %v5005
        %v5007 = vpop.f32.mrb[0].mxu0
        %5008 = vmatprep.mubr.f32.mxu0 0.0
        %5009 = vmatmul.mubr.f32.gmra.mrb[0].mxu0 %v4582
        %v5010 = vpop.f32.mrb[0].mxu0
        %v5011 = vadd.f32 %v4882, %v5010
        %v5012 = vpop.f32.mrb[0].mxu0
        %5013 = vmatprep.mubr.f32.mxu0 0.0
        %5014 = vmatmul.mubr.f32.gmra.mrb[0].mxu0 %v4583
        %v5015 = vpop.f32.mrb[0].mxu0
        %v5016 = vadd.f32 %v4881, %v5015
        %v5017 = vpop.f32.mrb[0].mxu0
        %5018 = vmatprep.mubr.f32.mxu0 0.0
        %5019 = vmatmul.mubr.f32.gmra.mrb[0].mxu0 %v4584
        %v5020 = vpop.f32.mrb[0].mxu0
        %v5021 = vadd.f32 %v4880, %v5020
        %v5022 = vpop.f32.mrb[0].mxu0
        %5023 = vmatprep.mubr.f32.mxu0 0.0
        %5024 = vmatmul.mubr.f32.gmra.mrb[0].mxu0 %v4585
        %v5025 = vpop.f32.mrb[0].mxu0
        %v5026 = vadd.f32 %v4879, %v5025
        %v5027 = vpop.f32.mrb[0].mxu0
        %5028 = vmatprep.mubr.f32.mxu0 0.0
        %5029 = vmatmul.mubr.f32.gmra.mrb[0].mxu0 %v4586
        %v5030 = vpop.f32.mrb[0].mxu0
        %v5031 = vadd.f32 %v4878, %v5030
        %v5032 = vpop.f32.mrb[0].mxu0
        %5033 = vmatprep.mubr.f32.mxu0 0.0
        %5034 = vmatmul.mubr.f32.gmra.mrb[0].mxu0 %v4587
        %v5035 = vpop.f32.mrb[0].mxu0
        %v5036 = vadd.f32 %v4877, %v5035
        %v5037 = vpop.f32.mrb[0].mxu0
        %5038 = vmatprep.mubr.f32.mxu0 0.0
        %5039 = vmatmul.mubr.f32.gmra.mrb[0].mxu0 %v4588
        %v5040 = vpop.f32.mrb[0].mxu0
        %v5041 = vadd.f32 %v4876, %v5040
        %v5042 = vpop.f32.mrb[0].mxu0
        %5043 = vmatprep.mubr.f32.mxu0 0.0
        %5044 = vmatmul.mubr.f32.gmra.mrb[0].mxu0 %v4589
        %v5045 = vpop.f32.mrb[0].mxu0
        %v5046 = vadd.f32 %v4875, %v5045
        %v5047 = vpop.f32.mrb[0].mxu0
        %5048 = vmatprep.mubr.f32.mxu0 0.0
        %5049 = vmatmul.mubr.f32.gmra.mrb[0].mxu0 %v4590
        %v5050 = vpop.f32.mrb[0].mxu0
        %v5051 = vadd.f32 %v4874, %v5050
        %v5052 = vpop.f32.mrb[0].mxu0
        %5053 = vmatprep.mubr.f32.mxu0 0.0
        %5054 = vmatmul.mubr.f32.gmra.mrb[0].mxu0 %v4591
        %v5055 = vpop.f32.mrb[0].mxu0
        %v5056 = vadd.f32 %v4873, %v5055
        %v5057 = vpop.f32.mrb[0].mxu0
        %5058 = vmatprep.mubr.f32.mxu0 0.0
        %5059 = vmatmul.mubr.f32.gmra.mrb[0].mxu0 %v4592
        %v5060 = vpop.f32.mrb[0].mxu0
        %v5061 = vadd.f32 %v4872, %v5060
        %v5062 = vpop.f32.mrb[0].mxu0
        %5063 = vmatprep.mubr.f32.mxu0 0.0
        %5064 = vmatmul.mubr.f32.gmra.mrb[0].mxu0 %v4593
        %v5065 = vpop.f32.mrb[0].mxu0
        %v5066 = vadd.f32 %v4871, %v5065
        %v5067 = vpop.f32.mrb[0].mxu0
        %5068 = vmatprep.mubr.f32.mxu0 0.0
        %5069 = vmatmul.mubr.f32.gmra.mrb[0].mxu0 %v4594
        %v5070 = vpop.f32.mrb[0].mxu0
        %v5071 = vadd.f32 %v4870, %v5070
        %v5072 = vpop.f32.mrb[0].mxu0
        %5073 = vmatprep.mubr.f32.mxu0 0.0
        %5074 = vmatmul.mubr.f32.gmra.mrb[0].mxu0 %v4595
        %v5075 = vpop.f32.mrb[0].mxu0
        %v5076 = vadd.f32 %v4869, %v5075
        %v5077 = vpop.f32.mrb[0].mxu0
        %5078 = vmatprep.mubr.f32.mxu0 0.0
        %5079 = vmatmul.mubr.f32.gmra.mrb[0].mxu0 %v4596
        %v5080 = vpop.f32.mrb[0].mxu0
        %v5081 = vadd.f32 %v4868, %v5080
        %v5082 = vpop.f32.mrb[0].mxu0
        %5083 = vmatprep.mubr.f32.mxu0 0.0
        %5084 = vmatmul.mubr.f32.gmra.mrb[0].mxu0 %v4597
        %v5085 = vpop.f32.mrb[0].mxu0
        %v5086 = vadd.f32 %v4867, %v5085
        %v5087 = vpop.f32.mrb[0].mxu0
        %5088 = vmatprep.mubr.f32.mxu0 0.0
        %5089 = vmatmul.mubr.f32.gmra.mrb[0].mxu0 %v4598
        %v5090 = vpop.f32.mrb[0].mxu0
        %v5091 = vadd.f32 %v4866, %v5090
        %v5092 = vpop.f32.mrb[0].mxu0
        %5093 = vmatprep.mubr.f32.mxu0 0.0
        %5094 = vmatmul.mubr.f32.gmra.mrb[0].mxu0 %v4599
        %v5095 = vpop.f32.mrb[0].mxu0
        %v5096 = vadd.f32 %v4893, %v5095
        %v5097 = vpop.f32.mrb[0].mxu0
        %5098 = vdwg.mxu0
        %s5099 = scalar_lea.vmem %s5, 256
        %v5100 = vld [vmem:[%s5099] sm:$0xff]
        %v5101 = vld [vmem:[%s5099 + $0x8] sm:$0xff]
        %v5102 = vld [vmem:[%s5099 + $0x10] sm:$0xff]
        %v5103 = vld [vmem:[%s5099 + $0x18] sm:$0xff]
        %v5104 = vld [vmem:[%s5099 + $0x20] sm:$0xff]
        %v5105 = vld [vmem:[%s5099 + $0x28] sm:$0xff]
        %v5106 = vld [vmem:[%s5099 + $0x30] sm:$0xff]
        %v5107 = vld [vmem:[%s5099 + $0x38] sm:$0xff]
        %v5108 = vld [vmem:[%s5099 + $0x40] sm:$0xff]
        %v5109 = vld [vmem:[%s5099 + $0x48] sm:$0xff]
        %v5110 = vld [vmem:[%s5099 + $0x50] sm:$0xff]
        %v5111 = vld [vmem:[%s5099 + $0x58] sm:$0xff]
        %v5112 = vld [vmem:[%s5099 + $0x60] sm:$0xff]
        %v5113 = vld [vmem:[%s5099 + $0x68] sm:$0xff]
        %v5114 = vld [vmem:[%s5099 + $0x70] sm:$0xff]
        %v5115 = vld [vmem:[%s5099 + $0x78] sm:$0xff]
        %5116 = vmatprep.subr.mxu0 0.0
        %5117 = vmatpush1.msra.mxu0 %v5100
        %5118 = vmatprep.subr.mxu0 0.0
        %5119 = vmatpush1.msra.mxu0 %v5101
        %5120 = vmatprep.subr.mxu0 0.0
        %5121 = vmatpush1.msra.mxu0 %v5102
        %5122 = vmatprep.subr.mxu0 0.0
        %5123 = vmatpush1.msra.mxu0 %v5103
        %5124 = vmatprep.subr.mxu0 0.0
        %5125 = vmatpush1.msra.mxu0 %v5104
        %5126 = vmatprep.subr.mxu0 0.0
        %5127 = vmatpush1.msra.mxu0 %v5105
        %5128 = vmatprep.subr.mxu0 0.0
        %5129 = vmatpush1.msra.mxu0 %v5106
        %5130 = vmatprep.subr.mxu0 0.0
        %5131 = vmatpush1.msra.mxu0 %v5107
        %5132 = vmatprep.subr.mxu0 0.0
        %5133 = vmatpush1.msra.mxu0 %v5108
        %5134 = vmatprep.subr.mxu0 0.0
        %5135 = vmatpush1.msra.mxu0 %v5109
        %5136 = vmatprep.subr.mxu0 0.0
        %5137 = vmatpush1.msra.mxu0 %v5110
        %5138 = vmatprep.subr.mxu0 0.0
        %5139 = vmatpush1.msra.mxu0 %v5111
        %5140 = vmatprep.subr.mxu0 0.0
        %5141 = vmatpush1.msra.mxu0 %v5112
        %5142 = vmatprep.subr.mxu0 0.0
        %5143 = vmatpush1.msra.mxu0 %v5113
        %5144 = vmatprep.subr.mxu0 0.0
        %5145 = vmatpush1.msra.mxu0 %v5114
        %5146 = vmatprep.subr.mxu0 0.0
        %5147 = vmatpush1.msra.mxu0 %v5115
        %5148 = vmatprep.subr.mxu0 0.0
        %5149 = vmatpush1.msra.mxu0 0.0
        %5150 = vmatprep.subr.mxu0 0.0
        %5151 = vmatpush1.msra.mxu0 0.0
        %5152 = vmatprep.subr.mxu0 0.0
        %5153 = vmatpush1.msra.mxu0 0.0
        %5154 = vmatprep.subr.mxu0 0.0
        %5155 = vmatpush1.msra.mxu0 0.0
        %5156 = vmatprep.subr.mxu0 0.0
        %5157 = vmatpush1.msra.mxu0 0.0
        %5158 = vmatprep.subr.mxu0 0.0
        %5159 = vmatpush1.msra.mxu0 0.0
        %5160 = vmatprep.subr.mxu0 0.0
        %5161 = vmatpush1.msra.mxu0 0.0
        %5162 = vmatprep.subr.mxu0 0.0
        %5163 = vmatpush1.msra.mxu0 0.0
        %5164 = vmatprep.subr.mxu0 0.0
        %5165 = vmatpush1.msra.mxu0 0.0
        %5166 = vmatprep.subr.mxu0 0.0
        %5167 = vmatpush1.msra.mxu0 0.0
        %5168 = vmatprep.subr.mxu0 0.0
        %5169 = vmatpush1.msra.mxu0 0.0
        %5170 = vmatprep.subr.mxu0 0.0
        %5171 = vmatpush1.msra.mxu0 0.0
        %5172 = vmatprep.subr.mxu0 0.0
        %5173 = vmatpush1.msra.mxu0 0.0
        %5174 = vmatprep.subr.mxu0 0.0
        %5175 = vmatpush1.msra.mxu0 0.0
        %5176 = vmatprep.subr.mxu0 0.0
        %5177 = vmatpush1.msra.mxu0 0.0
        %5178 = vmatprep.subr.mxu0 0.0
        %5179 = vmatpush1.msra.mxu0 0.0
        %5180 = vmatprep.mubr.f32.mxu0 0.0
        %5181 = vmatmul.mubr.f32.gmra.mrb[0].mxu0 %v4572
        %v5182 = vpop.f32.mrb[0].mxu0
        %v5183 = vadd.f32 0.0, %v5182
        %v5184 = vpop.f32.mrb[0].mxu0
        %5185 = vmatprep.mubr.f32.mxu0 0.0
        %5186 = vmatmul.mubr.f32.gmra.mrb[0].mxu0 %v4573
        %v5187 = vpop.f32.mrb[0].mxu0
        %v5188 = vadd.f32 0.0, %v5187
        %v5189 = vpop.f32.mrb[0].mxu0
        %5190 = vmatprep.mubr.f32.mxu0 0.0
        %5191 = vmatmul.mubr.f32.gmra.mrb[0].mxu0 %v4574
        %v5192 = vpop.f32.mrb[0].mxu0
        %v5193 = vadd.f32 0.0, %v5192
        %v5194 = vpop.f32.mrb[0].mxu0
        %5195 = vmatprep.mubr.f32.mxu0 0.0
        %5196 = vmatmul.mubr.f32.gmra.mrb[0].mxu0 %v4575
        %v5197 = vpop.f32.mrb[0].mxu0
        %v5198 = vadd.f32 0.0, %v5197
        %v5199 = vpop.f32.mrb[0].mxu0
        %5200 = vmatprep.mubr.f32.mxu0 0.0
        %5201 = vmatmul.mubr.f32.gmra.mrb[0].mxu0 %v4576
        %v5202 = vpop.f32.mrb[0].mxu0
        %v5203 = vadd.f32 0.0, %v5202
        %v5204 = vpop.f32.mrb[0].mxu0
        %5205 = vmatprep.mubr.f32.mxu0 0.0
        %5206 = vmatmul.mubr.f32.gmra.mrb[0].mxu0 %v4577
        %v5207 = vpop.f32.mrb[0].mxu0
        %v5208 = vadd.f32 0.0, %v5207
        %v5209 = vpop.f32.mrb[0].mxu0
        %5210 = vmatprep.mubr.f32.mxu0 0.0
        %5211 = vmatmul.mubr.f32.gmra.mrb[0].mxu0 %v4578
        %v5212 = vpop.f32.mrb[0].mxu0
        %v5213 = vadd.f32 0.0, %v5212
        %v5214 = vpop.f32.mrb[0].mxu0
        %5215 = vmatprep.mubr.f32.mxu0 0.0
        %5216 = vmatmul.mubr.f32.gmra.mrb[0].mxu0 %v4579
        %v5217 = vpop.f32.mrb[0].mxu0
        %v5218 = vadd.f32 0.0, %v5217
        %v5219 = vpop.f32.mrb[0].mxu0
        %5220 = vmatprep.mubr.f32.mxu0 0.0
        %5221 = vmatmul.mubr.f32.gmra.mrb[0].mxu0 %v4580
        %v5222 = vpop.f32.mrb[0].mxu0
        %v5223 = vadd.f32 0.0, %v5222
        %v5224 = vpop.f32.mrb[0].mxu0
        %5225 = vmatprep.mubr.f32.mxu0 0.0
        %5226 = vmatmul.mubr.f32.gmra.mrb[0].mxu0 %v4581
        %v5227 = vpop.f32.mrb[0].mxu0
        %v5228 = vadd.f32 0.0, %v5227
        %v5229 = vpop.f32.mrb[0].mxu0
        %5230 = vmatprep.mubr.f32.mxu0 0.0
        %5231 = vmatmul.mubr.f32.gmra.mrb[0].mxu0 %v4582
        %v5232 = vpop.f32.mrb[0].mxu0
        %v5233 = vadd.f32 0.0, %v5232
        %v5234 = vpop.f32.mrb[0].mxu0
        %5235 = vmatprep.mubr.f32.mxu0 0.0
        %5236 = vmatmul.mubr.f32.gmra.mrb[0].mxu0 %v4583
        %v5237 = vpop.f32.mrb[0].mxu0
        %v5238 = vadd.f32 0.0, %v5237
        %v5239 = vpop.f32.mrb[0].mxu0
        %5240 = vmatprep.mubr.f32.mxu0 0.0
        %5241 = vmatmul.mubr.f32.gmra.mrb[0].mxu0 %v4584
        %v5242 = vpop.f32.mrb[0].mxu0
        %v5243 = vadd.f32 0.0, %v5242
        %v5244 = vpop.f32.mrb[0].mxu0
        %5245 = vmatprep.mubr.f32.mxu0 0.0
        %5246 = vmatmul.mubr.f32.gmra.mrb[0].mxu0 %v4585
        %v5247 = vpop.f32.mrb[0].mxu0
        %v5248 = vadd.f32 0.0, %v5247
        %v5249 = vpop.f32.mrb[0].mxu0
        %5250 = vmatprep.mubr.f32.mxu0 0.0
        %5251 = vmatmul.mubr.f32.gmra.mrb[0].mxu0 %v4586
        %v5252 = vpop.f32.mrb[0].mxu0
        %v5253 = vadd.f32 0.0, %v5252
        %v5254 = vpop.f32.mrb[0].mxu0
        %5255 = vmatprep.mubr.f32.mxu0 0.0
        %5256 = vmatmul.mubr.f32.gmra.mrb[0].mxu0 %v4587
        %v5257 = vpop.f32.mrb[0].mxu0
        %v5258 = vadd.f32 0.0, %v5257
        %v5259 = vpop.f32.mrb[0].mxu0
        %5260 = vmatprep.mubr.f32.mxu0 0.0
        %5261 = vmatmul.mubr.f32.gmra.mrb[0].mxu0 %v4588
        %v5262 = vpop.f32.mrb[0].mxu0
        %v5263 = vadd.f32 0.0, %v5262
        %v5264 = vpop.f32.mrb[0].mxu0
        %5265 = vmatprep.mubr.f32.mxu0 0.0
        %5266 = vmatmul.mubr.f32.gmra.mrb[0].mxu0 %v4589
        %v5267 = vpop.f32.mrb[0].mxu0
        %v5268 = vadd.f32 0.0, %v5267
        %v5269 = vpop.f32.mrb[0].mxu0
        %5270 = vmatprep.mubr.f32.mxu0 0.0
        %5271 = vmatmul.mubr.f32.gmra.mrb[0].mxu0 %v4590
        %v5272 = vpop.f32.mrb[0].mxu0
        %v5273 = vadd.f32 0.0, %v5272
        %v5274 = vpop.f32.mrb[0].mxu0
        %5275 = vmatprep.mubr.f32.mxu0 0.0
        %5276 = vmatmul.mubr.f32.gmra.mrb[0].mxu0 %v4591
        %v5277 = vpop.f32.mrb[0].mxu0
        %v5278 = vadd.f32 0.0, %v5277
        %v5279 = vpop.f32.mrb[0].mxu0
        %5280 = vmatprep.mubr.f32.mxu0 0.0
        %5281 = vmatmul.mubr.f32.gmra.mrb[0].mxu0 %v4592
        %v5282 = vpop.f32.mrb[0].mxu0
        %v5283 = vadd.f32 0.0, %v5282
        %v5284 = vpop.f32.mrb[0].mxu0
        %5285 = vmatprep.mubr.f32.mxu0 0.0
        %5286 = vmatmul.mubr.f32.gmra.mrb[0].mxu0 %v4593
        %v5287 = vpop.f32.mrb[0].mxu0
        %v5288 = vadd.f32 0.0, %v5287
        %v5289 = vpop.f32.mrb[0].mxu0
        %5290 = vmatprep.mubr.f32.mxu0 0.0
        %5291 = vmatmul.mubr.f32.gmra.mrb[0].mxu0 %v4594
        %v5292 = vpop.f32.mrb[0].mxu0
        %v5293 = vadd.f32 0.0, %v5292
        %v5294 = vpop.f32.mrb[0].mxu0
        %5295 = vmatprep.mubr.f32.mxu0 0.0
        %5296 = vmatmul.mubr.f32.gmra.mrb[0].mxu0 %v4595
        %v5297 = vpop.f32.mrb[0].mxu0
        %v5298 = vadd.f32 0.0, %v5297
        %v5299 = vpop.f32.mrb[0].mxu0
        %5300 = vmatprep.mubr.f32.mxu0 0.0
        %5301 = vmatmul.mubr.f32.gmra.mrb[0].mxu0 %v4596
        %v5302 = vpop.f32.mrb[0].mxu0
        %v5303 = vadd.f32 0.0, %v5302
        %v5304 = vpop.f32.mrb[0].mxu0
        %5305 = vmatprep.mubr.f32.mxu0 0.0
        %5306 = vmatmul.mubr.f32.gmra.mrb[0].mxu0 %v4597
        %v5307 = vpop.f32.mrb[0].mxu0
        %v5308 = vadd.f32 0.0, %v5307
        %v5309 = vpop.f32.mrb[0].mxu0
        %5310 = vmatprep.mubr.f32.mxu0 0.0
        %5311 = vmatmul.mubr.f32.gmra.mrb[0].mxu0 %v4598
        %v5312 = vpop.f32.mrb[0].mxu0
        %v5313 = vadd.f32 0.0, %v5312
        %v5314 = vpop.f32.mrb[0].mxu0
        %5315 = vmatprep.mubr.f32.mxu0 0.0
        %5316 = vmatmul.mubr.f32.gmra.mrb[0].mxu0 %v4599
        %v5317 = vpop.f32.mrb[0].mxu0
        %v5318 = vadd.f32 0.0, %v5317
        %v5319 = vpop.f32.mrb[0].mxu0
        %5320 = vdwg.mxu0
        %v5321 = vadd.f32 %v4961, %v5188
        %v5322 = vadd.f32 %v4966, %v5193
        %v5323 = vadd.f32 %v4971, %v5198
        %v5324 = vadd.f32 %v4976, %v5203
        %v5325 = vadd.f32 %v4981, %v5208
        %v5326 = vadd.f32 %v4986, %v5213
        %v5327 = vadd.f32 %v4991, %v5218
        %v5328 = vadd.f32 %v4996, %v5223
        %v5329 = vadd.f32 %v5001, %v5228
        %v5330 = vadd.f32 %v5006, %v5233
        %v5331 = vadd.f32 %v5011, %v5238
        %v5332 = vadd.f32 %v5016, %v5243
        %v5333 = vadd.f32 %v5021, %v5248
        %v5334 = vadd.f32 %v5026, %v5253
        %v5335 = vadd.f32 %v5031, %v5258
        %v5336 = vadd.f32 %v5036, %v5263
        %v5337 = vadd.f32 %v5041, %v5268
        %v5338 = vadd.f32 %v5046, %v5273
        %v5339 = vadd.f32 %v5051, %v5278
        %v5340 = vadd.f32 %v5056, %v5283
        %v5341 = vadd.f32 %v5061, %v5288
        %v5342 = vadd.f32 %v5066, %v5293
        %v5343 = vadd.f32 %v5071, %v5298
        %v5344 = vadd.f32 %v5076, %v5303
        %v5345 = vadd.f32 %v5081, %v5308
        %v5346 = vadd.f32 %v5086, %v5313
        %v5347 = vadd.f32 %v5091, %v5318
        %v5348 = vadd.f32 %v5096, %v5183
        %s5349 = scalar_lea.vmem %s5, 384
        %v5350 = vld [vmem:[%s5349] sm:$0xff]
        %v5351 = vld [vmem:[%s5349 + $0x8] sm:$0xff]
        %v5352 = vld [vmem:[%s5349 + $0x10] sm:$0xff]
        %v5353 = vld [vmem:[%s5349 + $0x18] sm:$0xff]
        %v5354 = vld [vmem:[%s5349 + $0x20] sm:$0xff]
        %v5355 = vld [vmem:[%s5349 + $0x28] sm:$0xff]
        %v5356 = vld [vmem:[%s5349 + $0x30] sm:$0xff]
        %v5357 = vld [vmem:[%s5349 + $0x38] sm:$0xff]
        %v5358 = vld [vmem:[%s5349 + $0x40] sm:$0xff]
        %v5359 = vld [vmem:[%s5349 + $0x48] sm:$0xff]
        %v5360 = vld [vmem:[%s5349 + $0x50] sm:$0xff]
        %v5361 = vld [vmem:[%s5349 + $0x58] sm:$0xff]
        %v5362 = vld [vmem:[%s5349 + $0x60] sm:$0xff]
        %v5363 = vld [vmem:[%s5349 + $0x68] sm:$0xff]
        %v5364 = vld [vmem:[%s5349 + $0x70] sm:$0xff]
        %v5365 = vld [vmem:[%s5349 + $0x78] sm:$0xff]
        %5366 = vmatprep.subr.mxu0 0.0
        %5367 = vmatpush1.msra.mxu0 %v5350
        %5368 = vmatprep.subr.mxu0 0.0
        %5369 = vmatpush1.msra.mxu0 %v5351
        %5370 = vmatprep.subr.mxu0 0.0
        %5371 = vmatpush1.msra.mxu0 %v5352
        %5372 = vmatprep.subr.mxu0 0.0
        %5373 = vmatpush1.msra.mxu0 %v5353
        %5374 = vmatprep.subr.mxu0 0.0
        %5375 = vmatpush1.msra.mxu0 %v5354
        %5376 = vmatprep.subr.mxu0 0.0
        %5377 = vmatpush1.msra.mxu0 %v5355
        %5378 = vmatprep.subr.mxu0 0.0
        %5379 = vmatpush1.msra.mxu0 %v5356
        %5380 = vmatprep.subr.mxu0 0.0
        %5381 = vmatpush1.msra.mxu0 %v5357
        %5382 = vmatprep.subr.mxu0 0.0
        %5383 = vmatpush1.msra.mxu0 %v5358
        %5384 = vmatprep.subr.mxu0 0.0
        %5385 = vmatpush1.msra.mxu0 %v5359
        %5386 = vmatprep.subr.mxu0 0.0
        %5387 = vmatpush1.msra.mxu0 %v5360
        %5388 = vmatprep.subr.mxu0 0.0
        %5389 = vmatpush1.msra.mxu0 %v5361
        %5390 = vmatprep.subr.mxu0 0.0
        %5391 = vmatpush1.msra.mxu0 %v5362
        %5392 = vmatprep.subr.mxu0 0.0
        %5393 = vmatpush1.msra.mxu0 %v5363
        %5394 = vmatprep.subr.mxu0 0.0
        %5395 = vmatpush1.msra.mxu0 %v5364
        %5396 = vmatprep.subr.mxu0 0.0
        %5397 = vmatpush1.msra.mxu0 %v5365
        %5398 = vmatprep.subr.mxu0 0.0
        %5399 = vmatpush1.msra.mxu0 0.0
        %5400 = vmatprep.subr.mxu0 0.0
        %5401 = vmatpush1.msra.mxu0 0.0
        %5402 = vmatprep.subr.mxu0 0.0
        %5403 = vmatpush1.msra.mxu0 0.0
        %5404 = vmatprep.subr.mxu0 0.0
        %5405 = vmatpush1.msra.mxu0 0.0
        %5406 = vmatprep.subr.mxu0 0.0
        %5407 = vmatpush1.msra.mxu0 0.0
        %5408 = vmatprep.subr.mxu0 0.0
        %5409 = vmatpush1.msra.mxu0 0.0
        %5410 = vmatprep.subr.mxu0 0.0
        %5411 = vmatpush1.msra.mxu0 0.0
        %5412 = vmatprep.subr.mxu0 0.0
        %5413 = vmatpush1.msra.mxu0 0.0
        %5414 = vmatprep.subr.mxu0 0.0
        %5415 = vmatpush1.msra.mxu0 0.0
        %5416 = vmatprep.subr.mxu0 0.0
        %5417 = vmatpush1.msra.mxu0 0.0
        %5418 = vmatprep.subr.mxu0 0.0
        %5419 = vmatpush1.msra.mxu0 0.0
        %5420 = vmatprep.subr.mxu0 0.0
        %5421 = vmatpush1.msra.mxu0 0.0
        %5422 = vmatprep.subr.mxu0 0.0
        %5423 = vmatpush1.msra.mxu0 0.0
        %5424 = vmatprep.subr.mxu0 0.0
        %5425 = vmatpush1.msra.mxu0 0.0
        %5426 = vmatprep.subr.mxu0 0.0
        %5427 = vmatpush1.msra.mxu0 0.0
        %5428 = vmatprep.subr.mxu0 0.0
        %5429 = vmatpush1.msra.mxu0 0.0
        %5430 = vmatprep.mubr.f32.mxu0 0.0
        %5431 = vmatmul.mubr.f32.gmra.mrb[0].mxu0 %v4572
        %v5432 = vpop.f32.mrb[0].mxu0
        %v5433 = vadd.f32 0.0, %v5432
        %v5434 = vpop.f32.mrb[0].mxu0
        %5435 = vmatprep.mubr.f32.mxu0 0.0
        %5436 = vmatmul.mubr.f32.gmra.mrb[0].mxu0 %v4573
        %v5437 = vpop.f32.mrb[0].mxu0
        %v5438 = vadd.f32 0.0, %v5437
        %v5439 = vpop.f32.mrb[0].mxu0
        %5440 = vmatprep.mubr.f32.mxu0 0.0
        %5441 = vmatmul.mubr.f32.gmra.mrb[0].mxu0 %v4574
        %v5442 = vpop.f32.mrb[0].mxu0
        %v5443 = vadd.f32 0.0, %v5442
        %v5444 = vpop.f32.mrb[0].mxu0
        %5445 = vmatprep.mubr.f32.mxu0 0.0
        %5446 = vmatmul.mubr.f32.gmra.mrb[0].mxu0 %v4575
        %v5447 = vpop.f32.mrb[0].mxu0
        %v5448 = vadd.f32 0.0, %v5447
        %v5449 = vpop.f32.mrb[0].mxu0
        %5450 = vmatprep.mubr.f32.mxu0 0.0
        %5451 = vmatmul.mubr.f32.gmra.mrb[0].mxu0 %v4576
        %v5452 = vpop.f32.mrb[0].mxu0
        %v5453 = vadd.f32 0.0, %v5452
        %v5454 = vpop.f32.mrb[0].mxu0
        %5455 = vmatprep.mubr.f32.mxu0 0.0
        %5456 = vmatmul.mubr.f32.gmra.mrb[0].mxu0 %v4577
        %v5457 = vpop.f32.mrb[0].mxu0
        %v5458 = vadd.f32 0.0, %v5457
        %v5459 = vpop.f32.mrb[0].mxu0
        %5460 = vmatprep.mubr.f32.mxu0 0.0
        %5461 = vmatmul.mubr.f32.gmra.mrb[0].mxu0 %v4578
        %v5462 = vpop.f32.mrb[0].mxu0
        %v5463 = vadd.f32 0.0, %v5462
        %v5464 = vpop.f32.mrb[0].mxu0
        %5465 = vmatprep.mubr.f32.mxu0 0.0
        %5466 = vmatmul.mubr.f32.gmra.mrb[0].mxu0 %v4579
        %v5467 = vpop.f32.mrb[0].mxu0
        %v5468 = vadd.f32 0.0, %v5467
        %v5469 = vpop.f32.mrb[0].mxu0
        %5470 = vmatprep.mubr.f32.mxu0 0.0
        %5471 = vmatmul.mubr.f32.gmra.mrb[0].mxu0 %v4580
        %v5472 = vpop.f32.mrb[0].mxu0
        %v5473 = vadd.f32 0.0, %v5472
        %v5474 = vpop.f32.mrb[0].mxu0
        %5475 = vmatprep.mubr.f32.mxu0 0.0
        %5476 = vmatmul.mubr.f32.gmra.mrb[0].mxu0 %v4581
        %v5477 = vpop.f32.mrb[0].mxu0
        %v5478 = vadd.f32 0.0, %v5477
        %v5479 = vpop.f32.mrb[0].mxu0
        %5480 = vmatprep.mubr.f32.mxu0 0.0
        %5481 = vmatmul.mubr.f32.gmra.mrb[0].mxu0 %v4582
        %v5482 = vpop.f32.mrb[0].mxu0
        %v5483 = vadd.f32 0.0, %v5482
        %v5484 = vpop.f32.mrb[0].mxu0
        %5485 = vmatprep.mubr.f32.mxu0 0.0
        %5486 = vmatmul.mubr.f32.gmra.mrb[0].mxu0 %v4583
        %v5487 = vpop.f32.mrb[0].mxu0
        %v5488 = vadd.f32 0.0, %v5487
        %v5489 = vpop.f32.mrb[0].mxu0
        %5490 = vmatprep.mubr.f32.mxu0 0.0
        %5491 = vmatmul.mubr.f32.gmra.mrb[0].mxu0 %v4584
        %v5492 = vpop.f32.mrb[0].mxu0
        %v5493 = vadd.f32 0.0, %v5492
        %v5494 = vpop.f32.mrb[0].mxu0
        %5495 = vmatprep.mubr.f32.mxu0 0.0
        %5496 = vmatmul.mubr.f32.gmra.mrb[0].mxu0 %v4585
        %v5497 = vpop.f32.mrb[0].mxu0
        %v5498 = vadd.f32 0.0, %v5497
        %v5499 = vpop.f32.mrb[0].mxu0
        %5500 = vmatprep.mubr.f32.mxu0 0.0
        %5501 = vmatmul.mubr.f32.gmra.mrb[0].mxu0 %v4586
        %v5502 = vpop.f32.mrb[0].mxu0
        %v5503 = vadd.f32 0.0, %v5502
        %v5504 = vpop.f32.mrb[0].mxu0
        %5505 = vmatprep.mubr.f32.mxu0 0.0
        %5506 = vmatmul.mubr.f32.gmra.mrb[0].mxu0 %v4587
        %v5507 = vpop.f32.mrb[0].mxu0
        %v5508 = vadd.f32 0.0, %v5507
        %v5509 = vpop.f32.mrb[0].mxu0
        %5510 = vmatprep.mubr.f32.mxu0 0.0
        %5511 = vmatmul.mubr.f32.gmra.mrb[0].mxu0 %v4588
        %v5512 = vpop.f32.mrb[0].mxu0
        %v5513 = vadd.f32 0.0, %v5512
        %v5514 = vpop.f32.mrb[0].mxu0
        %5515 = vmatprep.mubr.f32.mxu0 0.0
        %5516 = vmatmul.mubr.f32.gmra.mrb[0].mxu0 %v4589
        %v5517 = vpop.f32.mrb[0].mxu0
        %v5518 = vadd.f32 0.0, %v5517
        %v5519 = vpop.f32.mrb[0].mxu0
        %5520 = vmatprep.mubr.f32.mxu0 0.0
        %5521 = vmatmul.mubr.f32.gmra.mrb[0].mxu0 %v4590
        %v5522 = vpop.f32.mrb[0].mxu0
        %v5523 = vadd.f32 0.0, %v5522
        %v5524 = vpop.f32.mrb[0].mxu0
        %5525 = vmatprep.mubr.f32.mxu0 0.0
        %5526 = vmatmul.mubr.f32.gmra.mrb[0].mxu0 %v4591
        %v5527 = vpop.f32.mrb[0].mxu0
        %v5528 = vadd.f32 0.0, %v5527
        %v5529 = vpop.f32.mrb[0].mxu0
        %5530 = vmatprep.mubr.f32.mxu0 0.0
        %5531 = vmatmul.mubr.f32.gmra.mrb[0].mxu0 %v4592
        %v5532 = vpop.f32.mrb[0].mxu0
        %v5533 = vadd.f32 0.0, %v5532
        %v5534 = vpop.f32.mrb[0].mxu0
        %5535 = vmatprep.mubr.f32.mxu0 0.0
        %5536 = vmatmul.mubr.f32.gmra.mrb[0].mxu0 %v4593
        %v5537 = vpop.f32.mrb[0].mxu0
        %v5538 = vadd.f32 0.0, %v5537
        %v5539 = vpop.f32.mrb[0].mxu0
        %5540 = vmatprep.mubr.f32.mxu0 0.0
        %5541 = vmatmul.mubr.f32.gmra.mrb[0].mxu0 %v4594
        %v5542 = vpop.f32.mrb[0].mxu0
        %v5543 = vadd.f32 0.0, %v5542
        %v5544 = vpop.f32.mrb[0].mxu0
        %5545 = vmatprep.mubr.f32.mxu0 0.0
        %5546 = vmatmul.mubr.f32.gmra.mrb[0].mxu0 %v4595
        %v5547 = vpop.f32.mrb[0].mxu0
        %v5548 = vadd.f32 0.0, %v5547
        %v5549 = vpop.f32.mrb[0].mxu0
        %5550 = vmatprep.mubr.f32.mxu0 0.0
        %5551 = vmatmul.mubr.f32.gmra.mrb[0].mxu0 %v4596
        %v5552 = vpop.f32.mrb[0].mxu0
        %v5553 = vadd.f32 0.0, %v5552
        %v5554 = vpop.f32.mrb[0].mxu0
        %5555 = vmatprep.mubr.f32.mxu0 0.0
        %5556 = vmatmul.mubr.f32.gmra.mrb[0].mxu0 %v4597
        %v5557 = vpop.f32.mrb[0].mxu0
        %v5558 = vadd.f32 0.0, %v5557
        %v5559 = vpop.f32.mrb[0].mxu0
        %5560 = vmatprep.mubr.f32.mxu0 0.0
        %5561 = vmatmul.mubr.f32.gmra.mrb[0].mxu0 %v4598
        %v5562 = vpop.f32.mrb[0].mxu0
        %v5563 = vadd.f32 0.0, %v5562
        %v5564 = vpop.f32.mrb[0].mxu0
        %5565 = vmatprep.mubr.f32.mxu0 0.0
        %5566 = vmatmul.mubr.f32.gmra.mrb[0].mxu0 %v4599
        %v5567 = vpop.f32.mrb[0].mxu0
        %v5568 = vadd.f32 0.0, %v5567
        %v5569 = vpop.f32.mrb[0].mxu0
        %5570 = vdwg.mxu0
        %v5571 = vrot.slane %v5433, 4
        %v5572 = vrot.slane %v5438, 4
        %v5573 = vrot.slane %v5443, 4
        %v5574 = vrot.slane %v5448, 4
        %v5575 = vrot.slane %v5453, 4
        %v5576 = vrot.slane %v5458, 4
        %v5577 = vrot.slane %v5463, 4
        %v5578 = vrot.slane %v5468, 4
        %v5579 = vrot.slane %v5473, 4
        %v5580 = vrot.slane %v5478, 4
        %v5581 = vrot.slane %v5483, 4
        %v5582 = vrot.slane %v5488, 4
        %v5583 = vrot.slane %v5493, 4
        %v5584 = vrot.slane %v5498, 4
        %v5585 = vrot.slane %v5503, 4
        %v5586 = vrot.slane %v5508, 4
        %v5587 = vrot.slane %v5513, 4
        %v5588 = vrot.slane %v5518, 4
        %v5589 = vrot.slane %v5523, 4
        %v5590 = vrot.slane %v5528, 4
        %v5591 = vrot.slane %v5533, 4
        %v5592 = vrot.slane %v5538, 4
        %v5593 = vrot.slane %v5543, 4
        %v5594 = vrot.slane %v5548, 4
        %v5595 = vrot.slane %v5553, 4
        %v5596 = vrot.slane %v5558, 4
        %v5597 = vrot.slane %v5563, 4
        %v5598 = vrot.slane %v5568, 4
        %v5599 = vsel %vm2237, %v5597, %v5598
        %v5600 = vsel %vm2237, %v5596, %v5597
        %v5601 = vsel %vm2237, %v5595, %v5596
        %v5602 = vsel %vm2237, %v5594, %v5595
        %v5603 = vsel %vm2237, %v5593, %v5594
        %v5604 = vsel %vm2237, %v5592, %v5593
        %v5605 = vsel %vm2237, %v5591, %v5592
        %v5606 = vsel %vm2237, %v5590, %v5591
        %v5607 = vsel %vm2237, %v5589, %v5590
        %v5608 = vsel %vm2237, %v5588, %v5589
        %v5609 = vsel %vm2237, %v5587, %v5588
        %v5610 = vsel %vm2237, %v5586, %v5587
        %v5611 = vsel %vm2237, %v5585, %v5586
        %v5612 = vsel %vm2237, %v5584, %v5585
        %v5613 = vsel %vm2237, %v5583, %v5584
        %v5614 = vsel %vm2237, %v5582, %v5583
        %v5615 = vsel %vm2237, %v5581, %v5582
        %v5616 = vsel %vm2237, %v5580, %v5581
        %v5617 = vsel %vm2237, %v5579, %v5580
        %v5618 = vsel %vm2237, %v5578, %v5579
        %v5619 = vsel %vm2237, %v5577, %v5578
        %v5620 = vsel %vm2237, %v5576, %v5577
        %v5621 = vsel %vm2237, %v5575, %v5576
        %v5622 = vsel %vm2237, %v5574, %v5575
        %v5623 = vsel %vm2237, %v5573, %v5574
        %v5624 = vsel %vm2237, %v5572, %v5573
        %v5625 = vsel %vm2237, %v5571, %v5572
        %v5626 = vsel %vm2237, %v5598, %v5571
        %v5627 = vadd.f32 %v5321, %v5624
        %v5628 = vadd.f32 %v5322, %v5623
        %v5629 = vadd.f32 %v5323, %v5622
        %v5630 = vadd.f32 %v5324, %v5621
        %v5631 = vadd.f32 %v5325, %v5620
        %v5632 = vadd.f32 %v5326, %v5619
        %v5633 = vadd.f32 %v5327, %v5618
        %v5634 = vadd.f32 %v5328, %v5617
        %v5635 = vadd.f32 %v5329, %v5616
        %v5636 = vadd.f32 %v5330, %v5615
        %v5637 = vadd.f32 %v5331, %v5614
        %v5638 = vadd.f32 %v5332, %v5613
        %v5639 = vadd.f32 %v5333, %v5612
        %v5640 = vadd.f32 %v5334, %v5611
        %v5641 = vadd.f32 %v5335, %v5610
        %v5642 = vadd.f32 %v5336, %v5609
        %v5643 = vadd.f32 %v5337, %v5608
        %v5644 = vadd.f32 %v5338, %v5607
        %v5645 = vadd.f32 %v5339, %v5606
        %v5646 = vadd.f32 %v5340, %v5605
        %v5647 = vadd.f32 %v5341, %v5604
        %v5648 = vadd.f32 %v5342, %v5603
        %v5649 = vadd.f32 %v5343, %v5602
        %v5650 = vadd.f32 %v5344, %v5601
        %v5651 = vadd.f32 %v5345, %v5600
        %v5652 = vadd.f32 %v5346, %v5599
        %v5653 = vadd.f32 %v5347, %v5626
        %v5654 = vadd.f32 %v5348, %v5625
        %v5655 = vld [vmem:[%s7] sm:$0xff]
        %v5656 = vld [vmem:[%s7 + $0x8] sm:$0xff]
        %v5657 = vld [vmem:[%s6] sm:$0x1]
        %v5659 = vlaneseq
        %v5660 = vshrl.u32 %v5659, 7
        %v5661 = vsub.s32 0, %v5660
        %v5662 = vrot.slane %v5657, %v5661
        %vm5664 = vcmask 785408
        %v5666 = vsel %vm5664, %v5656, 0
        %5668 = vmatprep.subr.mxu0 0.0
        %5669 = vmatpush1.msra.mxu0 %v5627
        %5670 = vmatprep.subr.mxu0 0.0
        %5671 = vmatpush1.msra.mxu0 %v5628
        %5672 = vmatprep.subr.mxu0 0.0
        %5673 = vmatpush1.msra.mxu0 %v5629
        %5674 = vmatprep.subr.mxu0 0.0
        %5675 = vmatpush1.msra.mxu0 %v5630
        %5676 = vmatprep.subr.mxu0 0.0
        %5677 = vmatpush1.msra.mxu0 %v5631
        %5678 = vmatprep.subr.mxu0 0.0
        %5679 = vmatpush1.msra.mxu0 %v5632
        %5680 = vmatprep.subr.mxu0 0.0
        %5681 = vmatpush1.msra.mxu0 %v5633
        %5682 = vmatprep.subr.mxu0 0.0
        %5683 = vmatpush1.msra.mxu0 %v5634
        %5684 = vmatprep.subr.mxu0 0.0
        %5685 = vmatpush1.msra.mxu0 %v5635
        %5686 = vmatprep.subr.mxu0 0.0
        %5687 = vmatpush1.msra.mxu0 %v5636
        %5688 = vmatprep.subr.mxu0 0.0
        %5689 = vmatpush1.msra.mxu0 %v5637
        %5690 = vmatprep.subr.mxu0 0.0
        %5691 = vmatpush1.msra.mxu0 %v5638
        %5692 = vmatprep.subr.mxu0 0.0
        %5693 = vmatpush1.msra.mxu0 %v5639
        %5694 = vmatprep.subr.mxu0 0.0
        %5695 = vmatpush1.msra.mxu0 %v5640
        %5696 = vmatprep.subr.mxu0 0.0
        %5697 = vmatpush1.msra.mxu0 %v5641
        %5698 = vmatprep.subr.mxu0 0.0
        %5699 = vmatpush1.msra.mxu0 %v5642
        %5700 = vmatprep.subr.mxu0 0.0
        %5701 = vmatpush1.msra.mxu0 %v5643
        %5702 = vmatprep.subr.mxu0 0.0
        %5703 = vmatpush1.msra.mxu0 %v5644
        %5704 = vmatprep.subr.mxu0 0.0
        %5705 = vmatpush1.msra.mxu0 %v5645
        %5706 = vmatprep.subr.mxu0 0.0
        %5707 = vmatpush1.msra.mxu0 %v5646
        %5708 = vmatprep.subr.mxu0 0.0
        %5709 = vmatpush1.msra.mxu0 %v5647
        %5710 = vmatprep.subr.mxu0 0.0
        %5711 = vmatpush1.msra.mxu0 %v5648
        %5712 = vmatprep.subr.mxu0 0.0
        %5713 = vmatpush1.msra.mxu0 %v5649
        %5714 = vmatprep.subr.mxu0 0.0
        %5715 = vmatpush1.msra.mxu0 %v5650
        %5716 = vmatprep.subr.mxu0 0.0
        %5717 = vmatpush1.msra.mxu0 %v5651
        %5718 = vmatprep.subr.mxu0 0.0
        %5719 = vmatpush1.msra.mxu0 %v5652
        %5720 = vmatprep.subr.mxu0 0.0
        %5721 = vmatpush1.msra.mxu0 %v5653
        %5722 = vmatprep.subr.mxu0 0.0
        %5723 = vmatpush1.msra.mxu0 %v5654
        %5724 = vmatprep.subr.mxu0 0.0
        %5725 = vmatpush1.msra.mxu0 0.0
        %5726 = vmatprep.subr.mxu0 0.0
        %5727 = vmatpush1.msra.mxu0 0.0
        %5728 = vmatprep.subr.mxu0 0.0
        %5729 = vmatpush1.msra.mxu0 0.0
        %5730 = vmatprep.subr.mxu0 0.0
        %5731 = vmatpush1.msra.mxu0 0.0
        %5732 = vmatprep.mubr.f32.mxu0 %v5666
        %5733 = vmatmul.mubr.f32.gmra.mrb[0].mxu0 %v5655
        %v5734 = vpop.f32.mrb[0].mxu0
        %v5735 = vadd.f32 %v5662, %v5734
        %v5736 = vpop.f32.mrb[0].mxu0
        %5737 = vdwg.mxu0
        %v5738 = vmax.f32 %v5735, 0.0
        %v5739 = vld [vmem:[%s8] sm:$0xff]
        %v5740 = vld [vmem:[%s8 + $0x8] sm:$0xff]
        %v5741 = vld [vmem:[%s8 + $0x10] sm:$0xff]
        %v5742 = vld [vmem:[%s8 + $0x18] sm:$0xff]
        %v5743 = vld [vmem:[%s8 + $0x20] sm:$0xff]
        %v5744 = vld [vmem:[%s8 + $0x28] sm:$0xff]
        %v5745 = vld [vmem:[%s8 + $0x30] sm:$0x3]
        %v5746 = vld [vmem:[%s9] sm:$0x1]
        %v5748 = vlaneseq
        %v5749 = vshrl.u32 %v5748, 7
        %v5750 = vsub.s32 0, %v5749
        %v5751 = vrot.slane %v5746, %v5750
        %vm5753 = vcmask 408576
        %v5755 = vsel %vm5753, %v5738, 0
        %vm5757 = vcmask 1041408
        %v5759 = vsel %vm5757, %v5745, 0
        %5761 = vmatprep.subr.mxu0 0.0
        %5762 = vmatpush1.msra.mxu0 %v5739
        %5763 = vmatprep.subr.mxu0 0.0
        %5764 = vmatpush1.msra.mxu0 %v5740
        %5765 = vmatprep.subr.mxu0 0.0
        %5766 = vmatpush1.msra.mxu0 %v5741
        %5767 = vmatprep.subr.mxu0 0.0
        %5768 = vmatpush1.msra.mxu0 %v5742
        %5769 = vmatprep.subr.mxu0 0.0
        %5770 = vmatpush1.msra.mxu0 %v5743
        %5771 = vmatprep.subr.mxu0 0.0
        %5772 = vmatpush1.msra.mxu0 %v5744
        %5773 = vmatprep.subr.mxu0 0.0
        %5774 = vmatpush1.msra.mxu0 %v5759
        %5775 = vmatprep.subr.mxu0 0.0
        %5776 = vmatpush1.msra.mxu0 0.0
        %5777 = vmatprep.subr.mxu0 0.0
        %5778 = vmatpush1.msra.mxu0 0.0
        %5779 = vmatprep.subr.mxu0 0.0
        %5780 = vmatpush1.msra.mxu0 0.0
        %5781 = vmatprep.subr.mxu0 0.0
        %5782 = vmatpush1.msra.mxu0 0.0
        %5783 = vmatprep.subr.mxu0 0.0
        %5784 = vmatpush1.msra.mxu0 0.0
        %5785 = vmatprep.subr.mxu0 0.0
        %5786 = vmatpush1.msra.mxu0 0.0
        %5787 = vmatprep.subr.mxu0 0.0
        %5788 = vmatpush1.msra.mxu0 0.0
        %5789 = vmatprep.subr.mxu0 0.0
        %5790 = vmatpush1.msra.mxu0 0.0
        %5791 = vmatprep.subr.mxu0 0.0
        %5792 = vmatpush1.msra.mxu0 0.0
        %5793 = vmatprep.subr.mxu0 0.0
        %5794 = vmatpush1.msra.mxu0 0.0
        %5795 = vmatprep.subr.mxu0 0.0
        %5796 = vmatpush1.msra.mxu0 0.0
        %5797 = vmatprep.subr.mxu0 0.0
        %5798 = vmatpush1.msra.mxu0 0.0
        %5799 = vmatprep.subr.mxu0 0.0
        %5800 = vmatpush1.msra.mxu0 0.0
        %5801 = vmatprep.subr.mxu0 0.0
        %5802 = vmatpush1.msra.mxu0 0.0
        %5803 = vmatprep.subr.mxu0 0.0
        %5804 = vmatpush1.msra.mxu0 0.0
        %5805 = vmatprep.subr.mxu0 0.0
        %5806 = vmatpush1.msra.mxu0 0.0
        %5807 = vmatprep.subr.mxu0 0.0
        %5808 = vmatpush1.msra.mxu0 0.0
        %5809 = vmatprep.subr.mxu0 0.0
        %5810 = vmatpush1.msra.mxu0 0.0
        %5811 = vmatprep.subr.mxu0 0.0
        %5812 = vmatpush1.msra.mxu0 0.0
        %5813 = vmatprep.subr.mxu0 0.0
        %5814 = vmatpush1.msra.mxu0 0.0
        %5815 = vmatprep.subr.mxu0 0.0
        %5816 = vmatpush1.msra.mxu0 0.0
        %5817 = vmatprep.subr.mxu0 0.0
        %5818 = vmatpush1.msra.mxu0 0.0
        %5819 = vmatprep.subr.mxu0 0.0
        %5820 = vmatpush1.msra.mxu0 0.0
        %5821 = vmatprep.subr.mxu0 0.0
        %5822 = vmatpush1.msra.mxu0 0.0
        %5823 = vmatprep.subr.mxu0 0.0
        %5824 = vmatpush1.msra.mxu0 0.0
        %5825 = vmatprep.mubr.f32.mxu0 0.0
        %5826 = vmatmul.mubr.f32.gmra.mrb[0].mxu0 %v5755
        %v5827 = vpop.f32.mrb[0].mxu0
        %v5828 = vadd.f32 %v5751, %v5827
        %v5829 = vpop.f32.mrb[0].mxu0
        %5830 = vdwg.mxu0
        %vm5831 = vcmask 80896
        %v5832 = vsel %vm5831, %v5828, -inf
        %5833 = vmax.xlane.f32.xlu0 %v5832
        %v5834 = vpop.xlane.xlu0 %5833
        %v5835 = vsub.f32 %v5828, %v5834
        %v5836 = vmul.f32 %v5835, 1.442695
        %v5837 = vpow.pop %v5836
        %v5838 = vsel %vm5831, %v5837, 0.0
        %5839 = vadd.xlane.f32.xlu0 %v5838
        %v5840 = vpop.xlane.xlu0 %5839
        %v5841 = vrcp.pop %v5840
        %v5842 = vmul.f32 %v5837, %v5841
        %5843 = vst.msk [vmem:[%s368] sm:$0xff] %vm5831, %v5842
        %s5844 = sand.u32 %s248, 1
        %s5845 = scalar_lea.sflag [#allocation4], %s5844
        %s5846 = sand.u32 %s248, 1
        %s5847 = smul.addr %s5846, 8
        %s5848 = scalar_lea.vmem [#allocation5], %s5847
        // Predicated region
        $region65: #{tpu_custom_call.1} parent=59 // pred_check
          %p5849 = pneg %p258
        $region66: #{tpu_custom_call.1} parent=59 // pred_check_branch
          %5851 = sbr.rel (%p5849) target = $region68
        $region67: #{tpu_custom_call.1} parent=59 // pred_region
          %s5853 = ssub.s32 128, 128
          %5854 = vsyncadd %s5845, %s5853
          %s5855 = smul.addr %s25, 128
          %s5856 = scalar_lea.hbm %s10, %s5855
          %s5858 = sshll.u32 %s5848, 4
          %s5859 = int_to_ptr.vmem [resolvable:$true] %s5858
          %5861 = dma.vmem_to_hbm [thread:$0]  %s5859, 128, %s5856, %s5845
        $region68: #{tpu_custom_call.1} parent=59 // pred_fallthru
          _
      $region60: #{tpu_custom_call.1} parent=5 // pred_fallthru
        _
      %p5862 = scmp.le.s32.totalorder 2, %s20
      // Predicated region
      $region69: #{tpu_custom_call.1} parent=5 // pred_check
        %p5863 = pneg %p5862
      $region70: #{tpu_custom_call.1} parent=5 // pred_check_branch
        %5865 = sbr.rel (%p5863) target = $region72
      $region71: #{tpu_custom_call.1} parent=5 // pred_region
        %s5866 = ssub.s32 %s20, 2
        // Predicated region
        $region73: #{tpu_custom_call.1} parent=71 // pred_check
          %p5867 = pneg %p264
        $region74: #{tpu_custom_call.1} parent=71 // pred_check_branch
          %5869 = sbr.rel (%p5867) target = $region76
        $region75: #{tpu_custom_call.1} parent=71 // pred_region
          %s5870 = sand.u32 %s249, 1
          %s5871 = scalar_lea.sflag [#allocation4], %s5870
          %s5872 = sand.u32 %s249, 1
          %s5873 = smul.addr %s5872, 8
          %s5874 = scalar_lea.vmem [#allocation5], %s5873
          %5875 = dma.done %s5871, 128
        $region76: #{tpu_custom_call.1} parent=71 // pred_fallthru
          _
      $region72: #{tpu_custom_call.1} parent=5 // pred_fallthru
        _
    $region6: #{tpu_custom_call.1} parent=1 // loop_footer
      %s24 = sadd.s32 1, %s20
    $region7: #{tpu_custom_call.1} parent=1 // loop_footer_branch
      %19 = sbr.rel target = $region3
    $region8: #{tpu_custom_call.1} parent=1 // loop_exit
      _
    %5876 = vsyncpa [#allocation3], 1
    %s5877 = scalar_lea.sflag [#allocation3], 1
    %5878 = vsyncpa %s5877, 1
    %5879 = vsyncpa [#allocation4], 1
    %s5880 = scalar_lea.sflag [#allocation4], 1
    %5881 = vsyncpa %s5880, 1

</llo_original>
